<compile_context>
chip_gen: v7x
topology: tpu7x:2x2x1
jax: 0.10.0
libtpu: 0.0.40
codegen_flags: <defaults>
</compile_context>

<pallas_src>
import functools

import numpy as np
import jax
import jax.numpy as jnp
from jax import lax
from jax.experimental import pallas as pl
from jax.experimental.pallas import tpu as pltpu

GAUSS_KSIZE = 15
GAUSS_SIGMA = 20.0
CL_WEIGHT = 1.0          # self.config.CL.weight (deterministic, set in-script)
EPS = 3e-07


# ----------------------------- parameter setup ------------------------------

def gaussian_kernel1d(ksize, sigma):
    # matches torchvision.transforms.functional._get_gaussian_kernel1d
    half = (ksize - 1) * 0.5
    x = np.linspace(-half, half, ksize)
    pdf = np.exp(-0.5 * (x / sigma) ** 2)
    return (pdf / pdf.sum()).astype(np.float32)


def haar_height_matrix(H):
    # rows 0..H/2-1: lowpass along height, rows H/2..H-1: highpass
    A = np.zeros((H, H), np.float32)
    s = np.float32(1.0 / np.sqrt(2.0))
    for i in range(H // 2):
        A[i, 2 * i] = s
        A[i, 2 * i + 1] = s
        A[H // 2 + i, 2 * i] = s
        A[H // 2 + i, 2 * i + 1] = -s
    return A


def haar_width_matrix(W):
    # cols 0..W/2-1: lowpass along width, cols W/2..W-1: highpass
    M = np.zeros((W, W), np.float32)
    s = np.float32(1.0 / np.sqrt(2.0))
    for j in range(W // 2):
        M[2 * j, j] = s
        M[2 * j + 1, j] = s
        M[2 * j, W // 2 + j] = s
        M[2 * j + 1, W // 2 + j] = -s
    return M


def blur_matrix(n, k1d):
    """Banded Toeplitz matrix with reflect padding folded in (blur along one axis)."""
    pad = len(k1d) // 2
    G = np.zeros((n, n), np.float32)
    for i in range(n):
        for t in range(len(k1d)):
            src = i - pad + t
            if src < 0:
                src = -src                    # reflect (no edge repeat)
            elif src >= n:
                src = 2 * n - 2 - src
            G[i, src] += k1d[t]
    return G


# --------------------------------- kernel ------------------------------------

def make_loss_kernel(H, W, transposed_height):
    def loss_kernel(gt_ref, c_ref, anc_ref, m_ref, mb_ref, ah_ref, abh_ref,
                    out_ref, acc_pos, acc_negc, acc_negr):
        step = pl.program_id(0)

        @pl.when(step == 0)
        def _init():
            acc_pos[...] = jnp.zeros_like(acc_pos)
            acc_negc[...] = jnp.zeros_like(acc_negc)
            acc_negr[...] = jnp.zeros_like(acc_negr)

        nb = gt_ref.shape[0]
        Mw = m_ref[...]          # [W, W]  bf16  Haar width transform
        Mwb = mb_ref[...]        # [W, W]  bf16  fused (blur + Haar) width transform
        Ah = ah_ref[...]         # [H, H]  bf16  height transform (A.T or A, see wrapper)
        Abh = abh_ref[...]       # [H, H]  bf16  fused (blur + Haar) height transform

        def width_tx(x_ref, Mm):
            # one long lane-dense MXU matmul: [nb*H, W] @ [W, W]  (bf16 in, f32 acc)
            x2 = x_ref[...].reshape(nb * H, W)
            y = jnp.dot(x2, Mm, preferred_element_type=jnp.float32)
            return y.reshape(nb, H, W)

        if transposed_height:
            def height_tx(y, Att):
                # Per-image minor-dim transpose (XLU), then ONE un-batched 2D matmul
                # [nb*W, H] @ [H, H]: no broadcast A, no per-image weight re-push.
                y_t = jnp.swapaxes(y, 1, 2)                       # [nb, W, H]  f32
                y2 = y_t.reshape(nb * W, H).astype(jnp.bfloat16)
                z = jnp.dot(y2, Att, preferred_element_type=jnp.float32)
                return z.reshape(nb, W, H)
        else:
            def height_tx(y, Att):
                # Fallback: standard batched matmul with a broadcast height matrix.
                A_n = jnp.broadcast_to(Att[None], (nb, H, H))
                return lax.dot_general(
                    A_n, y.astype(jnp.bfloat16),
                    (((2,), (1,)), ((0,), (0,))),
                    preferred_element_type=jnp.float32)           # [nb, H, W]

        def dwt(x_ref, Mm, Att):
            return height_tx(width_tx(x_ref, Mm), Att)

        # Keep only the anchor DWT live; every other stream is transformed, diffed
        # and folded into its accumulator immediately (minimal live intermediates).
        z_a = dwt(anc_ref, Mw, Ah)
        acc_pos[...] = acc_pos[...] + jnp.sum(
            jnp.abs(z_a - dwt(gt_ref, Mw, Ah)), axis=0)           # positive pair
        acc_negc[...] = acc_negc[...] + jnp.sum(
            jnp.abs(z_a - dwt(c_ref, Mw, Ah)), axis=0)            # negative: blurred input
        acc_negr[...] = acc_negr[...] + jnp.sum(
            jnp.abs(z_a - dwt(c_ref, Mwb, Abh)), axis=0)          # negative: re-blurred

        @pl.when(step == pl.num_programs(0) - 1)
        def _finalize():
            accs = (acc_pos[...], acc_negc[...], acc_negr[...])
            d0, d1 = accs[0].shape
            for idx, acc in enumerate(accs):
                out_ref[2 * idx] = jnp.sum(acc)                          # full plane
                out_ref[2 * idx + 1] = jnp.sum(acc[: d0 // 2, : d1 // 2])  # LL quadrant

    return loss_kernel


# --------------------------------- wrapper ------------------------------------

def frcl_forward(C, GT, anchor, weight=CL_WEIGHT, block_n=None,
                 height_mode="transpose"):
    """FRCL.forward(network, C, GT, anchor) -> scalar loss. (`network` unused.)"""
    assert height_mode in ("transpose", "batched")
    B, Ch, H, W = C.shape
    assert H % 2 == 0 and W % 2 == 0, "Haar DWT (no padding) requires even H, W"
    assert min(H, W) > GAUSS_KSIZE // 2, "reflect padding requires H, W > ksize // 2"
    N = B * Ch
    H2, W2 = H // 2, W // 2

    # MXU is bf16-native on v5e/v6e/v7x: feed images in bf16, accumulate in f32.
    c_flat = C.reshape(N, H, W).astype(jnp.bfloat16)
    gt_flat = GT.reshape(N, H, W).astype(jnp.bfloat16)
    anc_flat = anchor.reshape(N, H, W).astype(jnp.bfloat16)

    # VMEM budget (generation-agnostic, fits v7x's 64 MiB):
    #   per image : 3 streams x 2 pipeline buffers (bf16) + ~7 live f32 work planes
    #   fixed     : 3 f32 accumulator planes + 4 double-buffered bf16 matrices
    if block_n is None:
        per_img = H * W * (3 * 2 * 2 + 7 * 4)
        fixed = 3 * H * W * 4 + 2 * 2 * (H * H + W * W) * 2
        budget = 32 * 1024 * 1024
        block_n = max(1, min(N, (budget - fixed) // per_img))
    nb = int(block_n)
    NB = -(-N // nb)
    N_pad = NB * nb
    if N_pad != N:
        # zero-padded images contribute exactly 0 to every |diff| sum
        padw = ((0, N_pad - N), (0, 0), (0, 0))
        c_flat = jnp.pad(c_flat, padw)
        gt_flat = jnp.pad(gt_flat, padw)
        anc_flat = jnp.pad(anc_flat, padw)

    # host-side transform matrices (blur folded into the DWT for the re-blur stream)
    k1d = gaussian_kernel1d(GAUSS_KSIZE, GAUSS_SIGMA)
    A = haar_height_matrix(H)
    M = haar_width_matrix(W)
    Gv = blur_matrix(H, k1d)                       # vertical blur:   Gv @ x
    Gh = blur_matrix(W, k1d)                       # horizontal blur: x @ Gh.T
    Ab = (A @ Gv).astype(np.float32)               # fused blur+DWT height transform
    Mb = (Gh.T @ M).astype(np.float32)             # fused blur+DWT width transform

    transposed = height_mode == "transpose"
    Ah = A.T if transposed else A                  # right-multiply form when transposed
    Abh = Ab.T if transposed else Ab
    plane = (W, H) if transposed else (H, W)       # accumulator-plane orientation

    img_spec = pl.BlockSpec((nb, H, W), lambda i: (i, 0, 0))
    hh_spec = pl.BlockSpec((H, H), lambda i: (0, 0))
    ww_spec = pl.BlockSpec((W, W), lambda i: (0, 0))

    sums = pl.pallas_call(
        make_loss_kernel(H, W, transposed),
        out_shape=jax.ShapeDtypeStruct((6,), jnp.float32),
        grid_spec=pltpu.PrefetchScalarGridSpec(
            num_scalar_prefetch=0,
            grid=(NB,),
            in_specs=[img_spec, img_spec, img_spec,
                      ww_spec, ww_spec, hh_spec, hh_spec],
            out_specs=pl.BlockSpec(memory_space=pltpu.MemorySpace.SMEM),
            scratch_shapes=[pltpu.VMEM(plane, jnp.float32)] * 3,
        ),
        compiler_params=pltpu.CompilerParams(
            # streaming reduction over image blocks -> reduction axis is "arbitrary"
            dimension_semantics=("arbitrary",),
            vmem_limit_bytes=48 * 1024 * 1024,
        ),
    )(gt_flat, c_flat, anc_flat,
      jnp.asarray(M, jnp.bfloat16), jnp.asarray(Mb, jnp.bfloat16),
      jnp.asarray(Ah, jnp.bfloat16), jnp.asarray(Abh, jnp.bfloat16))

    n_ll = float(N * H2 * W2)          # elements in the LL band
    n_h = float(3 * N * H2 * W2)       # elements in the 3 high-pass bands

    pos_full, pos_ll = sums[0], sums[1]
    negc_full, negc_ll = sums[2], sums[3]
    negr_full, negr_ll = sums[4], sums[5]

    pos_loss = pos_ll / n_ll + (pos_full - pos_ll) / n_h       # len(p_list) == 1
    negc_h = (negc_full - negc_ll) / n_h
    negr_h = (negr_full - negr_ll) / n_h
    neg_loss = (negc_h + negr_h) / 2.0
    negres_loss = negc_h           # |(z_c - z_rb) - (z_a - z_rb)| == |z_a - z_c|
    return pos_loss / (neg_loss + negres_loss + EPS) * weight


# ------------------------- pure-JAX reference (check) ------------------------

def _ref_blur(x, k1d):
    B, Ch, H, W = x.shape
    pad = k1d.shape[0] // 2
    k2d = jnp.outer(k1d, k1d)
    xp = jnp.pad(x, ((0, 0), (0, 0), (pad, pad), (pad, pad)), mode="reflect")
    w = jnp.broadcast_to(k2d, (Ch, 1, k1d.shape[0], k1d.shape[0]))
    return lax.conv_general_dilated(
        xp, w, window_strides=(1, 1), padding="VALID",
        feature_group_count=Ch, dimension_numbers=("NCHW", "OIHW", "NCHW"))


def _ref_dwt(x):
    a = x[:, :, 0::2, 0::2]
    b = x[:, :, 0::2, 1::2]
    c = x[:, :, 1::2, 0::2]
    d = x[:, :, 1::2, 1::2]
    ll = (a + b + c + d) * 0.5
    lh = (a - b + c - d) * 0.5
    hl = (a + b - c - d) * 0.5
    hh = (a - b - c + d) * 0.5
    return ll, jnp.stack([lh, hl, hh], axis=2)


def reference_frcl(C, GT, anchor, weight=CL_WEIGHT):
    k1d = jnp.asarray(gaussian_kernel1d(GAUSS_KSIZE, GAUSS_SIGMA))
    rebl = _ref_blur(C, k1d)
    l1 = lambda x, y: jnp.mean(jnp.abs(x - y))
    gt_ll, gt_h = _ref_dwt(GT)
    _, c_h = _ref_dwt(C)
    _, rb_h = _ref_dwt(rebl)
    a_ll, a_h = _ref_dwt(anchor)
    pos = l1(a_ll, gt_ll) + l1(a_h, gt_h)
    neg = (l1(a_h, c_h) + l1(a_h, rb_h)) / 2.0
    res = l1(c_h - rb_h, a_h - rb_h)        # explicit (non-dedup'ed) residual
    return pos / (neg + res + EPS) * weight


# ----------------------------------- main ------------------------------------

if __name__ == "__main__":
    key = jax.random.PRNGKey(0)
    kgt, kc, ka = jax.random.split(key, 3)
    B, Ch, H, W = 2, 3, 16, 16

    GT = jax.random.uniform(kgt, (B, Ch, H, W), dtype=jnp.float32)
    C = jax.random.uniform(kc, (B, Ch, H, W), dtype=jnp.float32)       # "blur" input
    anchor = jax.random.uniform(ka, (B, Ch, H, W), dtype=jnp.float32)  # network output

    # block_n=4 with N=6 exercises the multi-step grid (accumulate + zero padding)
    def run(mode):
        fn = jax.jit(functools.partial(frcl_forward, block_n=4, height_mode=mode))
        return jax.block_until_ready(fn(C, GT, anchor))

    try:
        loss = run("transpose")    # preferred: no broadcast A, two long 2D matmuls
    except Exception:
        # Fallback for Mosaic builds that cannot lower batched minor-dim transposes.
        loss = run("batched")

    ref = jax.block_until_ready(reference_frcl(C, GT, anchor))
    lv, rv = float(loss), float(ref)
    assert np.isfinite(lv), f"non-finite loss {lv}"
    # bf16 MXU inputs (per perf review) -> compare with a relaxed relative tolerance
    assert abs(lv - rv) <= 2e-2 * max(1.0, abs(rv)), f"mismatch: kernel={lv} ref={rv}"
    print("KERNEL_OK")
</pallas_src>

<mosaic_0001>
module attributes {stable_mosaic.version = 11 : i64} {
  func.func @loss_kernel(%arg0: i32, %arg1: memref<4x16x16xbf16, #tpu.memory_space<vmem>>, %arg2: memref<4x16x16xbf16, #tpu.memory_space<vmem>>, %arg3: memref<4x16x16xbf16, #tpu.memory_space<vmem>>, %arg4: memref<16x16xbf16, #tpu.memory_space<vmem>>, %arg5: memref<16x16xbf16, #tpu.memory_space<vmem>>, %arg6: memref<16x16xbf16, #tpu.memory_space<vmem>>, %arg7: memref<16x16xbf16, #tpu.memory_space<vmem>>, %arg8: memref<6xf32, #tpu.memory_space<smem>>, %arg9: memref<16x16xf32, #tpu.memory_space<vmem>>, %arg10: memref<16x16xf32, #tpu.memory_space<vmem>>, %arg11: memref<16x16xf32, #tpu.memory_space<vmem>>) attributes {dimension_semantics = [#tpu.dimension_semantics<arbitrary>], iteration_bounds = array<i64: 2>, scalar_prefetch = 0 : i64, scratch_operands = 3 : i64, tpu.core_type = #tpu.core_type<tc>, window_params = [{transform_indices = @transform_0, window_bounds = array<i64: 4, 16, 16>}, {transform_indices = @transform_1, window_bounds = array<i64: 4, 16, 16>}, {transform_indices = @transform_2, window_bounds = array<i64: 4, 16, 16>}, {pipeline_mode = #tpu.pipeline_mode<synchronous>, transform_indices = @transform_3, window_bounds = array<i64: 16, 16>}, {pipeline_mode = #tpu.pipeline_mode<synchronous>, transform_indices = @transform_4, window_bounds = array<i64: 16, 16>}, {pipeline_mode = #tpu.pipeline_mode<synchronous>, transform_indices = @transform_5, window_bounds = array<i64: 16, 16>}, {pipeline_mode = #tpu.pipeline_mode<synchronous>, transform_indices = @transform_6, window_bounds = array<i64: 16, 16>}, {transform_indices = @transform_7, window_bounds = array<i64: 6>}]} {
    %c0_i32 = arith.constant 0 : i32
    %0 = arith.cmpi eq, %arg0, %c0_i32 : i32
    %1 = arith.extui %0 : i1 to i32
    %c0_i32_0 = arith.constant 0 : i32
    %2 = arith.cmpi ne, %1, %c0_i32_0 : i32
    scf.if %2 {
      %cst_43 = arith.constant 0.000000e+00 : f32
      %64 = vector.broadcast %cst_43 : f32 to vector<16x16xf32>
      %c0_44 = arith.constant 0 : index
      %c0_45 = arith.constant 0 : index
      %65 = vector.load %arg9[%c0_44, %c0_45] : memref<16x16xf32, #tpu.memory_space<vmem>>, vector<16x16xf32>
      tpu.vector_store %arg9[%c0_44, %c0_45], %64 {strides = array<i32>} : memref<16x16xf32, #tpu.memory_space<vmem>>, vector<16x16xf32>,
      %cst_46 = arith.constant 0.000000e+00 : f32
      %66 = vector.broadcast %cst_46 : f32 to vector<16x16xf32>
      %c0_47 = arith.constant 0 : index
      %c0_48 = arith.constant 0 : index
      %67 = vector.load %arg10[%c0_47, %c0_48] : memref<16x16xf32, #tpu.memory_space<vmem>>, vector<16x16xf32>
      tpu.vector_store %arg10[%c0_47, %c0_48], %66 {strides = array<i32>} : memref<16x16xf32, #tpu.memory_space<vmem>>, vector<16x16xf32>,
      %cst_49 = arith.constant 0.000000e+00 : f32
      %68 = vector.broadcast %cst_49 : f32 to vector<16x16xf32>
      %c0_50 = arith.constant 0 : index
      %c0_51 = arith.constant 0 : index
      %69 = vector.load %arg11[%c0_50, %c0_51] : memref<16x16xf32, #tpu.memory_space<vmem>>, vector<16x16xf32>
      tpu.vector_store %arg11[%c0_50, %c0_51], %68 {strides = array<i32>} : memref<16x16xf32, #tpu.memory_space<vmem>>, vector<16x16xf32>,
    } else {
    }
    %c0 = arith.constant 0 : index
    %c0_1 = arith.constant 0 : index
    %3 = vector.load %arg4[%c0, %c0_1] : memref<16x16xbf16, #tpu.memory_space<vmem>>, vector<16x16xbf16>
    %c0_2 = arith.constant 0 : index
    %c0_3 = arith.constant 0 : index
    %4 = vector.load %arg5[%c0_2, %c0_3] : memref<16x16xbf16, #tpu.memory_space<vmem>>, vector<16x16xbf16>
    %c0_4 = arith.constant 0 : index
    %c0_5 = arith.constant 0 : index
    %5 = vector.load %arg6[%c0_4, %c0_5] : memref<16x16xbf16, #tpu.memory_space<vmem>>, vector<16x16xbf16>
    %c0_6 = arith.constant 0 : index
    %c0_7 = arith.constant 0 : index
    %6 = vector.load %arg7[%c0_6, %c0_7] : memref<16x16xbf16, #tpu.memory_space<vmem>>, vector<16x16xbf16>
    %c0_8 = arith.constant 0 : index
    %c0_9 = arith.constant 0 : index
    %c0_10 = arith.constant 0 : index
    %7 = vector.load %arg3[%c0_8, %c0_9, %c0_10] : memref<4x16x16xbf16, #tpu.memory_space<vmem>>, vector<4x16x16xbf16>
    %8 = vector.shape_cast %7 : vector<4x16x16xbf16> to vector<64x16xbf16>
    %cst = arith.constant dense<0.000000e+00> : vector<64x16xf32>
    %9 = tpu.matmul %8, %3, %cst {dimension_numbers = #tpu.dot_dimension_numbers<[1], [0], [0], [1], [0, 0, 1, 1], [], []>} : vector<64x16xbf16>, vector<16x16xbf16>, vector<64x16xf32> -> vector<64x16xf32>
    %10 = vector.shape_cast %9 : vector<64x16xf32> to vector<4x16x16xf32>
    %11 = tpu.transpose %10, [0, 2, 1] : vector<4x16x16xf32> -> vector<4x16x16xf32>
    %12 = vector.shape_cast %11 : vector<4x16x16xf32> to vector<64x16xf32>
    %13 = arith.truncf %12 : vector<64x16xf32> to vector<64x16xbf16>
    %cst_11 = arith.constant dense<0.000000e+00> : vector<64x16xf32>
    %14 = tpu.matmul %13, %5, %cst_11 {dimension_numbers = #tpu.dot_dimension_numbers<[1], [0], [0], [1], [0, 0, 1, 1], [], []>} : vector<64x16xbf16>, vector<16x16xbf16>, vector<64x16xf32> -> vector<64x16xf32>
    %15 = vector.shape_cast %14 : vector<64x16xf32> to vector<4x16x16xf32>
    %c0_12 = arith.constant 0 : index
    %c0_13 = arith.constant 0 : index
    %16 = vector.load %arg9[%c0_12, %c0_13] : memref<16x16xf32, #tpu.memory_space<vmem>>, vector<16x16xf32>
    %c0_14 = arith.constant 0 : index
    %c0_15 = arith.constant 0 : index
    %c0_16 = arith.constant 0 : index
    %17 = vector.load %arg1[%c0_14, %c0_15, %c0_16] : memref<4x16x16xbf16, #tpu.memory_space<vmem>>, vector<4x16x16xbf16>
    %18 = vector.shape_cast %17 : vector<4x16x16xbf16> to vector<64x16xbf16>
    %cst_17 = arith.constant dense<0.000000e+00> : vector<64x16xf32>
    %19 = tpu.matmul %18, %3, %cst_17 {dimension_numbers = #tpu.dot_dimension_numbers<[1], [0], [0], [1], [0, 0, 1, 1], [], []>} : vector<64x16xbf16>, vector<16x16xbf16>, vector<64x16xf32> -> vector<64x16xf32>
    %20 = vector.shape_cast %19 : vector<64x16xf32> to vector<4x16x16xf32>
    %21 = tpu.transpose %20, [0, 2, 1] : vector<4x16x16xf32> -> vector<4x16x16xf32>
    %22 = vector.shape_cast %21 : vector<4x16x16xf32> to vector<64x16xf32>
    %23 = arith.truncf %22 : vector<64x16xf32> to vector<64x16xbf16>
    %cst_18 = arith.constant dense<0.000000e+00> : vector<64x16xf32>
    %24 = tpu.matmul %23, %5, %cst_18 {dimension_numbers = #tpu.dot_dimension_numbers<[1], [0], [0], [1], [0, 0, 1, 1], [], []>} : vector<64x16xbf16>, vector<16x16xbf16>, vector<64x16xf32> -> vector<64x16xf32>
    %25 = vector.shape_cast %24 : vector<64x16xf32> to vector<4x16x16xf32>
    %26 = arith.subf %15, %25 : vector<4x16x16xf32>
    %27 = math.absf %26 : vector<4x16x16xf32>
    %cst_19 = arith.constant dense<0.000000e+00> : vector<16x16xf32>
    %28 = vector.multi_reduction <add>, %27, %cst_19 [0] : vector<4x16x16xf32> to vector<16x16xf32>
    %29 = arith.addf %16, %28 : vector<16x16xf32>
    %c0_20 = arith.constant 0 : index
    %c0_21 = arith.constant 0 : index
    %30 = vector.load %arg9[%c0_20, %c0_21] : memref<16x16xf32, #tpu.memory_space<vmem>>, vector<16x16xf32>
    tpu.vector_store %arg9[%c0_20, %c0_21], %29 {strides = array<i32>} : memref<16x16xf32, #tpu.memory_space<vmem>>, vector<16x16xf32>,
    %c0_22 = arith.constant 0 : index
    %c0_23 = arith.constant 0 : index
    %31 = vector.load %arg10[%c0_22, %c0_23] : memref<16x16xf32, #tpu.memory_space<vmem>>, vector<16x16xf32>
    %c0_24 = arith.constant 0 : index
    %c0_25 = arith.constant 0 : index
    %c0_26 = arith.constant 0 : index
    %32 = vector.load %arg2[%c0_24, %c0_25, %c0_26] : memref<4x16x16xbf16, #tpu.memory_space<vmem>>, vector<4x16x16xbf16>
    %33 = vector.shape_cast %32 : vector<4x16x16xbf16> to vector<64x16xbf16>
    %cst_27 = arith.constant dense<0.000000e+00> : vector<64x16xf32>
    %34 = tpu.matmul %33, %3, %cst_27 {dimension_numbers = #tpu.dot_dimension_numbers<[1], [0], [0], [1], [0, 0, 1, 1], [], []>} : vector<64x16xbf16>, vector<16x16xbf16>, vector<64x16xf32> -> vector<64x16xf32>
    %35 = vector.shape_cast %34 : vector<64x16xf32> to vector<4x16x16xf32>
    %36 = tpu.transpose %35, [0, 2, 1] : vector<4x16x16xf32> -> vector<4x16x16xf32>
    %37 = vector.shape_cast %36 : vector<4x16x16xf32> to vector<64x16xf32>
    %38 = arith.truncf %37 : vector<64x16xf32> to vector<64x16xbf16>
    %cst_28 = arith.constant dense<0.000000e+00> : vector<64x16xf32>
    %39 = tpu.matmul %38, %5, %cst_28 {dimension_numbers = #tpu.dot_dimension_numbers<[1], [0], [0], [1], [0, 0, 1, 1], [], []>} : vector<64x16xbf16>, vector<16x16xbf16>, vector<64x16xf32> -> vector<64x16xf32>
    %40 = vector.shape_cast %39 : vector<64x16xf32> to vector<4x16x16xf32>
    %41 = arith.subf %15, %40 : vector<4x16x16xf32>
    %42 = math.absf %41 : vector<4x16x16xf32>
    %cst_29 = arith.constant dense<0.000000e+00> : vector<16x16xf32>
    %43 = vector.multi_reduction <add>, %42, %cst_29 [0] : vector<4x16x16xf32> to vector<16x16xf32>
    %44 = arith.addf %31, %43 : vector<16x16xf32>
    %c0_30 = arith.constant 0 : index
    %c0_31 = arith.constant 0 : index
    %45 = vector.load %arg10[%c0_30, %c0_31] : memref<16x16xf32, #tpu.memory_space<vmem>>, vector<16x16xf32>
    tpu.vector_store %arg10[%c0_30, %c0_31], %44 {strides = array<i32>} : memref<16x16xf32, #tpu.memory_space<vmem>>, vector<16x16xf32>,
    %c0_32 = arith.constant 0 : index
    %c0_33 = arith.constant 0 : index
    %46 = vector.load %arg11[%c0_32, %c0_33] : memref<16x16xf32, #tpu.memory_space<vmem>>, vector<16x16xf32>
    %c0_34 = arith.constant 0 : index
    %c0_35 = arith.constant 0 : index
    %c0_36 = arith.constant 0 : index
    %47 = vector.load %arg2[%c0_34, %c0_35, %c0_36] : memref<4x16x16xbf16, #tpu.memory_space<vmem>>, vector<4x16x16xbf16>
    %48 = vector.shape_cast %47 : vector<4x16x16xbf16> to vector<64x16xbf16>
    %cst_37 = arith.constant dense<0.000000e+00> : vector<64x16xf32>
    %49 = tpu.matmul %48, %4, %cst_37 {dimension_numbers = #tpu.dot_dimension_numbers<[1], [0], [0], [1], [0, 0, 1, 1], [], []>} : vector<64x16xbf16>, vector<16x16xbf16>, vector<64x16xf32> -> vector<64x16xf32>
    %50 = vector.shape_cast %49 : vector<64x16xf32> to vector<4x16x16xf32>
    %51 = tpu.transpose %50, [0, 2, 1] : vector<4x16x16xf32> -> vector<4x16x16xf32>
    %52 = vector.shape_cast %51 : vector<4x16x16xf32> to vector<64x16xf32>
    %53 = arith.truncf %52 : vector<64x16xf32> to vector<64x16xbf16>
    %cst_38 = arith.constant dense<0.000000e+00> : vector<64x16xf32>
    %54 = tpu.matmul %53, %6, %cst_38 {dimension_numbers = #tpu.dot_dimension_numbers<[1], [0], [0], [1], [0, 0, 1, 1], [], []>} : vector<64x16xbf16>, vector<16x16xbf16>, vector<64x16xf32> -> vector<64x16xf32>
    %55 = vector.shape_cast %54 : vector<64x16xf32> to vector<4x16x16xf32>
    %56 = arith.subf %15, %55 : vector<4x16x16xf32>
    %57 = math.absf %56 : vector<4x16x16xf32>
    %cst_39 = arith.constant dense<0.000000e+00> : vector<16x16xf32>
    %58 = vector.multi_reduction <add>, %57, %cst_39 [0] : vector<4x16x16xf32> to vector<16x16xf32>
    %59 = arith.addf %46, %58 : vector<16x16xf32>
    %c0_40 = arith.constant 0 : index
    %c0_41 = arith.constant 0 : index
    %60 = vector.load %arg11[%c0_40, %c0_41] : memref<16x16xf32, #tpu.memory_space<vmem>>, vector<16x16xf32>
    tpu.vector_store %arg11[%c0_40, %c0_41], %59 {strides = array<i32>} : memref<16x16xf32, #tpu.memory_space<vmem>>, vector<16x16xf32>,
    %c1_i32 = arith.constant 1 : i32
    %61 = arith.cmpi eq, %arg0, %c1_i32 : i32
    %62 = arith.extui %61 : i1 to i32
    %c0_i32_42 = arith.constant 0 : i32
    %63 = arith.cmpi ne, %62, %c0_i32_42 : i32
    scf.if %63 {
      %c0_43 = arith.constant 0 : index
      %c0_44 = arith.constant 0 : index
      %64 = vector.load %arg9[%c0_43, %c0_44] : memref<16x16xf32, #tpu.memory_space<vmem>>, vector<16x16xf32>
      %c0_45 = arith.constant 0 : index
      %c0_46 = arith.constant 0 : index
      %65 = vector.load %arg10[%c0_45, %c0_46] : memref<16x16xf32, #tpu.memory_space<vmem>>, vector<16x16xf32>
      %c0_47 = arith.constant 0 : index
      %c0_48 = arith.constant 0 : index
      %66 = vector.load %arg11[%c0_47, %c0_48] : memref<16x16xf32, #tpu.memory_space<vmem>>, vector<16x16xf32>
      %67 = vector.shape_cast %64 : vector<16x16xf32> to vector<1x16x16xf32>
      %cst_49 = arith.constant dense<0.000000e+00> : vector<1xf32>
      %68 = vector.multi_reduction <add>, %67, %cst_49 [1, 2] : vector<1x16x16xf32> to vector<1xf32>
      %69 = vector.shape_cast %68 : vector<1xf32> to vector<1x1x1xf32>
      %70 = vector.extract %69[0, 0, 0] : f32 from vector<1x1x1xf32>
      %c0_50 = arith.constant 0 : index
      %71 = memref.load %arg8[%c0_50] : memref<6xf32, #tpu.memory_space<smem>>
      memref.store %70, %arg8[%c0_50] : memref<6xf32, #tpu.memory_space<smem>>
      %72 = vector.extract_strided_slice %64 {offsets = [0, 0], sizes = [8, 8], strides = [1, 1]} : vector<16x16xf32> to vector<8x8xf32>
      %73 = vector.shape_cast %72 : vector<8x8xf32> to vector<1x8x8xf32>
      %cst_51 = arith.constant dense<0.000000e+00> : vector<1xf32>
      %74 = vector.multi_reduction <add>, %73, %cst_51 [1, 2] : vector<1x8x8xf32> to vector<1xf32>
      %75 = vector.shape_cast %74 : vector<1xf32> to vector<1x1x1xf32>
      %76 = vector.extract %75[0, 0, 0] : f32 from vector<1x1x1xf32>
      %c1 = arith.constant 1 : index
      %77 = memref.load %arg8[%c1] : memref<6xf32, #tpu.memory_space<smem>>
      memref.store %76, %arg8[%c1] : memref<6xf32, #tpu.memory_space<smem>>
      %78 = vector.shape_cast %65 : vector<16x16xf32> to vector<1x16x16xf32>
      %cst_52 = arith.constant dense<0.000000e+00> : vector<1xf32>
      %79 = vector.multi_reduction <add>, %78, %cst_52 [1, 2] : vector<1x16x16xf32> to vector<1xf32>
      %80 = vector.shape_cast %79 : vector<1xf32> to vector<1x1x1xf32>
      %81 = vector.extract %80[0, 0, 0] : f32 from vector<1x1x1xf32>
      %c2 = arith.constant 2 : index
      %82 = memref.load %arg8[%c2] : memref<6xf32, #tpu.memory_space<smem>>
      memref.store %81, %arg8[%c2] : memref<6xf32, #tpu.memory_space<smem>>
      %83 = vector.extract_strided_slice %65 {offsets = [0, 0], sizes = [8, 8], strides = [1, 1]} : vector<16x16xf32> to vector<8x8xf32>
      %84 = vector.shape_cast %83 : vector<8x8xf32> to vector<1x8x8xf32>
      %cst_53 = arith.constant dense<0.000000e+00> : vector<1xf32>
      %85 = vector.multi_reduction <add>, %84, %cst_53 [1, 2] : vector<1x8x8xf32> to vector<1xf32>
      %86 = vector.shape_cast %85 : vector<1xf32> to vector<1x1x1xf32>
      %87 = vector.extract %86[0, 0, 0] : f32 from vector<1x1x1xf32>
      %c3 = arith.constant 3 : index
      %88 = memref.load %arg8[%c3] : memref<6xf32, #tpu.memory_space<smem>>
      memref.store %87, %arg8[%c3] : memref<6xf32, #tpu.memory_space<smem>>
      %89 = vector.shape_cast %66 : vector<16x16xf32> to vector<1x16x16xf32>
      %cst_54 = arith.constant dense<0.000000e+00> : vector<1xf32>
      %90 = vector.multi_reduction <add>, %89, %cst_54 [1, 2] : vector<1x16x16xf32> to vector<1xf32>
      %91 = vector.shape_cast %90 : vector<1xf32> to vector<1x1x1xf32>
      %92 = vector.extract %91[0, 0, 0] : f32 from vector<1x1x1xf32>
      %c4 = arith.constant 4 : index
      %93 = memref.load %arg8[%c4] : memref<6xf32, #tpu.memory_space<smem>>
      memref.store %92, %arg8[%c4] : memref<6xf32, #tpu.memory_space<smem>>
      %94 = vector.extract_strided_slice %66 {offsets = [0, 0], sizes = [8, 8], strides = [1, 1]} : vector<16x16xf32> to vector<8x8xf32>
      %95 = vector.shape_cast %94 : vector<8x8xf32> to vector<1x8x8xf32>
      %cst_55 = arith.constant dense<0.000000e+00> : vector<1xf32>
      %96 = vector.multi_reduction <add>, %95, %cst_55 [1, 2] : vector<1x8x8xf32> to vector<1xf32>
      %97 = vector.shape_cast %96 : vector<1xf32> to vector<1x1x1xf32>
      %98 = vector.extract %97[0, 0, 0] : f32 from vector<1x1x1xf32>
      %c5 = arith.constant 5 : index
      %99 = memref.load %arg8[%c5] : memref<6xf32, #tpu.memory_space<smem>>
      memref.store %98, %arg8[%c5] : memref<6xf32, #tpu.memory_space<smem>>
    } else {
    }
    return
  }
  func.func @transform_0(%arg0: i32) -> (i32, i32, i32) {
    %c0_i32 = arith.constant 0 : i32
    %c0_i32_0 = arith.constant 0 : i32
    %c0_i32_1 = arith.constant 0 : i32
    return %arg0, %c0_i32, %c0_i32_0 : i32, i32, i32
  }
  func.func @transform_1(%arg0: i32) -> (i32, i32, i32) {
    %c0_i32 = arith.constant 0 : i32
    %c0_i32_0 = arith.constant 0 : i32
    %c0_i32_1 = arith.constant 0 : i32
    return %arg0, %c0_i32, %c0_i32_0 : i32, i32, i32
  }
  func.func @transform_2(%arg0: i32) -> (i32, i32, i32) {
    %c0_i32 = arith.constant 0 : i32
    %c0_i32_0 = arith.constant 0 : i32
    %c0_i32_1 = arith.constant 0 : i32
    return %arg0, %c0_i32, %c0_i32_0 : i32, i32, i32
  }
  func.func @transform_3(%arg0: i32) -> (i32, i32) {
    %c0_i32 = arith.constant 0 : i32
    %c0_i32_0 = arith.constant 0 : i32
    %c0_i32_1 = arith.constant 0 : i32
    return %c0_i32, %c0_i32_0 : i32, i32
  }
  func.func @transform_4(%arg0: i32) -> (i32, i32) {
    %c0_i32 = arith.constant 0 : i32
    %c0_i32_0 = arith.constant 0 : i32
    %c0_i32_1 = arith.constant 0 : i32
    return %c0_i32, %c0_i32_0 : i32, i32
  }
  func.func @transform_5(%arg0: i32) -> (i32, i32) {
    %c0_i32 = arith.constant 0 : i32
    %c0_i32_0 = arith.constant 0 : i32
    %c0_i32_1 = arith.constant 0 : i32
    return %c0_i32, %c0_i32_0 : i32, i32
  }
  func.func @transform_6(%arg0: i32) -> (i32, i32) {
    %c0_i32 = arith.constant 0 : i32
    %c0_i32_0 = arith.constant 0 : i32
    %c0_i32_1 = arith.constant 0 : i32
    return %c0_i32, %c0_i32_0 : i32, i32
  }
  func.func @transform_7(%arg0: i32) -> i32 {
    %c0_i32 = arith.constant 0 : i32
    %c0_i32_0 = arith.constant 0 : i32
    return %c0_i32 : i32
  }
}

module attributes {stable_mosaic.version = 11 : i64} {
  func.func @loss_kernel(%arg0: i32, %arg1: memref<4x16x16xbf16, #tpu.memory_space<vmem>>, %arg2: memref<4x16x16xbf16, #tpu.memory_space<vmem>>, %arg3: memref<4x16x16xbf16, #tpu.memory_space<vmem>>, %arg4: memref<16x16xbf16, #tpu.memory_space<vmem>>, %arg5: memref<16x16xbf16, #tpu.memory_space<vmem>>, %arg6: memref<16x16xbf16, #tpu.memory_space<vmem>>, %arg7: memref<16x16xbf16, #tpu.memory_space<vmem>>, %arg8: memref<6xf32, #tpu.memory_space<smem>>, %arg9: memref<16x16xf32, #tpu.memory_space<vmem>>, %arg10: memref<16x16xf32, #tpu.memory_space<vmem>>, %arg11: memref<16x16xf32, #tpu.memory_space<vmem>>) attributes {dimension_semantics = [#tpu.dimension_semantics<arbitrary>], iteration_bounds = array<i64: 2>, scalar_prefetch = 0 : i64, scratch_operands = 3 : i64, tpu.core_type = #tpu.core_type<tc>, window_params = [{transform_indices = @transform_0, window_bounds = array<i64: 4, 16, 16>}, {transform_indices = @transform_1, window_bounds = array<i64: 4, 16, 16>}, {transform_indices = @transform_2, window_bounds = array<i64: 4, 16, 16>}, {pipeline_mode = #tpu.pipeline_mode<synchronous>, transform_indices = @transform_3, window_bounds = array<i64: 16, 16>}, {pipeline_mode = #tpu.pipeline_mode<synchronous>, transform_indices = @transform_4, window_bounds = array<i64: 16, 16>}, {pipeline_mode = #tpu.pipeline_mode<synchronous>, transform_indices = @transform_5, window_bounds = array<i64: 16, 16>}, {pipeline_mode = #tpu.pipeline_mode<synchronous>, transform_indices = @transform_6, window_bounds = array<i64: 16, 16>}, {transform_indices = @transform_7, window_bounds = array<i64: 6>}]} {
    %c0_i32 = arith.constant 0 : i32
    %0 = arith.cmpi eq, %arg0, %c0_i32 : i32
    %1 = arith.extui %0 : i1 to i32
    %c0_i32_0 = arith.constant 0 : i32
    %2 = arith.cmpi ne, %1, %c0_i32_0 : i32
    scf.if %2 {
      %cst_43 = arith.constant 0.000000e+00 : f32
      %64 = vector.broadcast %cst_43 : f32 to vector<16x16xf32>
      %c0_44 = arith.constant 0 : index
      %c0_45 = arith.constant 0 : index
      %65 = vector.load %arg9[%c0_44, %c0_45] : memref<16x16xf32, #tpu.memory_space<vmem>>, vector<16x16xf32>
      tpu.vector_store %arg9[%c0_44, %c0_45], %64 {strides = array<i32>} : memref<16x16xf32, #tpu.memory_space<vmem>>, vector<16x16xf32>,
      %cst_46 = arith.constant 0.000000e+00 : f32
      %66 = vector.broadcast %cst_46 : f32 to vector<16x16xf32>
      %c0_47 = arith.constant 0 : index
      %c0_48 = arith.constant 0 : index
      %67 = vector.load %arg10[%c0_47, %c0_48] : memref<16x16xf32, #tpu.memory_space<vmem>>, vector<16x16xf32>
      tpu.vector_store %arg10[%c0_47, %c0_48], %66 {strides = array<i32>} : memref<16x16xf32, #tpu.memory_space<vmem>>, vector<16x16xf32>,
      %cst_49 = arith.constant 0.000000e+00 : f32
      %68 = vector.broadcast %cst_49 : f32 to vector<16x16xf32>
      %c0_50 = arith.constant 0 : index
      %c0_51 = arith.constant 0 : index
      %69 = vector.load %arg11[%c0_50, %c0_51] : memref<16x16xf32, #tpu.memory_space<vmem>>, vector<16x16xf32>
      tpu.vector_store %arg11[%c0_50, %c0_51], %68 {strides = array<i32>} : memref<16x16xf32, #tpu.memory_space<vmem>>, vector<16x16xf32>,
    } else {
    }
    %c0 = arith.constant 0 : index
    %c0_1 = arith.constant 0 : index
    %3 = vector.load %arg4[%c0, %c0_1] : memref<16x16xbf16, #tpu.memory_space<vmem>>, vector<16x16xbf16>
    %c0_2 = arith.constant 0 : index
    %c0_3 = arith.constant 0 : index
    %4 = vector.load %arg5[%c0_2, %c0_3] : memref<16x16xbf16, #tpu.memory_space<vmem>>, vector<16x16xbf16>
    %c0_4 = arith.constant 0 : index
    %c0_5 = arith.constant 0 : index
    %5 = vector.load %arg6[%c0_4, %c0_5] : memref<16x16xbf16, #tpu.memory_space<vmem>>, vector<16x16xbf16>
    %c0_6 = arith.constant 0 : index
    %c0_7 = arith.constant 0 : index
    %6 = vector.load %arg7[%c0_6, %c0_7] : memref<16x16xbf16, #tpu.memory_space<vmem>>, vector<16x16xbf16>
    %c0_8 = arith.constant 0 : index
    %c0_9 = arith.constant 0 : index
    %c0_10 = arith.constant 0 : index
    %7 = vector.load %arg3[%c0_8, %c0_9, %c0_10] : memref<4x16x16xbf16, #tpu.memory_space<vmem>>, vector<4x16x16xbf16>
    %8 = vector.shape_cast %7 : vector<4x16x16xbf16> to vector<64x16xbf16>
    %cst = arith.constant dense<0.000000e+00> : vector<64x16xf32>
    %9 = tpu.matmul %8, %3, %cst {dimension_numbers = #tpu.dot_dimension_numbers<[1], [0], [0], [1], [0, 0, 1, 1], [], []>} : vector<64x16xbf16>, vector<16x16xbf16>, vector<64x16xf32> -> vector<64x16xf32>
    %10 = vector.shape_cast %9 : vector<64x16xf32> to vector<4x16x16xf32>
    %11 = vector.shape_cast %5 : vector<16x16xbf16> to vector<1x16x16xbf16>
    %12 = vector.shape_cast %11 : vector<1x16x16xbf16> to vector<1x16x16xbf16>
    %13 = vector.broadcast %12 : vector<1x16x16xbf16> to vector<4x16x16xbf16>
    %14 = arith.truncf %10 : vector<4x16x16xf32> to vector<4x16x16xbf16>
    %cst_11 = arith.constant dense<0.000000e+00> : vector<4x16x16xf32>
    %15 = tpu.matmul %13, %14, %cst_11 {dimension_numbers = #tpu.dot_dimension_numbers<[2], [1], [1], [2], [0, 0, 0, 1, 1, 2], [0], [0]>} : vector<4x16x16xbf16>, vector<4x16x16xbf16>, vector<4x16x16xf32> -> vector<4x16x16xf32>
    %c0_12 = arith.constant 0 : index
    %c0_13 = arith.constant 0 : index
    %16 = vector.load %arg9[%c0_12, %c0_13] : memref<16x16xf32, #tpu.memory_space<vmem>>, vector<16x16xf32>
    %c0_14 = arith.constant 0 : index
    %c0_15 = arith.constant 0 : index
    %c0_16 = arith.constant 0 : index
    %17 = vector.load %arg1[%c0_14, %c0_15, %c0_16] : memref<4x16x16xbf16, #tpu.memory_space<vmem>>, vector<4x16x16xbf16>
    %18 = vector.shape_cast %17 : vector<4x16x16xbf16> to vector<64x16xbf16>
    %cst_17 = arith.constant dense<0.000000e+00> : vector<64x16xf32>
    %19 = tpu.matmul %18, %3, %cst_17 {dimension_numbers = #tpu.dot_dimension_numbers<[1], [0], [0], [1], [0, 0, 1, 1], [], []>} : vector<64x16xbf16>, vector<16x16xbf16>, vector<64x16xf32> -> vector<64x16xf32>
    %20 = vector.shape_cast %19 : vector<64x16xf32> to vector<4x16x16xf32>
    %21 = vector.shape_cast %5 : vector<16x16xbf16> to vector<1x16x16xbf16>
    %22 = vector.shape_cast %21 : vector<1x16x16xbf16> to vector<1x16x16xbf16>
    %23 = vector.broadcast %22 : vector<1x16x16xbf16> to vector<4x16x16xbf16>
    %24 = arith.truncf %20 : vector<4x16x16xf32> to vector<4x16x16xbf16>
    %cst_18 = arith.constant dense<0.000000e+00> : vector<4x16x16xf32>
    %25 = tpu.matmul %23, %24, %cst_18 {dimension_numbers = #tpu.dot_dimension_numbers<[2], [1], [1], [2], [0, 0, 0, 1, 1, 2], [0], [0]>} : vector<4x16x16xbf16>, vector<4x16x16xbf16>, vector<4x16x16xf32> -> vector<4x16x16xf32>
    %26 = arith.subf %15, %25 : vector<4x16x16xf32>
    %27 = math.absf %26 : vector<4x16x16xf32>
    %cst_19 = arith.constant dense<0.000000e+00> : vector<16x16xf32>
    %28 = vector.multi_reduction <add>, %27, %cst_19 [0] : vector<4x16x16xf32> to vector<16x16xf32>
    %29 = arith.addf %16, %28 : vector<16x16xf32>
    %c0_20 = arith.constant 0 : index
    %c0_21 = arith.constant 0 : index
    %30 = vector.load %arg9[%c0_20, %c0_21] : memref<16x16xf32, #tpu.memory_space<vmem>>, vector<16x16xf32>
    tpu.vector_store %arg9[%c0_20, %c0_21], %29 {strides = array<i32>} : memref<16x16xf32, #tpu.memory_space<vmem>>, vector<16x16xf32>,
    %c0_22 = arith.constant 0 : index
    %c0_23 = arith.constant 0 : index
    %31 = vector.load %arg10[%c0_22, %c0_23] : memref<16x16xf32, #tpu.memory_space<vmem>>, vector<16x16xf32>
    %c0_24 = arith.constant 0 : index
    %c0_25 = arith.constant 0 : index
    %c0_26 = arith.constant 0 : index
    %32 = vector.load %arg2[%c0_24, %c0_25, %c0_26] : memref<4x16x16xbf16, #tpu.memory_space<vmem>>, vector<4x16x16xbf16>
    %33 = vector.shape_cast %32 : vector<4x16x16xbf16> to vector<64x16xbf16>
    %cst_27 = arith.constant dense<0.000000e+00> : vector<64x16xf32>
    %34 = tpu.matmul %33, %3, %cst_27 {dimension_numbers = #tpu.dot_dimension_numbers<[1], [0], [0], [1], [0, 0, 1, 1], [], []>} : vector<64x16xbf16>, vector<16x16xbf16>, vector<64x16xf32> -> vector<64x16xf32>
    %35 = vector.shape_cast %34 : vector<64x16xf32> to vector<4x16x16xf32>
    %36 = vector.shape_cast %5 : vector<16x16xbf16> to vector<1x16x16xbf16>
    %37 = vector.shape_cast %36 : vector<1x16x16xbf16> to vector<1x16x16xbf16>
    %38 = vector.broadcast %37 : vector<1x16x16xbf16> to vector<4x16x16xbf16>
    %39 = arith.truncf %35 : vector<4x16x16xf32> to vector<4x16x16xbf16>
    %cst_28 = arith.constant dense<0.000000e+00> : vector<4x16x16xf32>
    %40 = tpu.matmul %38, %39, %cst_28 {dimension_numbers = #tpu.dot_dimension_numbers<[2], [1], [1], [2], [0, 0, 0, 1, 1, 2], [0], [0]>} : vector<4x16x16xbf16>, vector<4x16x16xbf16>, vector<4x16x16xf32> -> vector<4x16x16xf32>
    %41 = arith.subf %15, %40 : vector<4x16x16xf32>
    %42 = math.absf %41 : vector<4x16x16xf32>
    %cst_29 = arith.constant dense<0.000000e+00> : vector<16x16xf32>
    %43 = vector.multi_reduction <add>, %42, %cst_29 [0] : vector<4x16x16xf32> to vector<16x16xf32>
    %44 = arith.addf %31, %43 : vector<16x16xf32>
    %c0_30 = arith.constant 0 : index
    %c0_31 = arith.constant 0 : index
    %45 = vector.load %arg10[%c0_30, %c0_31] : memref<16x16xf32, #tpu.memory_space<vmem>>, vector<16x16xf32>
    tpu.vector_store %arg10[%c0_30, %c0_31], %44 {strides = array<i32>} : memref<16x16xf32, #tpu.memory_space<vmem>>, vector<16x16xf32>,
    %c0_32 = arith.constant 0 : index
    %c0_33 = arith.constant 0 : index
    %46 = vector.load %arg11[%c0_32, %c0_33] : memref<16x16xf32, #tpu.memory_space<vmem>>, vector<16x16xf32>
    %c0_34 = arith.constant 0 : index
    %c0_35 = arith.constant 0 : index
    %c0_36 = arith.constant 0 : index
    %47 = vector.load %arg2[%c0_34, %c0_35, %c0_36] : memref<4x16x16xbf16, #tpu.memory_space<vmem>>, vector<4x16x16xbf16>
    %48 = vector.shape_cast %47 : vector<4x16x16xbf16> to vector<64x16xbf16>
    %cst_37 = arith.constant dense<0.000000e+00> : vector<64x16xf32>
    %49 = tpu.matmul %48, %4, %cst_37 {dimension_numbers = #tpu.dot_dimension_numbers<[1], [0], [0], [1], [0, 0, 1, 1], [], []>} : vector<64x16xbf16>, vector<16x16xbf16>, vector<64x16xf32> -> vector<64x16xf32>
    %50 = vector.shape_cast %49 : vector<64x16xf32> to vector<4x16x16xf32>
    %51 = vector.shape_cast %6 : vector<16x16xbf16> to vector<1x16x16xbf16>
    %52 = vector.shape_cast %51 : vector<1x16x16xbf16> to vector<1x16x16xbf16>
    %53 = vector.broadcast %52 : vector<1x16x16xbf16> to vector<4x16x16xbf16>
    %54 = arith.truncf %50 : vector<4x16x16xf32> to vector<4x16x16xbf16>
    %cst_38 = arith.constant dense<0.000000e+00> : vector<4x16x16xf32>
    %55 = tpu.matmul %53, %54, %cst_38 {dimension_numbers = #tpu.dot_dimension_numbers<[2], [1], [1], [2], [0, 0, 0, 1, 1, 2], [0], [0]>} : vector<4x16x16xbf16>, vector<4x16x16xbf16>, vector<4x16x16xf32> -> vector<4x16x16xf32>
    %56 = arith.subf %15, %55 : vector<4x16x16xf32>
    %57 = math.absf %56 : vector<4x16x16xf32>
    %cst_39 = arith.constant dense<0.000000e+00> : vector<16x16xf32>
    %58 = vector.multi_reduction <add>, %57, %cst_39 [0] : vector<4x16x16xf32> to vector<16x16xf32>
    %59 = arith.addf %46, %58 : vector<16x16xf32>
    %c0_40 = arith.constant 0 : index
    %c0_41 = arith.constant 0 : index
    %60 = vector.load %arg11[%c0_40, %c0_41] : memref<16x16xf32, #tpu.memory_space<vmem>>, vector<16x16xf32>
    tpu.vector_store %arg11[%c0_40, %c0_41], %59 {strides = array<i32>} : memref<16x16xf32, #tpu.memory_space<vmem>>, vector<16x16xf32>,
    %c1_i32 = arith.constant 1 : i32
    %61 = arith.cmpi eq, %arg0, %c1_i32 : i32
    %62 = arith.extui %61 : i1 to i32
    %c0_i32_42 = arith.constant 0 : i32
    %63 = arith.cmpi ne, %62, %c0_i32_42 : i32
    scf.if %63 {
      %c0_43 = arith.constant 0 : index
      %c0_44 = arith.constant 0 : index
      %64 = vector.load %arg9[%c0_43, %c0_44] : memref<16x16xf32, #tpu.memory_space<vmem>>, vector<16x16xf32>
      %c0_45 = arith.constant 0 : index
      %c0_46 = arith.constant 0 : index
      %65 = vector.load %arg10[%c0_45, %c0_46] : memref<16x16xf32, #tpu.memory_space<vmem>>, vector<16x16xf32>
      %c0_47 = arith.constant 0 : index
      %c0_48 = arith.constant 0 : index
      %66 = vector.load %arg11[%c0_47, %c0_48] : memref<16x16xf32, #tpu.memory_space<vmem>>, vector<16x16xf32>
      %67 = vector.shape_cast %64 : vector<16x16xf32> to vector<1x16x16xf32>
      %cst_49 = arith.constant dense<0.000000e+00> : vector<1xf32>
      %68 = vector.multi_reduction <add>, %67, %cst_49 [1, 2] : vector<1x16x16xf32> to vector<1xf32>
      %69 = vector.shape_cast %68 : vector<1xf32> to vector<1x1x1xf32>
      %70 = vector.extract %69[0, 0, 0] : f32 from vector<1x1x1xf32>
      %c0_50 = arith.constant 0 : index
      %71 = memref.load %arg8[%c0_50] : memref<6xf32, #tpu.memory_space<smem>>
      memref.store %70, %arg8[%c0_50] : memref<6xf32, #tpu.memory_space<smem>>
      %72 = vector.extract_strided_slice %64 {offsets = [0, 0], sizes = [8, 8], strides = [1, 1]} : vector<16x16xf32> to vector<8x8xf32>
      %73 = vector.shape_cast %72 : vector<8x8xf32> to vector<1x8x8xf32>
      %cst_51 = arith.constant dense<0.000000e+00> : vector<1xf32>
      %74 = vector.multi_reduction <add>, %73, %cst_51 [1, 2] : vector<1x8x8xf32> to vector<1xf32>
      %75 = vector.shape_cast %74 : vector<1xf32> to vector<1x1x1xf32>
      %76 = vector.extract %75[0, 0, 0] : f32 from vector<1x1x1xf32>
      %c1 = arith.constant 1 : index
      %77 = memref.load %arg8[%c1] : memref<6xf32, #tpu.memory_space<smem>>
      memref.store %76, %arg8[%c1] : memref<6xf32, #tpu.memory_space<smem>>
      %78 = vector.shape_cast %65 : vector<16x16xf32> to vector<1x16x16xf32>
      %cst_52 = arith.constant dense<0.000000e+00> : vector<1xf32>
      %79 = vector.multi_reduction <add>, %78, %cst_52 [1, 2] : vector<1x16x16xf32> to vector<1xf32>
      %80 = vector.shape_cast %79 : vector<1xf32> to vector<1x1x1xf32>
      %81 = vector.extract %80[0, 0, 0] : f32 from vector<1x1x1xf32>
      %c2 = arith.constant 2 : index
      %82 = memref.load %arg8[%c2] : memref<6xf32, #tpu.memory_space<smem>>
      memref.store %81, %arg8[%c2] : memref<6xf32, #tpu.memory_space<smem>>
      %83 = vector.extract_strided_slice %65 {offsets = [0, 0], sizes = [8, 8], strides = [1, 1]} : vector<16x16xf32> to vector<8x8xf32>
      %84 = vector.shape_cast %83 : vector<8x8xf32> to vector<1x8x8xf32>
      %cst_53 = arith.constant dense<0.000000e+00> : vector<1xf32>
      %85 = vector.multi_reduction <add>, %84, %cst_53 [1, 2] : vector<1x8x8xf32> to vector<1xf32>
      %86 = vector.shape_cast %85 : vector<1xf32> to vector<1x1x1xf32>
      %87 = vector.extract %86[0, 0, 0] : f32 from vector<1x1x1xf32>
      %c3 = arith.constant 3 : index
      %88 = memref.load %arg8[%c3] : memref<6xf32, #tpu.memory_space<smem>>
      memref.store %87, %arg8[%c3] : memref<6xf32, #tpu.memory_space<smem>>
      %89 = vector.shape_cast %66 : vector<16x16xf32> to vector<1x16x16xf32>
      %cst_54 = arith.constant dense<0.000000e+00> : vector<1xf32>
      %90 = vector.multi_reduction <add>, %89, %cst_54 [1, 2] : vector<1x16x16xf32> to vector<1xf32>
      %91 = vector.shape_cast %90 : vector<1xf32> to vector<1x1x1xf32>
      %92 = vector.extract %91[0, 0, 0] : f32 from vector<1x1x1xf32>
      %c4 = arith.constant 4 : index
      %93 = memref.load %arg8[%c4] : memref<6xf32, #tpu.memory_space<smem>>
      memref.store %92, %arg8[%c4] : memref<6xf32, #tpu.memory_space<smem>>
      %94 = vector.extract_strided_slice %66 {offsets = [0, 0], sizes = [8, 8], strides = [1, 1]} : vector<16x16xf32> to vector<8x8xf32>
      %95 = vector.shape_cast %94 : vector<8x8xf32> to vector<1x8x8xf32>
      %cst_55 = arith.constant dense<0.000000e+00> : vector<1xf32>
      %96 = vector.multi_reduction <add>, %95, %cst_55 [1, 2] : vector<1x8x8xf32> to vector<1xf32>
      %97 = vector.shape_cast %96 : vector<1xf32> to vector<1x1x1xf32>
      %98 = vector.extract %97[0, 0, 0] : f32 from vector<1x1x1xf32>
      %c5 = arith.constant 5 : index
      %99 = memref.load %arg8[%c5] : memref<6xf32, #tpu.memory_space<smem>>
      memref.store %98, %arg8[%c5] : memref<6xf32, #tpu.memory_space<smem>>
    } else {
    }
    return
  }
  func.func @transform_0(%arg0: i32) -> (i32, i32, i32) {
    %c0_i32 = arith.constant 0 : i32
    %c0_i32_0 = arith.constant 0 : i32
    %c0_i32_1 = arith.constant 0 : i32
    return %arg0, %c0_i32, %c0_i32_0 : i32, i32, i32
  }
  func.func @transform_1(%arg0: i32) -> (i32, i32, i32) {
    %c0_i32 = arith.constant 0 : i32
    %c0_i32_0 = arith.constant 0 : i32
    %c0_i32_1 = arith.constant 0 : i32
    return %arg0, %c0_i32, %c0_i32_0 : i32, i32, i32
  }
  func.func @transform_2(%arg0: i32) -> (i32, i32, i32) {
    %c0_i32 = arith.constant 0 : i32
    %c0_i32_0 = arith.constant 0 : i32
    %c0_i32_1 = arith.constant 0 : i32
    return %arg0, %c0_i32, %c0_i32_0 : i32, i32, i32
  }
  func.func @transform_3(%arg0: i32) -> (i32, i32) {
    %c0_i32 = arith.constant 0 : i32
    %c0_i32_0 = arith.constant 0 : i32
    %c0_i32_1 = arith.constant 0 : i32
    return %c0_i32, %c0_i32_0 : i32, i32
  }
  func.func @transform_4(%arg0: i32) -> (i32, i32) {
    %c0_i32 = arith.constant 0 : i32
    %c0_i32_0 = arith.constant 0 : i32
    %c0_i32_1 = arith.constant 0 : i32
    return %c0_i32, %c0_i32_0 : i32, i32
  }
  func.func @transform_5(%arg0: i32) -> (i32, i32) {
    %c0_i32 = arith.constant 0 : i32
    %c0_i32_0 = arith.constant 0 : i32
    %c0_i32_1 = arith.constant 0 : i32
    return %c0_i32, %c0_i32_0 : i32, i32
  }
  func.func @transform_6(%arg0: i32) -> (i32, i32) {
    %c0_i32 = arith.constant 0 : i32
    %c0_i32_0 = arith.constant 0 : i32
    %c0_i32_1 = arith.constant 0 : i32
    return %c0_i32, %c0_i32_0 : i32, i32
  }
  func.func @transform_7(%arg0: i32) -> i32 {
    %c0_i32 = arith.constant 0 : i32
    %c0_i32_0 = arith.constant 0 : i32
    return %c0_i32 : i32
  }
}

</mosaic_0001>

<llo_original>
// kernel: frcl_forward.1
$region0: #{frcl_forward.1}
  #allocation0 [shape = 'u32[]', space=smem, size = 0x4, offset = 0x4, fixed_abs, tag = 'smem constant byte address 0x4 - core index']
  #allocation1 [shape = 'u32[144,128]{1,0:T(1,128)}', space=vmem, size = 0x12000, scoped, tag = 'internal scratch']
  #allocation2 [shape = 'f32[16,16]{1,0:T(8,128)}', space=vmem, size = 0x2000, scoped, tag = 'scratch operand']
  #allocation3 [shape = 'f32[16,16]{1,0:T(8,128)}', space=vmem, size = 0x2000, scoped, tag = 'scratch operand']
  #allocation4 [shape = 'f32[16,16]{1,0:T(8,128)}', space=vmem, size = 0x2000, scoped, tag = 'scratch operand']
  %s0 = inlined_call_operand.vmem [shape: bf16[8,16,16], index: 0, kind: input, shape index: {}]
  %s1 = inlined_call_operand.vmem [shape: bf16[8,16,16], index: 1, kind: input, shape index: {}]
  %s2 = inlined_call_operand.vmem [shape: bf16[8,16,16], index: 2, kind: input, shape index: {}]
  %s3 = inlined_call_operand.vmem [shape: bf16[16,16], index: 3, kind: input, shape index: {}, may-alias: {3,5}]
  %s4 = inlined_call_operand.vmem [shape: bf16[16,16], index: 4, kind: input, shape index: {}, may-alias: {4,6}]
  %s5 = inlined_call_operand.vmem [shape: bf16[16,16], index: 5, kind: input, shape index: {}, may-alias: {3,5}]
  %s6 = inlined_call_operand.vmem [shape: bf16[16,16], index: 6, kind: input, shape index: {}, may-alias: {4,6}]
  %s7 = inlined_call_operand.vmem [shape: f32[6], index: 7, kind: output, shape index: {}]
  %s8 = sld [smem:[#allocation0]]
  $region69: #{frcl_forward.1} parent=0
    _
  %s10 = ssub.s32 1, %s8
  %s11 = scalar_select 0, %s10, %s8
  $region1: #{frcl_forward.1} parent=0
    #allocation5 [shape = 'u8[512]{0}', space=smem, size = 0x200, scoped, tag = 'output window, operand 0, single buffered']
    #allocation6 [shape = 's32[2]{0}', space=sflag, size = 0x8, scoped, tag = 'scoped memory for frcl_forward.1']
    %12 = vsyncpa [#allocation6], 0
    loop: start=0, step=1, limit=4
    $region2: #{frcl_forward.1} parent=1 // loop_pre_header
      _
    $region3: #{frcl_forward.1} parent=1 // loop_header
      %s14 = sphi 0, %s18
      %p15 = scmp.ge.s32.totalorder %s14, 4
      %s24 = sphi 0, %s26
      %s27 = sphi 0, %s24
      %s28 = sphi 0, %s27
      %s44 = sphi 0, %s28
      %s50 = sphi 0, %s52
      %s53 = sphi 0, %s50
      %s54 = sphi 0, %s53
      %s70 = sphi 0, %s54
      %s76 = sphi 0, %s78
      %s79 = sphi 0, %s76
      %s80 = sphi 0, %s79
      %s96 = sphi 0, %s80
      %s100 = sphi 0, %s100
      %s102 = sphi 0, %s100
      %s103 = sphi 0, %s102
      %s117 = sphi 0, %s103
      %s121 = sphi 0, %s121
      %s123 = sphi 0, %s121
      %s124 = sphi 0, %s123
      %s138 = sphi 0, %s124
      %s142 = sphi 0, %s142
      %s144 = sphi 0, %s142
      %s145 = sphi 0, %s144
      %s159 = sphi 0, %s145
      %s163 = sphi 0, %s163
      %s165 = sphi 0, %s163
      %s166 = sphi 0, %s165
      %s180 = sphi 0, %s166
      %s184 = sphi 0, %s184
      %s186 = sphi 0, %s184
      %s187 = sphi 0, %s186
      %s201 = sphi 0, %s187
    $region4: #{frcl_forward.1} parent=1 // loop_header_branch
      %17 = sbr.rel (%p15) target = $region8
    $region5: #{frcl_forward.1} parent=1 // loop_body
      %s19 = ssub.s32 %s14, 1
      %s20 = ssub.s32 %s14, 2
      %s21 = sadd.s32 %s14, 1
      %s22 = ssub.s32 %s14, %s21
      %p23 = scmp.eq.s32.totalorder %s22, 0
      %s25 = sadd.s32 %s24, 1
      %s26 = scalar_select %p23, %s24, %s25
      %p29 = pneg %p23
      %p30 = scmp.eq.s32.totalorder %s14, 1
      %p31 = por %p29, %p30
      %p32 = scmp.ne.s32.totalorder %s24, %s27
      %p33 = scmp.eq.s32.totalorder %s14, 0
      %p34 = por %p32, %p33
      %p35 = scmp.ne.s32.totalorder %s24, %s27
      %p36 = scmp.eq.s32.totalorder %s19, 1
      %p37 = por %p35, %p36
      %p38 = scmp.ne.s32.totalorder %s27, %s28
      %p39 = scmp.eq.s32.totalorder %s19, 0
      %p40 = por %p38, %p39
      %p41 = scmp.ne.s32.totalorder %s27, %s28
      %p42 = scmp.eq.s32.totalorder %s20, 1
      %p43 = por %p41, %p42
      %p45 = scmp.ne.s32.totalorder %s28, %s44
      %p46 = scmp.eq.s32.totalorder %s20, 0
      %p47 = por %p45, %p46
      %s48 = ssub.s32 %s14, %s21
      %p49 = scmp.eq.s32.totalorder %s48, 0
      %s51 = sadd.s32 %s50, 1
      %s52 = scalar_select %p49, %s50, %s51
      %p55 = pneg %p49
      %p56 = scmp.eq.s32.totalorder %s14, 1
      %p57 = por %p55, %p56
      %p58 = scmp.ne.s32.totalorder %s50, %s53
      %p59 = scmp.eq.s32.totalorder %s14, 0
      %p60 = por %p58, %p59
      %p61 = scmp.ne.s32.totalorder %s50, %s53
      %p62 = scmp.eq.s32.totalorder %s19, 1
      %p63 = por %p61, %p62
      %p64 = scmp.ne.s32.totalorder %s53, %s54
      %p65 = scmp.eq.s32.totalorder %s19, 0
      %p66 = por %p64, %p65
      %p67 = scmp.ne.s32.totalorder %s53, %s54
      %p68 = scmp.eq.s32.totalorder %s20, 1
      %p69 = por %p67, %p68
      %p71 = scmp.ne.s32.totalorder %s54, %s70
      %p72 = scmp.eq.s32.totalorder %s20, 0
      %p73 = por %p71, %p72
      %s74 = ssub.s32 %s14, %s21
      %p75 = scmp.eq.s32.totalorder %s74, 0
      %s77 = sadd.s32 %s76, 1
      %s78 = scalar_select %p75, %s76, %s77
      %p81 = pneg %p75
      %p82 = scmp.eq.s32.totalorder %s14, 1
      %p83 = por %p81, %p82
      %p84 = scmp.ne.s32.totalorder %s76, %s79
      %p85 = scmp.eq.s32.totalorder %s14, 0
      %p86 = por %p84, %p85
      %p87 = scmp.ne.s32.totalorder %s76, %s79
      %p88 = scmp.eq.s32.totalorder %s19, 1
      %p89 = por %p87, %p88
      %p90 = scmp.ne.s32.totalorder %s79, %s80
      %p91 = scmp.eq.s32.totalorder %s19, 0
      %p92 = por %p90, %p91
      %p93 = scmp.ne.s32.totalorder %s79, %s80
      %p94 = scmp.eq.s32.totalorder %s20, 1
      %p95 = por %p93, %p94
      %p97 = scmp.ne.s32.totalorder %s80, %s96
      %p98 = scmp.eq.s32.totalorder %s20, 0
      %p99 = por %p97, %p98
      %s101 = sadd.s32 %s100, 1
      %p104 = scmp.eq.s32.totalorder %s14, 1
      %p105 = scmp.ne.s32.totalorder %s100, %s102
      %p106 = scmp.eq.s32.totalorder %s14, 0
      %p107 = por %p105, %p106
      %p108 = scmp.ne.s32.totalorder %s100, %s102
      %p109 = scmp.eq.s32.totalorder %s19, 1
      %p110 = por %p108, %p109
      %p111 = scmp.ne.s32.totalorder %s102, %s103
      %p112 = scmp.eq.s32.totalorder %s19, 0
      %p113 = por %p111, %p112
      %p114 = scmp.ne.s32.totalorder %s102, %s103
      %p115 = scmp.eq.s32.totalorder %s20, 1
      %p116 = por %p114, %p115
      %p118 = scmp.ne.s32.totalorder %s103, %s117
      %p119 = scmp.eq.s32.totalorder %s20, 0
      %p120 = por %p118, %p119
      %s122 = sadd.s32 %s121, 1
      %p125 = scmp.eq.s32.totalorder %s14, 1
      %p126 = scmp.ne.s32.totalorder %s121, %s123
      %p127 = scmp.eq.s32.totalorder %s14, 0
      %p128 = por %p126, %p127
      %p129 = scmp.ne.s32.totalorder %s121, %s123
      %p130 = scmp.eq.s32.totalorder %s19, 1
      %p131 = por %p129, %p130
      %p132 = scmp.ne.s32.totalorder %s123, %s124
      %p133 = scmp.eq.s32.totalorder %s19, 0
      %p134 = por %p132, %p133
      %p135 = scmp.ne.s32.totalorder %s123, %s124
      %p136 = scmp.eq.s32.totalorder %s20, 1
      %p137 = por %p135, %p136
      %p139 = scmp.ne.s32.totalorder %s124, %s138
      %p140 = scmp.eq.s32.totalorder %s20, 0
      %p141 = por %p139, %p140
      %s143 = sadd.s32 %s142, 1
      %p146 = scmp.eq.s32.totalorder %s14, 1
      %p147 = scmp.ne.s32.totalorder %s142, %s144
      %p148 = scmp.eq.s32.totalorder %s14, 0
      %p149 = por %p147, %p148
      %p150 = scmp.ne.s32.totalorder %s142, %s144
      %p151 = scmp.eq.s32.totalorder %s19, 1
      %p152 = por %p150, %p151
      %p153 = scmp.ne.s32.totalorder %s144, %s145
      %p154 = scmp.eq.s32.totalorder %s19, 0
      %p155 = por %p153, %p154
      %p156 = scmp.ne.s32.totalorder %s144, %s145
      %p157 = scmp.eq.s32.totalorder %s20, 1
      %p158 = por %p156, %p157
      %p160 = scmp.ne.s32.totalorder %s145, %s159
      %p161 = scmp.eq.s32.totalorder %s20, 0
      %p162 = por %p160, %p161
      %s164 = sadd.s32 %s163, 1
      %p167 = scmp.eq.s32.totalorder %s14, 1
      %p168 = scmp.ne.s32.totalorder %s163, %s165
      %p169 = scmp.eq.s32.totalorder %s14, 0
      %p170 = por %p168, %p169
      %p171 = scmp.ne.s32.totalorder %s163, %s165
      %p172 = scmp.eq.s32.totalorder %s19, 1
      %p173 = por %p171, %p172
      %p174 = scmp.ne.s32.totalorder %s165, %s166
      %p175 = scmp.eq.s32.totalorder %s19, 0
      %p176 = por %p174, %p175
      %p177 = scmp.ne.s32.totalorder %s165, %s166
      %p178 = scmp.eq.s32.totalorder %s20, 1
      %p179 = por %p177, %p178
      %p181 = scmp.ne.s32.totalorder %s166, %s180
      %p182 = scmp.eq.s32.totalorder %s20, 0
      %p183 = por %p181, %p182
      %s185 = sadd.s32 %s184, 1
      %p188 = scmp.eq.s32.totalorder %s14, 1
      %p189 = scmp.ne.s32.totalorder %s184, %s186
      %p190 = scmp.eq.s32.totalorder %s14, 0
      %p191 = por %p189, %p190
      %p192 = scmp.ne.s32.totalorder %s184, %s186
      %p193 = scmp.eq.s32.totalorder %s19, 1
      %p194 = por %p192, %p193
      %p195 = scmp.ne.s32.totalorder %s186, %s187
      %p196 = scmp.eq.s32.totalorder %s19, 0
      %p197 = por %p195, %p196
      %p198 = scmp.ne.s32.totalorder %s186, %s187
      %p199 = scmp.eq.s32.totalorder %s20, 1
      %p200 = por %p198, %p199
      %p202 = scmp.ne.s32.totalorder %s187, %s201
      %p203 = scmp.eq.s32.totalorder %s20, 0
      %p204 = por %p202, %p203
      %p205 = scmp.le.s32.totalorder 1, %s14
      %p206 = scmp.lt.s32.totalorder %s14, 3
      %p207 = pnand %p205, %p206
      %p208 = pneg %p207
      // Predicated region
      $region9: #{frcl_forward.1} parent=5 // pred_check
        _
      $region10: #{frcl_forward.1} parent=5 // pred_check_branch
        %210 = sbr.rel (%p207) target = $region12
      $region11: #{frcl_forward.1} parent=5 // pred_region
        %s211 = ssub.s32 %s14, 1
        // Predicated region
        $region13: #{frcl_forward.1} parent=11 // pred_check
          %p212 = pneg %p113
        $region14: #{frcl_forward.1} parent=11 // pred_check_branch
          %214 = sbr.rel (%p212) target = $region16
        $region15: #{frcl_forward.1} parent=11 // pred_region
          _
        $region16: #{frcl_forward.1} parent=11 // pred_fallthru
          _
        // Predicated region
        $region17: #{frcl_forward.1} parent=11 // pred_check
          %p215 = pneg %p134
        $region18: #{frcl_forward.1} parent=11 // pred_check_branch
          %217 = sbr.rel (%p215) target = $region20
        $region19: #{frcl_forward.1} parent=11 // pred_region
          _
        $region20: #{frcl_forward.1} parent=11 // pred_fallthru
          _
        // Predicated region
        $region21: #{frcl_forward.1} parent=11 // pred_check
          %p218 = pneg %p155
        $region22: #{frcl_forward.1} parent=11 // pred_check_branch
          %220 = sbr.rel (%p218) target = $region24
        $region23: #{frcl_forward.1} parent=11 // pred_region
          _
        $region24: #{frcl_forward.1} parent=11 // pred_fallthru
          _
        // Predicated region
        $region25: #{frcl_forward.1} parent=11 // pred_check
          %p221 = pneg %p176
        $region26: #{frcl_forward.1} parent=11 // pred_check_branch
          %223 = sbr.rel (%p221) target = $region28
        $region27: #{frcl_forward.1} parent=11 // pred_region
          _
        $region28: #{frcl_forward.1} parent=11 // pred_fallthru
          _
      $region12: #{frcl_forward.1} parent=5 // pred_fallthru
        _
      %p224 = scmp.lt.s32.totalorder %s14, 2
      // Predicated region
      $region29: #{frcl_forward.1} parent=5 // pred_check
        %p225 = pneg %p224
      $region30: #{frcl_forward.1} parent=5 // pred_check_branch
        %227 = sbr.rel (%p225) target = $region32
      $region31: #{frcl_forward.1} parent=5 // pred_region
        // Predicated region
        $region33: #{frcl_forward.1} parent=31 // pred_check
          %p228 = pneg %p34
        $region34: #{frcl_forward.1} parent=31 // pred_check_branch
          %230 = sbr.rel (%p228) target = $region36
        $region35: #{frcl_forward.1} parent=31 // pred_region
          %s231 = smul.u32 4, %s14
          %p232 = scmp.lt.s32.totalorder %s231, 7
          %s233 = scalar_select %p232, %s231, 7
          %s234 = smul.addr %s233, 2
          %s235 = smul.addr %s234, 4
          %s236 = scalar_lea.vmem %s0, %s235
          %s237 = smul.u32 4, %s14
        $region36: #{frcl_forward.1} parent=31 // pred_fallthru
          _
        // Predicated region
        $region37: #{frcl_forward.1} parent=31 // pred_check
          %p238 = pneg %p60
        $region38: #{frcl_forward.1} parent=31 // pred_check_branch
          %240 = sbr.rel (%p238) target = $region40
        $region39: #{frcl_forward.1} parent=31 // pred_region
          %s241 = smul.u32 4, %s14
          %p242 = scmp.lt.s32.totalorder %s241, 7
          %s243 = scalar_select %p242, %s241, 7
          %s244 = smul.addr %s243, 2
          %s245 = smul.addr %s244, 4
          %s246 = scalar_lea.vmem %s1, %s245
          %s247 = smul.u32 4, %s14
        $region40: #{frcl_forward.1} parent=31 // pred_fallthru
          _
        // Predicated region
        $region41: #{frcl_forward.1} parent=31 // pred_check
          %p248 = pneg %p86
        $region42: #{frcl_forward.1} parent=31 // pred_check_branch
          %250 = sbr.rel (%p248) target = $region44
        $region43: #{frcl_forward.1} parent=31 // pred_region
          %s251 = smul.u32 4, %s14
          %p252 = scmp.lt.s32.totalorder %s251, 7
          %s253 = scalar_select %p252, %s251, 7
          %s254 = smul.addr %s253, 2
          %s255 = smul.addr %s254, 4
          %s256 = scalar_lea.vmem %s2, %s255
          %s257 = smul.u32 4, %s14
        $region44: #{frcl_forward.1} parent=31 // pred_fallthru
          _
      $region32: #{frcl_forward.1} parent=5 // pred_fallthru
        _
      %p258 = scmp.le.s32.totalorder 1, %s14
      %p259 = scmp.lt.s32.totalorder %s14, 3
      %p260 = pnand %p258, %p259
      %p261 = pneg %p260
      // Predicated region
      $region45: #{frcl_forward.1} parent=5 // pred_check
        _
      $region46: #{frcl_forward.1} parent=5 // pred_check_branch
        %263 = sbr.rel (%p260) target = $region48
      $region47: #{frcl_forward.1} parent=5 // pred_region
        %s264 = ssub.s32 %s14, 1
        %s265 = smul.u32 4, %s19
        %p266 = scmp.lt.s32.totalorder %s265, 7
        %s267 = scalar_select %p266, %s265, 7
        %s268 = smul.addr %s267, 2
        %s269 = smul.addr %s268, 4
        %s270 = scalar_lea.vmem %s0, %s269
        %p271 = pneg %p40
        %p272 = pneg %p37
        %s273 = smul.u32 4, %s19
        %p274 = scmp.lt.s32.totalorder %s273, 7
        %s275 = scalar_select %p274, %s273, 7
        %s276 = smul.addr %s275, 2
        %s277 = smul.addr %s276, 4
        %s278 = scalar_lea.vmem %s1, %s277
        %p279 = pneg %p66
        %p280 = pneg %p63
        %s281 = smul.u32 4, %s19
        %p282 = scmp.lt.s32.totalorder %s281, 7
        %s283 = scalar_select %p282, %s281, 7
        %s284 = smul.addr %s283, 2
        %s285 = smul.addr %s284, 4
        %s286 = scalar_lea.vmem %s2, %s285
        %p287 = pneg %p92
        %p288 = pneg %p89
        %p289 = pneg %p113
        %p290 = pneg %p110
        %p291 = pneg %p134
        %p292 = pneg %p131
        %p293 = pneg %p155
        %p294 = pneg %p152
        %p295 = pneg %p176
        %p296 = pneg %p173
        %p297 = pneg %p197
        %p298 = pneg %p194
        %s299 = smul.u32 4, %s19
        %p300 = scmp.lt.s32.totalorder %s299, 7
        %s301 = scalar_select %p300, %s299, 7
        %s302 = smul.addr %s301, 2
        %s303 = smul.addr %s302, 4
        %s304 = scalar_lea.vmem %s0, %s303
        %s305 = smul.u32 4, %s19
        %s306 = smul.u32 4, %s19
        %p307 = scmp.lt.s32.totalorder %s306, 7
        %s308 = scalar_select %p307, %s306, 7
        %s309 = smul.addr %s308, 2
        %s310 = smul.addr %s309, 4
        %s311 = scalar_lea.vmem %s1, %s310
        %s312 = smul.u32 4, %s19
        %s313 = smul.u32 4, %s19
        %p314 = scmp.lt.s32.totalorder %s313, 7
        %s315 = scalar_select %p314, %s313, 7
        %s316 = smul.addr %s315, 2
        %s317 = smul.addr %s316, 4
        %s318 = scalar_lea.vmem %s2, %s317
        %s319 = smul.u32 4, %s19
        %p321 = scmp.eq.s32.totalorder %s19, 0
        // Predicated region
        $region49: #{frcl_forward.1} parent=47 // pred_check
          %p322 = pneg %p321
        $region50: #{frcl_forward.1} parent=47 // pred_check_branch
          %324 = sbr.rel (%p322) target = $region52
        $region51: #{frcl_forward.1} parent=47 // pred_region
          %vm325 = vcmask 130048
          %326 = vst.msk [vmem:[#allocation2] sm:$0xff] %vm325, 0.0
          %327 = vst.msk [vmem:[#allocation2 + $0x8] sm:$0xff] %vm325, 0.0
          %328 = vst.msk [vmem:[#allocation3] sm:$0xff] %vm325, 0.0
          %329 = vst.msk [vmem:[#allocation3 + $0x8] sm:$0xff] %vm325, 0.0
          %330 = vst.msk [vmem:[#allocation4] sm:$0xff] %vm325, 0.0
          %331 = vst.msk [vmem:[#allocation4 + $0x8] sm:$0xff] %vm325, 0.0
        $region52: #{frcl_forward.1} parent=47 // pred_fallthru
          _
        %v332 = vld [vmem:[%s3] sm:$0xf]
        %v333 = vld [vmem:[%s3 + $0x4] sm:$0xf]
        %v334 = vld [vmem:[%s4] sm:$0xf]
        %v335 = vld [vmem:[%s4 + $0x4] sm:$0xf]
        %v336 = vld [vmem:[%s5] sm:$0xf]
        %v337 = vld [vmem:[%s5 + $0x4] sm:$0xf]
        %v338 = vld [vmem:[%s6] sm:$0xf]
        %v339 = vld [vmem:[%s6 + $0x4] sm:$0xf]
        %v340 = vld [vmem:[%s318] sm:$0xf]
        %v341 = vld [vmem:[%s318 + $0x4] sm:$0xf]
        %v342 = vld [vmem:[%s318 + $0x8] sm:$0xf]
        %v343 = vld [vmem:[%s318 + $0xc] sm:$0xf]
        %v344 = vld [vmem:[%s318 + $0x10] sm:$0xf]
        %v345 = vld [vmem:[%s318 + $0x14] sm:$0xf]
        %v346 = vld [vmem:[%s318 + $0x18] sm:$0xf]
        %v347 = vld [vmem:[%s318 + $0x1c] sm:$0xf]
        %v356 = vunpack.c.l.b16 %v340
        %v357 = vunpack.c.l.b16 %v341
        %v358 = vunpack.c.l.b16 %v342
        %v359 = vunpack.c.l.b16 %v343
        %v360 = vunpack.c.l.b16 %v344
        %v361 = vunpack.c.l.b16 %v345
        %v362 = vunpack.c.l.b16 %v346
        %v363 = vunpack.c.l.b16 %v347
        %v364 = vpack.c.b16 %v357, %v356
        %v365 = vpack.c.b16 %v359, %v358
        %v366 = vpack.c.b16 %v361, %v360
        %v367 = vpack.c.b16 %v363, %v362
        %v370 = vunpack.c.l.b16 %v332
        %v371 = vunpack.c.l.b16 %v333
        %v372 = vpack.c.b16 %v371, %v370
        %vm374 = vcmask 130048
        %v376 = vsel %vm374, %v364, 0
        %v379 = vsel %vm374, %v365, 0
        %v382 = vsel %vm374, %v366, 0
        %v385 = vsel %vm374, %v367, 0
        %387 = vmatprep.subr.bf16.mxu0 0
        %388 = vmatpush1.bf16.msra.mxu0 %v372
        %389 = vmatprep.subr.bf16.mxu0 0
        %390 = vmatpush1.bf16.msra.mxu0 0
        %391 = vmatprep.subr.bf16.mxu0 0
        %392 = vmatpush1.bf16.msra.mxu0 0
        %393 = vmatprep.subr.bf16.mxu0 0
        %394 = vmatpush1.bf16.msra.mxu0 0
        %395 = vmatprep.subr.bf16.mxu0 0
        %396 = vmatpush1.bf16.msra.mxu0 0
        %397 = vmatprep.subr.bf16.mxu0 0
        %398 = vmatpush1.bf16.msra.mxu0 0
        %399 = vmatprep.subr.bf16.mxu0 0
        %400 = vmatpush1.bf16.msra.mxu0 0
        %401 = vmatprep.subr.bf16.mxu0 0
        %402 = vmatpush1.bf16.msra.mxu0 0
        %403 = vmatprep.subr.bf16.mxu0 0
        %404 = vmatpush1.bf16.msra.mxu0 0
        %405 = vmatprep.subr.bf16.mxu0 0
        %406 = vmatpush1.bf16.msra.mxu0 0
        %407 = vmatprep.subr.bf16.mxu0 0
        %408 = vmatpush1.bf16.msra.mxu0 0
        %409 = vmatprep.subr.bf16.mxu0 0
        %410 = vmatpush1.bf16.msra.mxu0 0
        %411 = vmatprep.subr.bf16.mxu0 0
        %412 = vmatpush1.bf16.msra.mxu0 0
        %413 = vmatprep.subr.bf16.mxu0 0
        %414 = vmatpush1.bf16.msra.mxu0 0
        %415 = vmatprep.subr.bf16.mxu0 0
        %416 = vmatpush1.bf16.msra.mxu0 0
        %417 = vmatprep.subr.bf16.mxu0 0
        %418 = vmatpush1.bf16.msra.mxu0 0
        %419 = vmatprep.mubr.bf16.mxu0 0
        %420 = vmatmul.mubr.bf16.gmra.mrb[0].mxu0 %v376
        %v421 = vpop.f32.mrb[0].mxu0
        %v422 = vadd.f32 0.0, %v421
        %v423 = vpop.f32.mrb[0].mxu0
        %v424 = vpop.f32.mrb[0].mxu0
        %v425 = vadd.f32 0.0, %v424
        %v426 = vpop.f32.mrb[0].mxu0
        %427 = vmatprep.mubr.bf16.mxu0 0
        %428 = vmatmul.mubr.bf16.gmra.mrb[0].mxu0 %v379
        %v429 = vpop.f32.mrb[0].mxu0
        %v430 = vadd.f32 0.0, %v429
        %v431 = vpop.f32.mrb[0].mxu0
        %v432 = vpop.f32.mrb[0].mxu0
        %v433 = vadd.f32 0.0, %v432
        %v434 = vpop.f32.mrb[0].mxu0
        %435 = vmatprep.mubr.bf16.mxu0 0
        %436 = vmatmul.mubr.bf16.gmra.mrb[0].mxu0 %v382
        %v437 = vpop.f32.mrb[0].mxu0
        %v438 = vadd.f32 0.0, %v437
        %v439 = vpop.f32.mrb[0].mxu0
        %v440 = vpop.f32.mrb[0].mxu0
        %v441 = vadd.f32 0.0, %v440
        %v442 = vpop.f32.mrb[0].mxu0
        %443 = vmatprep.mubr.bf16.mxu0 0
        %444 = vmatmul.mubr.bf16.gmra.mrb[0].mxu0 %v385
        %v445 = vpop.f32.mrb[0].mxu0
        %v446 = vadd.f32 0.0, %v445
        %v447 = vpop.f32.mrb[0].mxu0
        %v448 = vpop.f32.mrb[0].mxu0
        %v449 = vadd.f32 0.0, %v448
        %v450 = vpop.f32.mrb[0].mxu0
        %451 = vdwg.mxu0
        %452 = vxpose.xlu0.b32.start [1/16] %v422, 128
        %453 = vxpose.xlu0.b32.cont [2/16] %v425, 128
        %454 = vxpose.xlu0.b32.cont [3/16] 0.0, 128
        %455 = vxpose.xlu0.b32.cont [4/16] 0.0, 128
        %456 = vxpose.xlu0.b32.cont [5/16] 0.0, 128
        %457 = vxpose.xlu0.b32.cont [6/16] 0.0, 128
        %458 = vxpose.xlu0.b32.cont [7/16] 0.0, 128
        %459 = vxpose.xlu0.b32.cont [8/16] 0.0, 128
        %460 = vxpose.xlu0.b32.cont [9/16] 0.0, 128
        %461 = vxpose.xlu0.b32.cont [10/16] 0.0, 128
        %462 = vxpose.xlu0.b32.cont [11/16] 0.0, 128
        %463 = vxpose.xlu0.b32.cont [12/16] 0.0, 128
        %464 = vxpose.xlu0.b32.cont [13/16] 0.0, 128
        %465 = vxpose.xlu0.b32.cont [14/16] 0.0, 128
        %466 = vxpose.xlu0.b32.cont [15/16] 0.0, 128
        %467 = vxpose.xlu0.b32.end [16/16] 0.0, 128
        %v468 = vpop.trf.xlu0
        %v469 = vpop.trf.xlu0
        %v470 = vpop.trf.xlu0
        %v471 = vpop.trf.xlu0
        %v472 = vpop.trf.xlu0
        %v473 = vpop.trf.xlu0
        %v474 = vpop.trf.xlu0
        %v475 = vpop.trf.xlu0
        %v476 = vpop.trf.xlu0
        %v477 = vpop.trf.xlu0
        %v478 = vpop.trf.xlu0
        %v479 = vpop.trf.xlu0
        %v480 = vpop.trf.xlu0
        %v481 = vpop.trf.xlu0
        %v482 = vpop.trf.xlu0
        %v483 = vpop.trf.xlu0
        %484 = vxpose.xlu0.b32.start [1/16] %v430, 128
        %485 = vxpose.xlu0.b32.cont [2/16] %v433, 128
        %486 = vxpose.xlu0.b32.cont [3/16] 0.0, 128
        %487 = vxpose.xlu0.b32.cont [4/16] 0.0, 128
        %488 = vxpose.xlu0.b32.cont [5/16] 0.0, 128
        %489 = vxpose.xlu0.b32.cont [6/16] 0.0, 128
        %490 = vxpose.xlu0.b32.cont [7/16] 0.0, 128
        %491 = vxpose.xlu0.b32.cont [8/16] 0.0, 128
        %492 = vxpose.xlu0.b32.cont [9/16] 0.0, 128
        %493 = vxpose.xlu0.b32.cont [10/16] 0.0, 128
        %494 = vxpose.xlu0.b32.cont [11/16] 0.0, 128
        %495 = vxpose.xlu0.b32.cont [12/16] 0.0, 128
        %496 = vxpose.xlu0.b32.cont [13/16] 0.0, 128
        %497 = vxpose.xlu0.b32.cont [14/16] 0.0, 128
        %498 = vxpose.xlu0.b32.cont [15/16] 0.0, 128
        %499 = vxpose.xlu0.b32.end [16/16] 0.0, 128
        %v500 = vpop.trf.xlu0
        %v501 = vpop.trf.xlu0
        %v502 = vpop.trf.xlu0
        %v503 = vpop.trf.xlu0
        %v504 = vpop.trf.xlu0
        %v505 = vpop.trf.xlu0
        %v506 = vpop.trf.xlu0
        %v507 = vpop.trf.xlu0
        %v508 = vpop.trf.xlu0
        %v509 = vpop.trf.xlu0
        %v510 = vpop.trf.xlu0
        %v511 = vpop.trf.xlu0
        %v512 = vpop.trf.xlu0
        %v513 = vpop.trf.xlu0
        %v514 = vpop.trf.xlu0
        %v515 = vpop.trf.xlu0
        %516 = vxpose.xlu0.b32.start [1/16] %v438, 128
        %517 = vxpose.xlu0.b32.cont [2/16] %v441, 128
        %518 = vxpose.xlu0.b32.cont [3/16] 0.0, 128
        %519 = vxpose.xlu0.b32.cont [4/16] 0.0, 128
        %520 = vxpose.xlu0.b32.cont [5/16] 0.0, 128
        %521 = vxpose.xlu0.b32.cont [6/16] 0.0, 128
        %522 = vxpose.xlu0.b32.cont [7/16] 0.0, 128
        %523 = vxpose.xlu0.b32.cont [8/16] 0.0, 128
        %524 = vxpose.xlu0.b32.cont [9/16] 0.0, 128
        %525 = vxpose.xlu0.b32.cont [10/16] 0.0, 128
        %526 = vxpose.xlu0.b32.cont [11/16] 0.0, 128
        %527 = vxpose.xlu0.b32.cont [12/16] 0.0, 128
        %528 = vxpose.xlu0.b32.cont [13/16] 0.0, 128
        %529 = vxpose.xlu0.b32.cont [14/16] 0.0, 128
        %530 = vxpose.xlu0.b32.cont [15/16] 0.0, 128
        %531 = vxpose.xlu0.b32.end [16/16] 0.0, 128
        %v532 = vpop.trf.xlu0
        %v533 = vpop.trf.xlu0
        %v534 = vpop.trf.xlu0
        %v535 = vpop.trf.xlu0
        %v536 = vpop.trf.xlu0
        %v537 = vpop.trf.xlu0
        %v538 = vpop.trf.xlu0
        %v539 = vpop.trf.xlu0
        %v540 = vpop.trf.xlu0
        %v541 = vpop.trf.xlu0
        %v542 = vpop.trf.xlu0
        %v543 = vpop.trf.xlu0
        %v544 = vpop.trf.xlu0
        %v545 = vpop.trf.xlu0
        %v546 = vpop.trf.xlu0
        %v547 = vpop.trf.xlu0
        %548 = vxpose.xlu0.b32.start [1/16] %v446, 128
        %549 = vxpose.xlu0.b32.cont [2/16] %v449, 128
        %550 = vxpose.xlu0.b32.cont [3/16] 0.0, 128
        %551 = vxpose.xlu0.b32.cont [4/16] 0.0, 128
        %552 = vxpose.xlu0.b32.cont [5/16] 0.0, 128
        %553 = vxpose.xlu0.b32.cont [6/16] 0.0, 128
        %554 = vxpose.xlu0.b32.cont [7/16] 0.0, 128
        %555 = vxpose.xlu0.b32.cont [8/16] 0.0, 128
        %556 = vxpose.xlu0.b32.cont [9/16] 0.0, 128
        %557 = vxpose.xlu0.b32.cont [10/16] 0.0, 128
        %558 = vxpose.xlu0.b32.cont [11/16] 0.0, 128
        %559 = vxpose.xlu0.b32.cont [12/16] 0.0, 128
        %560 = vxpose.xlu0.b32.cont [13/16] 0.0, 128
        %561 = vxpose.xlu0.b32.cont [14/16] 0.0, 128
        %562 = vxpose.xlu0.b32.cont [15/16] 0.0, 128
        %563 = vxpose.xlu0.b32.end [16/16] 0.0, 128
        %v564 = vpop.trf.xlu0
        %v565 = vpop.trf.xlu0
        %v566 = vpop.trf.xlu0
        %v567 = vpop.trf.xlu0
        %v568 = vpop.trf.xlu0
        %v569 = vpop.trf.xlu0
        %v570 = vpop.trf.xlu0
        %v571 = vpop.trf.xlu0
        %v572 = vpop.trf.xlu0
        %v573 = vpop.trf.xlu0
        %v574 = vpop.trf.xlu0
        %v575 = vpop.trf.xlu0
        %v576 = vpop.trf.xlu0
        %v577 = vpop.trf.xlu0
        %v578 = vpop.trf.xlu0
        %v579 = vpop.trf.xlu0
        %v580 = vpack.c.bf16 %v469, %v468
        %v581 = vpack.c.bf16 %v501, %v500
        %v582 = vpack.c.bf16 %v533, %v532
        %v583 = vpack.c.bf16 %v565, %v564
        %v586 = vunpack.c.l.b16 %v336
        %v587 = vunpack.c.l.b16 %v337
        %v588 = vpack.c.b16 %v587, %v586
        %v591 = vsel %vm374, %v580, 0
        %v594 = vsel %vm374, %v581, 0
        %v597 = vsel %vm374, %v582, 0
        %v600 = vsel %vm374, %v583, 0
        %602 = vmatprep.subr.bf16.mxu0 0
        %603 = vmatpush1.bf16.msra.mxu0 %v588
        %604 = vmatprep.subr.bf16.mxu0 0
        %605 = vmatpush1.bf16.msra.mxu0 0
        %606 = vmatprep.subr.bf16.mxu0 0
        %607 = vmatpush1.bf16.msra.mxu0 0
        %608 = vmatprep.subr.bf16.mxu0 0
        %609 = vmatpush1.bf16.msra.mxu0 0
        %610 = vmatprep.subr.bf16.mxu0 0
        %611 = vmatpush1.bf16.msra.mxu0 0
        %612 = vmatprep.subr.bf16.mxu0 0
        %613 = vmatpush1.bf16.msra.mxu0 0
        %614 = vmatprep.subr.bf16.mxu0 0
        %615 = vmatpush1.bf16.msra.mxu0 0
        %616 = vmatprep.subr.bf16.mxu0 0
        %617 = vmatpush1.bf16.msra.mxu0 0
        %618 = vmatprep.subr.bf16.mxu0 0
        %619 = vmatpush1.bf16.msra.mxu0 0
        %620 = vmatprep.subr.bf16.mxu0 0
        %621 = vmatpush1.bf16.msra.mxu0 0
        %622 = vmatprep.subr.bf16.mxu0 0
        %623 = vmatpush1.bf16.msra.mxu0 0
        %624 = vmatprep.subr.bf16.mxu0 0
        %625 = vmatpush1.bf16.msra.mxu0 0
        %626 = vmatprep.subr.bf16.mxu0 0
        %627 = vmatpush1.bf16.msra.mxu0 0
        %628 = vmatprep.subr.bf16.mxu0 0
        %629 = vmatpush1.bf16.msra.mxu0 0
        %630 = vmatprep.subr.bf16.mxu0 0
        %631 = vmatpush1.bf16.msra.mxu0 0
        %632 = vmatprep.subr.bf16.mxu0 0
        %633 = vmatpush1.bf16.msra.mxu0 0
        %634 = vmatprep.mubr.bf16.mxu0 0
        %635 = vmatmul.mubr.bf16.gmra.mrb[0].mxu0 %v591
        %v636 = vpop.f32.mrb[0].mxu0
        %v637 = vadd.f32 0.0, %v636
        %v638 = vpop.f32.mrb[0].mxu0
        %v639 = vpop.f32.mrb[0].mxu0
        %v640 = vadd.f32 0.0, %v639
        %v641 = vpop.f32.mrb[0].mxu0
        %642 = vmatprep.mubr.bf16.mxu0 0
        %643 = vmatmul.mubr.bf16.gmra.mrb[0].mxu0 %v594
        %v644 = vpop.f32.mrb[0].mxu0
        %v645 = vadd.f32 0.0, %v644
        %v646 = vpop.f32.mrb[0].mxu0
        %v647 = vpop.f32.mrb[0].mxu0
        %v648 = vadd.f32 0.0, %v647
        %v649 = vpop.f32.mrb[0].mxu0
        %650 = vmatprep.mubr.bf16.mxu0 0
        %651 = vmatmul.mubr.bf16.gmra.mrb[0].mxu0 %v597
        %v652 = vpop.f32.mrb[0].mxu0
        %v653 = vadd.f32 0.0, %v652
        %v654 = vpop.f32.mrb[0].mxu0
        %v655 = vpop.f32.mrb[0].mxu0
        %v656 = vadd.f32 0.0, %v655
        %v657 = vpop.f32.mrb[0].mxu0
        %658 = vmatprep.mubr.bf16.mxu0 0
        %659 = vmatmul.mubr.bf16.gmra.mrb[0].mxu0 %v600
        %v660 = vpop.f32.mrb[0].mxu0
        %v661 = vadd.f32 0.0, %v660
        %v662 = vpop.f32.mrb[0].mxu0
        %v663 = vpop.f32.mrb[0].mxu0
        %v664 = vadd.f32 0.0, %v663
        %v665 = vpop.f32.mrb[0].mxu0
        %666 = vdwg.mxu0
        %v667 = vld [vmem:[#allocation2] sm:$0xff]
        %v668 = vld [vmem:[#allocation2 + $0x8] sm:$0xff]
        %v669 = vld [vmem:[%s304] sm:$0xf]
        %v670 = vld [vmem:[%s304 + $0x4] sm:$0xf]
        %v671 = vld [vmem:[%s304 + $0x8] sm:$0xf]
        %v672 = vld [vmem:[%s304 + $0xc] sm:$0xf]
        %v673 = vld [vmem:[%s304 + $0x10] sm:$0xf]
        %v674 = vld [vmem:[%s304 + $0x14] sm:$0xf]
        %v675 = vld [vmem:[%s304 + $0x18] sm:$0xf]
        %v676 = vld [vmem:[%s304 + $0x1c] sm:$0xf]
        %v685 = vunpack.c.l.b16 %v669
        %v686 = vunpack.c.l.b16 %v670
        %v687 = vunpack.c.l.b16 %v671
        %v688 = vunpack.c.l.b16 %v672
        %v689 = vunpack.c.l.b16 %v673
        %v690 = vunpack.c.l.b16 %v674
        %v691 = vunpack.c.l.b16 %v675
        %v692 = vunpack.c.l.b16 %v676
        %v693 = vpack.c.b16 %v686, %v685
        %v694 = vpack.c.b16 %v688, %v687
        %v695 = vpack.c.b16 %v690, %v689
        %v696 = vpack.c.b16 %v692, %v691
        %v698 = vsel %vm374, %v693, 0
        %v701 = vsel %vm374, %v694, 0
        %v704 = vsel %vm374, %v695, 0
        %v707 = vsel %vm374, %v696, 0
        %709 = vmatprep.subr.bf16.mxu0 0
        %710 = vmatpush1.bf16.msra.mxu0 %v372
        %711 = vmatprep.subr.bf16.mxu0 0
        %712 = vmatpush1.bf16.msra.mxu0 0
        %713 = vmatprep.subr.bf16.mxu0 0
        %714 = vmatpush1.bf16.msra.mxu0 0
        %715 = vmatprep.subr.bf16.mxu0 0
        %716 = vmatpush1.bf16.msra.mxu0 0
        %717 = vmatprep.subr.bf16.mxu0 0
        %718 = vmatpush1.bf16.msra.mxu0 0
        %719 = vmatprep.subr.bf16.mxu0 0
        %720 = vmatpush1.bf16.msra.mxu0 0
        %721 = vmatprep.subr.bf16.mxu0 0
        %722 = vmatpush1.bf16.msra.mxu0 0
        %723 = vmatprep.subr.bf16.mxu0 0
        %724 = vmatpush1.bf16.msra.mxu0 0
        %725 = vmatprep.subr.bf16.mxu0 0
        %726 = vmatpush1.bf16.msra.mxu0 0
        %727 = vmatprep.subr.bf16.mxu0 0
        %728 = vmatpush1.bf16.msra.mxu0 0
        %729 = vmatprep.subr.bf16.mxu0 0
        %730 = vmatpush1.bf16.msra.mxu0 0
        %731 = vmatprep.subr.bf16.mxu0 0
        %732 = vmatpush1.bf16.msra.mxu0 0
        %733 = vmatprep.subr.bf16.mxu0 0
        %734 = vmatpush1.bf16.msra.mxu0 0
        %735 = vmatprep.subr.bf16.mxu0 0
        %736 = vmatpush1.bf16.msra.mxu0 0
        %737 = vmatprep.subr.bf16.mxu0 0
        %738 = vmatpush1.bf16.msra.mxu0 0
        %739 = vmatprep.subr.bf16.mxu0 0
        %740 = vmatpush1.bf16.msra.mxu0 0
        %741 = vmatprep.mubr.bf16.mxu0 0
        %742 = vmatmul.mubr.bf16.gmra.mrb[0].mxu0 %v698
        %v743 = vpop.f32.mrb[0].mxu0
        %v744 = vadd.f32 0.0, %v743
        %v745 = vpop.f32.mrb[0].mxu0
        %v746 = vpop.f32.mrb[0].mxu0
        %v747 = vadd.f32 0.0, %v746
        %v748 = vpop.f32.mrb[0].mxu0
        %749 = vmatprep.mubr.bf16.mxu0 0
        %750 = vmatmul.mubr.bf16.gmra.mrb[0].mxu0 %v701
        %v751 = vpop.f32.mrb[0].mxu0
        %v752 = vadd.f32 0.0, %v751
        %v753 = vpop.f32.mrb[0].mxu0
        %v754 = vpop.f32.mrb[0].mxu0
        %v755 = vadd.f32 0.0, %v754
        %v756 = vpop.f32.mrb[0].mxu0
        %757 = vmatprep.mubr.bf16.mxu0 0
        %758 = vmatmul.mubr.bf16.gmra.mrb[0].mxu0 %v704
        %v759 = vpop.f32.mrb[0].mxu0
        %v760 = vadd.f32 0.0, %v759
        %v761 = vpop.f32.mrb[0].mxu0
        %v762 = vpop.f32.mrb[0].mxu0
        %v763 = vadd.f32 0.0, %v762
        %v764 = vpop.f32.mrb[0].mxu0
        %765 = vmatprep.mubr.bf16.mxu0 0
        %766 = vmatmul.mubr.bf16.gmra.mrb[0].mxu0 %v707
        %v767 = vpop.f32.mrb[0].mxu0
        %v768 = vadd.f32 0.0, %v767
        %v769 = vpop.f32.mrb[0].mxu0
        %v770 = vpop.f32.mrb[0].mxu0
        %v771 = vadd.f32 0.0, %v770
        %v772 = vpop.f32.mrb[0].mxu0
        %773 = vdwg.mxu0
        %774 = vxpose.xlu0.b32.start [1/16] %v744, 128
        %775 = vxpose.xlu0.b32.cont [2/16] %v747, 128
        %776 = vxpose.xlu0.b32.cont [3/16] 0.0, 128
        %777 = vxpose.xlu0.b32.cont [4/16] 0.0, 128
        %778 = vxpose.xlu0.b32.cont [5/16] 0.0, 128
        %779 = vxpose.xlu0.b32.cont [6/16] 0.0, 128
        %780 = vxpose.xlu0.b32.cont [7/16] 0.0, 128
        %781 = vxpose.xlu0.b32.cont [8/16] 0.0, 128
        %782 = vxpose.xlu0.b32.cont [9/16] 0.0, 128
        %783 = vxpose.xlu0.b32.cont [10/16] 0.0, 128
        %784 = vxpose.xlu0.b32.cont [11/16] 0.0, 128
        %785 = vxpose.xlu0.b32.cont [12/16] 0.0, 128
        %786 = vxpose.xlu0.b32.cont [13/16] 0.0, 128
        %787 = vxpose.xlu0.b32.cont [14/16] 0.0, 128
        %788 = vxpose.xlu0.b32.cont [15/16] 0.0, 128
        %789 = vxpose.xlu0.b32.end [16/16] 0.0, 128
        %v790 = vpop.trf.xlu0
        %v791 = vpop.trf.xlu0
        %v792 = vpop.trf.xlu0
        %v793 = vpop.trf.xlu0
        %v794 = vpop.trf.xlu0
        %v795 = vpop.trf.xlu0
        %v796 = vpop.trf.xlu0
        %v797 = vpop.trf.xlu0
        %v798 = vpop.trf.xlu0
        %v799 = vpop.trf.xlu0
        %v800 = vpop.trf.xlu0
        %v801 = vpop.trf.xlu0
        %v802 = vpop.trf.xlu0
        %v803 = vpop.trf.xlu0
        %v804 = vpop.trf.xlu0
        %v805 = vpop.trf.xlu0
        %806 = vxpose.xlu0.b32.start [1/16] %v752, 128
        %807 = vxpose.xlu0.b32.cont [2/16] %v755, 128
        %808 = vxpose.xlu0.b32.cont [3/16] 0.0, 128
        %809 = vxpose.xlu0.b32.cont [4/16] 0.0, 128
        %810 = vxpose.xlu0.b32.cont [5/16] 0.0, 128
        %811 = vxpose.xlu0.b32.cont [6/16] 0.0, 128
        %812 = vxpose.xlu0.b32.cont [7/16] 0.0, 128
        %813 = vxpose.xlu0.b32.cont [8/16] 0.0, 128
        %814 = vxpose.xlu0.b32.cont [9/16] 0.0, 128
        %815 = vxpose.xlu0.b32.cont [10/16] 0.0, 128
        %816 = vxpose.xlu0.b32.cont [11/16] 0.0, 128
        %817 = vxpose.xlu0.b32.cont [12/16] 0.0, 128
        %818 = vxpose.xlu0.b32.cont [13/16] 0.0, 128
        %819 = vxpose.xlu0.b32.cont [14/16] 0.0, 128
        %820 = vxpose.xlu0.b32.cont [15/16] 0.0, 128
        %821 = vxpose.xlu0.b32.end [16/16] 0.0, 128
        %v822 = vpop.trf.xlu0
        %v823 = vpop.trf.xlu0
        %v824 = vpop.trf.xlu0
        %v825 = vpop.trf.xlu0
        %v826 = vpop.trf.xlu0
        %v827 = vpop.trf.xlu0
        %v828 = vpop.trf.xlu0
        %v829 = vpop.trf.xlu0
        %v830 = vpop.trf.xlu0
        %v831 = vpop.trf.xlu0
        %v832 = vpop.trf.xlu0
        %v833 = vpop.trf.xlu0
        %v834 = vpop.trf.xlu0
        %v835 = vpop.trf.xlu0
        %v836 = vpop.trf.xlu0
        %v837 = vpop.trf.xlu0
        %838 = vxpose.xlu0.b32.start [1/16] %v760, 128
        %839 = vxpose.xlu0.b32.cont [2/16] %v763, 128
        %840 = vxpose.xlu0.b32.cont [3/16] 0.0, 128
        %841 = vxpose.xlu0.b32.cont [4/16] 0.0, 128
        %842 = vxpose.xlu0.b32.cont [5/16] 0.0, 128
        %843 = vxpose.xlu0.b32.cont [6/16] 0.0, 128
        %844 = vxpose.xlu0.b32.cont [7/16] 0.0, 128
        %845 = vxpose.xlu0.b32.cont [8/16] 0.0, 128
        %846 = vxpose.xlu0.b32.cont [9/16] 0.0, 128
        %847 = vxpose.xlu0.b32.cont [10/16] 0.0, 128
        %848 = vxpose.xlu0.b32.cont [11/16] 0.0, 128
        %849 = vxpose.xlu0.b32.cont [12/16] 0.0, 128
        %850 = vxpose.xlu0.b32.cont [13/16] 0.0, 128
        %851 = vxpose.xlu0.b32.cont [14/16] 0.0, 128
        %852 = vxpose.xlu0.b32.cont [15/16] 0.0, 128
        %853 = vxpose.xlu0.b32.end [16/16] 0.0, 128
        %v854 = vpop.trf.xlu0
        %v855 = vpop.trf.xlu0
        %v856 = vpop.trf.xlu0
        %v857 = vpop.trf.xlu0
        %v858 = vpop.trf.xlu0
        %v859 = vpop.trf.xlu0
        %v860 = vpop.trf.xlu0
        %v861 = vpop.trf.xlu0
        %v862 = vpop.trf.xlu0
        %v863 = vpop.trf.xlu0
        %v864 = vpop.trf.xlu0
        %v865 = vpop.trf.xlu0
        %v866 = vpop.trf.xlu0
        %v867 = vpop.trf.xlu0
        %v868 = vpop.trf.xlu0
        %v869 = vpop.trf.xlu0
        %870 = vxpose.xlu0.b32.start [1/16] %v768, 128
        %871 = vxpose.xlu0.b32.cont [2/16] %v771, 128
        %872 = vxpose.xlu0.b32.cont [3/16] 0.0, 128
        %873 = vxpose.xlu0.b32.cont [4/16] 0.0, 128
        %874 = vxpose.xlu0.b32.cont [5/16] 0.0, 128
        %875 = vxpose.xlu0.b32.cont [6/16] 0.0, 128
        %876 = vxpose.xlu0.b32.cont [7/16] 0.0, 128
        %877 = vxpose.xlu0.b32.cont [8/16] 0.0, 128
        %878 = vxpose.xlu0.b32.cont [9/16] 0.0, 128
        %879 = vxpose.xlu0.b32.cont [10/16] 0.0, 128
        %880 = vxpose.xlu0.b32.cont [11/16] 0.0, 128
        %881 = vxpose.xlu0.b32.cont [12/16] 0.0, 128
        %882 = vxpose.xlu0.b32.cont [13/16] 0.0, 128
        %883 = vxpose.xlu0.b32.cont [14/16] 0.0, 128
        %884 = vxpose.xlu0.b32.cont [15/16] 0.0, 128
        %885 = vxpose.xlu0.b32.end [16/16] 0.0, 128
        %v886 = vpop.trf.xlu0
        %v887 = vpop.trf.xlu0
        %v888 = vpop.trf.xlu0
        %v889 = vpop.trf.xlu0
        %v890 = vpop.trf.xlu0
        %v891 = vpop.trf.xlu0
        %v892 = vpop.trf.xlu0
        %v893 = vpop.trf.xlu0
        %v894 = vpop.trf.xlu0
        %v895 = vpop.trf.xlu0
        %v896 = vpop.trf.xlu0
        %v897 = vpop.trf.xlu0
        %v898 = vpop.trf.xlu0
        %v899 = vpop.trf.xlu0
        %v900 = vpop.trf.xlu0
        %v901 = vpop.trf.xlu0
        %v902 = vpack.c.bf16 %v791, %v790
        %v903 = vpack.c.bf16 %v823, %v822
        %v904 = vpack.c.bf16 %v855, %v854
        %v905 = vpack.c.bf16 %v887, %v886
        %v907 = vsel %vm374, %v902, 0
        %v910 = vsel %vm374, %v903, 0
        %v913 = vsel %vm374, %v904, 0
        %v916 = vsel %vm374, %v905, 0
        %918 = vmatprep.subr.bf16.mxu0 0
        %919 = vmatpush1.bf16.msra.mxu0 %v588
        %920 = vmatprep.subr.bf16.mxu0 0
        %921 = vmatpush1.bf16.msra.mxu0 0
        %922 = vmatprep.subr.bf16.mxu0 0
        %923 = vmatpush1.bf16.msra.mxu0 0
        %924 = vmatprep.subr.bf16.mxu0 0
        %925 = vmatpush1.bf16.msra.mxu0 0
        %926 = vmatprep.subr.bf16.mxu0 0
        %927 = vmatpush1.bf16.msra.mxu0 0
        %928 = vmatprep.subr.bf16.mxu0 0
        %929 = vmatpush1.bf16.msra.mxu0 0
        %930 = vmatprep.subr.bf16.mxu0 0
        %931 = vmatpush1.bf16.msra.mxu0 0
        %932 = vmatprep.subr.bf16.mxu0 0
        %933 = vmatpush1.bf16.msra.mxu0 0
        %934 = vmatprep.subr.bf16.mxu0 0
        %935 = vmatpush1.bf16.msra.mxu0 0
        %936 = vmatprep.subr.bf16.mxu0 0
        %937 = vmatpush1.bf16.msra.mxu0 0
        %938 = vmatprep.subr.bf16.mxu0 0
        %939 = vmatpush1.bf16.msra.mxu0 0
        %940 = vmatprep.subr.bf16.mxu0 0
        %941 = vmatpush1.bf16.msra.mxu0 0
        %942 = vmatprep.subr.bf16.mxu0 0
        %943 = vmatpush1.bf16.msra.mxu0 0
        %944 = vmatprep.subr.bf16.mxu0 0
        %945 = vmatpush1.bf16.msra.mxu0 0
        %946 = vmatprep.subr.bf16.mxu0 0
        %947 = vmatpush1.bf16.msra.mxu0 0
        %948 = vmatprep.subr.bf16.mxu0 0
        %949 = vmatpush1.bf16.msra.mxu0 0
        %950 = vmatprep.mubr.bf16.mxu0 0
        %951 = vmatmul.mubr.bf16.gmra.mrb[0].mxu0 %v907
        %v952 = vpop.f32.mrb[0].mxu0
        %v953 = vadd.f32 0.0, %v952
        %v954 = vpop.f32.mrb[0].mxu0
        %v955 = vpop.f32.mrb[0].mxu0
        %v956 = vadd.f32 0.0, %v955
        %v957 = vpop.f32.mrb[0].mxu0
        %958 = vmatprep.mubr.bf16.mxu0 0
        %959 = vmatmul.mubr.bf16.gmra.mrb[0].mxu0 %v910
        %v960 = vpop.f32.mrb[0].mxu0
        %v961 = vadd.f32 0.0, %v960
        %v962 = vpop.f32.mrb[0].mxu0
        %v963 = vpop.f32.mrb[0].mxu0
        %v964 = vadd.f32 0.0, %v963
        %v965 = vpop.f32.mrb[0].mxu0
        %966 = vmatprep.mubr.bf16.mxu0 0
        %967 = vmatmul.mubr.bf16.gmra.mrb[0].mxu0 %v913
        %v968 = vpop.f32.mrb[0].mxu0
        %v969 = vadd.f32 0.0, %v968
        %v970 = vpop.f32.mrb[0].mxu0
        %v971 = vpop.f32.mrb[0].mxu0
        %v972 = vadd.f32 0.0, %v971
        %v973 = vpop.f32.mrb[0].mxu0
        %974 = vmatprep.mubr.bf16.mxu0 0
        %975 = vmatmul.mubr.bf16.gmra.mrb[0].mxu0 %v916
        %v976 = vpop.f32.mrb[0].mxu0
        %v977 = vadd.f32 0.0, %v976
        %v978 = vpop.f32.mrb[0].mxu0
        %v979 = vpop.f32.mrb[0].mxu0
        %v980 = vadd.f32 0.0, %v979
        %v981 = vpop.f32.mrb[0].mxu0
        %982 = vdwg.mxu0
        %v983 = vsub.f32 %v637, %v953
        %v984 = vsub.f32 %v640, %v956
        %v985 = vsub.f32 %v645, %v961
        %v986 = vsub.f32 %v648, %v964
        %v987 = vsub.f32 %v653, %v969
        %v988 = vsub.f32 %v656, %v972
        %v989 = vsub.f32 %v661, %v977
        %v990 = vsub.f32 %v664, %v980
        %v991 = vand.u32 2147483647, %v983
        %v992 = vand.u32 2147483647, %v984
        %v993 = vand.u32 2147483647, %v985
        %v994 = vand.u32 2147483647, %v986
        %v995 = vand.u32 2147483647, %v987
        %v996 = vand.u32 2147483647, %v988
        %v997 = vand.u32 2147483647, %v989
        %v998 = vand.u32 2147483647, %v990
        %v999 = vsel %vm374, %v991, 0.0
        %v1000 = vsel %vm374, %v993, 0.0
        %v1001 = vadd.f32 %v999, %v1000
        %v1002 = vsel %vm374, %v995, 0.0
        %v1003 = vadd.f32 %v1001, %v1002
        %v1004 = vsel %vm374, %v997, 0.0
        %v1005 = vadd.f32 %v1003, %v1004
        %v1006 = vsel %vm374, %v992, 0.0
        %v1007 = vsel %vm374, %v994, 0.0
        %v1008 = vadd.f32 %v1006, %v1007
        %v1009 = vsel %vm374, %v996, 0.0
        %v1010 = vadd.f32 %v1008, %v1009
        %v1011 = vsel %vm374, %v998, 0.0
        %v1012 = vadd.f32 %v1010, %v1011
        %v1013 = vadd.f32 %v667, %v1005
        %v1014 = vadd.f32 %v668, %v1012
        %1015 = vst.msk [vmem:[#allocation2] sm:$0xff] %vm374, %v1013
        %1016 = vst.msk [vmem:[#allocation2 + $0x8] sm:$0xff] %vm374, %v1014
        %v1017 = vld [vmem:[#allocation3] sm:$0xff]
        %v1018 = vld [vmem:[#allocation3 + $0x8] sm:$0xff]
        %v1019 = vld [vmem:[%s311] sm:$0xf]
        %v1020 = vld [vmem:[%s311 + $0x4] sm:$0xf]
        %v1021 = vld [vmem:[%s311 + $0x8] sm:$0xf]
        %v1022 = vld [vmem:[%s311 + $0xc] sm:$0xf]
        %v1023 = vld [vmem:[%s311 + $0x10] sm:$0xf]
        %v1024 = vld [vmem:[%s311 + $0x14] sm:$0xf]
        %v1025 = vld [vmem:[%s311 + $0x18] sm:$0xf]
        %v1026 = vld [vmem:[%s311 + $0x1c] sm:$0xf]
        %v1035 = vunpack.c.l.b16 %v1019
        %v1036 = vunpack.c.l.b16 %v1020
        %v1037 = vunpack.c.l.b16 %v1021
        %v1038 = vunpack.c.l.b16 %v1022
        %v1039 = vunpack.c.l.b16 %v1023
        %v1040 = vunpack.c.l.b16 %v1024
        %v1041 = vunpack.c.l.b16 %v1025
        %v1042 = vunpack.c.l.b16 %v1026
        %v1043 = vpack.c.b16 %v1036, %v1035
        %v1044 = vpack.c.b16 %v1038, %v1037
        %v1045 = vpack.c.b16 %v1040, %v1039
        %v1046 = vpack.c.b16 %v1042, %v1041
        %v1048 = vsel %vm374, %v1043, 0
        %v1051 = vsel %vm374, %v1044, 0
        %v1054 = vsel %vm374, %v1045, 0
        %v1057 = vsel %vm374, %v1046, 0
        %1059 = vmatprep.subr.bf16.mxu0 0
        %1060 = vmatpush1.bf16.msra.mxu0 %v372
        %1061 = vmatprep.subr.bf16.mxu0 0
        %1062 = vmatpush1.bf16.msra.mxu0 0
        %1063 = vmatprep.subr.bf16.mxu0 0
        %1064 = vmatpush1.bf16.msra.mxu0 0
        %1065 = vmatprep.subr.bf16.mxu0 0
        %1066 = vmatpush1.bf16.msra.mxu0 0
        %1067 = vmatprep.subr.bf16.mxu0 0
        %1068 = vmatpush1.bf16.msra.mxu0 0
        %1069 = vmatprep.subr.bf16.mxu0 0
        %1070 = vmatpush1.bf16.msra.mxu0 0
        %1071 = vmatprep.subr.bf16.mxu0 0
        %1072 = vmatpush1.bf16.msra.mxu0 0
        %1073 = vmatprep.subr.bf16.mxu0 0
        %1074 = vmatpush1.bf16.msra.mxu0 0
        %1075 = vmatprep.subr.bf16.mxu0 0
        %1076 = vmatpush1.bf16.msra.mxu0 0
        %1077 = vmatprep.subr.bf16.mxu0 0
        %1078 = vmatpush1.bf16.msra.mxu0 0
        %1079 = vmatprep.subr.bf16.mxu0 0
        %1080 = vmatpush1.bf16.msra.mxu0 0
        %1081 = vmatprep.subr.bf16.mxu0 0
        %1082 = vmatpush1.bf16.msra.mxu0 0
        %1083 = vmatprep.subr.bf16.mxu0 0
        %1084 = vmatpush1.bf16.msra.mxu0 0
        %1085 = vmatprep.subr.bf16.mxu0 0
        %1086 = vmatpush1.bf16.msra.mxu0 0
        %1087 = vmatprep.subr.bf16.mxu0 0
        %1088 = vmatpush1.bf16.msra.mxu0 0
        %1089 = vmatprep.subr.bf16.mxu0 0
        %1090 = vmatpush1.bf16.msra.mxu0 0
        %1091 = vmatprep.mubr.bf16.mxu0 0
        %1092 = vmatmul.mubr.bf16.gmra.mrb[0].mxu0 %v1048
        %v1093 = vpop.f32.mrb[0].mxu0
        %v1094 = vadd.f32 0.0, %v1093
        %v1095 = vpop.f32.mrb[0].mxu0
        %v1096 = vpop.f32.mrb[0].mxu0
        %v1097 = vadd.f32 0.0, %v1096
        %v1098 = vpop.f32.mrb[0].mxu0
        %1099 = vmatprep.mubr.bf16.mxu0 0
        %1100 = vmatmul.mubr.bf16.gmra.mrb[0].mxu0 %v1051
        %v1101 = vpop.f32.mrb[0].mxu0
        %v1102 = vadd.f32 0.0, %v1101
        %v1103 = vpop.f32.mrb[0].mxu0
        %v1104 = vpop.f32.mrb[0].mxu0
        %v1105 = vadd.f32 0.0, %v1104
        %v1106 = vpop.f32.mrb[0].mxu0
        %1107 = vmatprep.mubr.bf16.mxu0 0
        %1108 = vmatmul.mubr.bf16.gmra.mrb[0].mxu0 %v1054
        %v1109 = vpop.f32.mrb[0].mxu0
        %v1110 = vadd.f32 0.0, %v1109
        %v1111 = vpop.f32.mrb[0].mxu0
        %v1112 = vpop.f32.mrb[0].mxu0
        %v1113 = vadd.f32 0.0, %v1112
        %v1114 = vpop.f32.mrb[0].mxu0
        %1115 = vmatprep.mubr.bf16.mxu0 0
        %1116 = vmatmul.mubr.bf16.gmra.mrb[0].mxu0 %v1057
        %v1117 = vpop.f32.mrb[0].mxu0
        %v1118 = vadd.f32 0.0, %v1117
        %v1119 = vpop.f32.mrb[0].mxu0
        %v1120 = vpop.f32.mrb[0].mxu0
        %v1121 = vadd.f32 0.0, %v1120
        %v1122 = vpop.f32.mrb[0].mxu0
        %1123 = vdwg.mxu0
        %1124 = vxpose.xlu0.b32.start [1/16] %v1094, 128
        %1125 = vxpose.xlu0.b32.cont [2/16] %v1097, 128
        %1126 = vxpose.xlu0.b32.cont [3/16] 0.0, 128
        %1127 = vxpose.xlu0.b32.cont [4/16] 0.0, 128
        %1128 = vxpose.xlu0.b32.cont [5/16] 0.0, 128
        %1129 = vxpose.xlu0.b32.cont [6/16] 0.0, 128
        %1130 = vxpose.xlu0.b32.cont [7/16] 0.0, 128
        %1131 = vxpose.xlu0.b32.cont [8/16] 0.0, 128
        %1132 = vxpose.xlu0.b32.cont [9/16] 0.0, 128
        %1133 = vxpose.xlu0.b32.cont [10/16] 0.0, 128
        %1134 = vxpose.xlu0.b32.cont [11/16] 0.0, 128
        %1135 = vxpose.xlu0.b32.cont [12/16] 0.0, 128
        %1136 = vxpose.xlu0.b32.cont [13/16] 0.0, 128
        %1137 = vxpose.xlu0.b32.cont [14/16] 0.0, 128
        %1138 = vxpose.xlu0.b32.cont [15/16] 0.0, 128
        %1139 = vxpose.xlu0.b32.end [16/16] 0.0, 128
        %v1140 = vpop.trf.xlu0
        %v1141 = vpop.trf.xlu0
        %v1142 = vpop.trf.xlu0
        %v1143 = vpop.trf.xlu0
        %v1144 = vpop.trf.xlu0
        %v1145 = vpop.trf.xlu0
        %v1146 = vpop.trf.xlu0
        %v1147 = vpop.trf.xlu0
        %v1148 = vpop.trf.xlu0
        %v1149 = vpop.trf.xlu0
        %v1150 = vpop.trf.xlu0
        %v1151 = vpop.trf.xlu0
        %v1152 = vpop.trf.xlu0
        %v1153 = vpop.trf.xlu0
        %v1154 = vpop.trf.xlu0
        %v1155 = vpop.trf.xlu0
        %1156 = vxpose.xlu0.b32.start [1/16] %v1102, 128
        %1157 = vxpose.xlu0.b32.cont [2/16] %v1105, 128
        %1158 = vxpose.xlu0.b32.cont [3/16] 0.0, 128
        %1159 = vxpose.xlu0.b32.cont [4/16] 0.0, 128
        %1160 = vxpose.xlu0.b32.cont [5/16] 0.0, 128
        %1161 = vxpose.xlu0.b32.cont [6/16] 0.0, 128
        %1162 = vxpose.xlu0.b32.cont [7/16] 0.0, 128
        %1163 = vxpose.xlu0.b32.cont [8/16] 0.0, 128
        %1164 = vxpose.xlu0.b32.cont [9/16] 0.0, 128
        %1165 = vxpose.xlu0.b32.cont [10/16] 0.0, 128
        %1166 = vxpose.xlu0.b32.cont [11/16] 0.0, 128
        %1167 = vxpose.xlu0.b32.cont [12/16] 0.0, 128
        %1168 = vxpose.xlu0.b32.cont [13/16] 0.0, 128
        %1169 = vxpose.xlu0.b32.cont [14/16] 0.0, 128
        %1170 = vxpose.xlu0.b32.cont [15/16] 0.0, 128
        %1171 = vxpose.xlu0.b32.end [16/16] 0.0, 128
        %v1172 = vpop.trf.xlu0
        %v1173 = vpop.trf.xlu0
        %v1174 = vpop.trf.xlu0
        %v1175 = vpop.trf.xlu0
        %v1176 = vpop.trf.xlu0
        %v1177 = vpop.trf.xlu0
        %v1178 = vpop.trf.xlu0
        %v1179 = vpop.trf.xlu0
        %v1180 = vpop.trf.xlu0
        %v1181 = vpop.trf.xlu0
        %v1182 = vpop.trf.xlu0
        %v1183 = vpop.trf.xlu0
        %v1184 = vpop.trf.xlu0
        %v1185 = vpop.trf.xlu0
        %v1186 = vpop.trf.xlu0
        %v1187 = vpop.trf.xlu0
        %1188 = vxpose.xlu0.b32.start [1/16] %v1110, 128
        %1189 = vxpose.xlu0.b32.cont [2/16] %v1113, 128
        %1190 = vxpose.xlu0.b32.cont [3/16] 0.0, 128
        %1191 = vxpose.xlu0.b32.cont [4/16] 0.0, 128
        %1192 = vxpose.xlu0.b32.cont [5/16] 0.0, 128
        %1193 = vxpose.xlu0.b32.cont [6/16] 0.0, 128
        %1194 = vxpose.xlu0.b32.cont [7/16] 0.0, 128
        %1195 = vxpose.xlu0.b32.cont [8/16] 0.0, 128
        %1196 = vxpose.xlu0.b32.cont [9/16] 0.0, 128
        %1197 = vxpose.xlu0.b32.cont [10/16] 0.0, 128
        %1198 = vxpose.xlu0.b32.cont [11/16] 0.0, 128
        %1199 = vxpose.xlu0.b32.cont [12/16] 0.0, 128
        %1200 = vxpose.xlu0.b32.cont [13/16] 0.0, 128
        %1201 = vxpose.xlu0.b32.cont [14/16] 0.0, 128
        %1202 = vxpose.xlu0.b32.cont [15/16] 0.0, 128
        %1203 = vxpose.xlu0.b32.end [16/16] 0.0, 128
        %v1204 = vpop.trf.xlu0
        %v1205 = vpop.trf.xlu0
        %v1206 = vpop.trf.xlu0
        %v1207 = vpop.trf.xlu0
        %v1208 = vpop.trf.xlu0
        %v1209 = vpop.trf.xlu0
        %v1210 = vpop.trf.xlu0
        %v1211 = vpop.trf.xlu0
        %v1212 = vpop.trf.xlu0
        %v1213 = vpop.trf.xlu0
        %v1214 = vpop.trf.xlu0
        %v1215 = vpop.trf.xlu0
        %v1216 = vpop.trf.xlu0
        %v1217 = vpop.trf.xlu0
        %v1218 = vpop.trf.xlu0
        %v1219 = vpop.trf.xlu0
        %1220 = vxpose.xlu0.b32.start [1/16] %v1118, 128
        %1221 = vxpose.xlu0.b32.cont [2/16] %v1121, 128
        %1222 = vxpose.xlu0.b32.cont [3/16] 0.0, 128
        %1223 = vxpose.xlu0.b32.cont [4/16] 0.0, 128
        %1224 = vxpose.xlu0.b32.cont [5/16] 0.0, 128
        %1225 = vxpose.xlu0.b32.cont [6/16] 0.0, 128
        %1226 = vxpose.xlu0.b32.cont [7/16] 0.0, 128
        %1227 = vxpose.xlu0.b32.cont [8/16] 0.0, 128
        %1228 = vxpose.xlu0.b32.cont [9/16] 0.0, 128
        %1229 = vxpose.xlu0.b32.cont [10/16] 0.0, 128
        %1230 = vxpose.xlu0.b32.cont [11/16] 0.0, 128
        %1231 = vxpose.xlu0.b32.cont [12/16] 0.0, 128
        %1232 = vxpose.xlu0.b32.cont [13/16] 0.0, 128
        %1233 = vxpose.xlu0.b32.cont [14/16] 0.0, 128
        %1234 = vxpose.xlu0.b32.cont [15/16] 0.0, 128
        %1235 = vxpose.xlu0.b32.end [16/16] 0.0, 128
        %v1236 = vpop.trf.xlu0
        %v1237 = vpop.trf.xlu0
        %v1238 = vpop.trf.xlu0
        %v1239 = vpop.trf.xlu0
        %v1240 = vpop.trf.xlu0
        %v1241 = vpop.trf.xlu0
        %v1242 = vpop.trf.xlu0
        %v1243 = vpop.trf.xlu0
        %v1244 = vpop.trf.xlu0
        %v1245 = vpop.trf.xlu0
        %v1246 = vpop.trf.xlu0
        %v1247 = vpop.trf.xlu0
        %v1248 = vpop.trf.xlu0
        %v1249 = vpop.trf.xlu0
        %v1250 = vpop.trf.xlu0
        %v1251 = vpop.trf.xlu0
        %v1252 = vpack.c.bf16 %v1141, %v1140
        %v1253 = vpack.c.bf16 %v1173, %v1172
        %v1254 = vpack.c.bf16 %v1205, %v1204
        %v1255 = vpack.c.bf16 %v1237, %v1236
        %v1257 = vsel %vm374, %v1252, 0
        %v1260 = vsel %vm374, %v1253, 0
        %v1263 = vsel %vm374, %v1254, 0
        %v1266 = vsel %vm374, %v1255, 0
        %1268 = vmatprep.subr.bf16.mxu0 0
        %1269 = vmatpush1.bf16.msra.mxu0 %v588
        %1270 = vmatprep.subr.bf16.mxu0 0
        %1271 = vmatpush1.bf16.msra.mxu0 0
        %1272 = vmatprep.subr.bf16.mxu0 0
        %1273 = vmatpush1.bf16.msra.mxu0 0
        %1274 = vmatprep.subr.bf16.mxu0 0
        %1275 = vmatpush1.bf16.msra.mxu0 0
        %1276 = vmatprep.subr.bf16.mxu0 0
        %1277 = vmatpush1.bf16.msra.mxu0 0
        %1278 = vmatprep.subr.bf16.mxu0 0
        %1279 = vmatpush1.bf16.msra.mxu0 0
        %1280 = vmatprep.subr.bf16.mxu0 0
        %1281 = vmatpush1.bf16.msra.mxu0 0
        %1282 = vmatprep.subr.bf16.mxu0 0
        %1283 = vmatpush1.bf16.msra.mxu0 0
        %1284 = vmatprep.subr.bf16.mxu0 0
        %1285 = vmatpush1.bf16.msra.mxu0 0
        %1286 = vmatprep.subr.bf16.mxu0 0
        %1287 = vmatpush1.bf16.msra.mxu0 0
        %1288 = vmatprep.subr.bf16.mxu0 0
        %1289 = vmatpush1.bf16.msra.mxu0 0
        %1290 = vmatprep.subr.bf16.mxu0 0
        %1291 = vmatpush1.bf16.msra.mxu0 0
        %1292 = vmatprep.subr.bf16.mxu0 0
        %1293 = vmatpush1.bf16.msra.mxu0 0
        %1294 = vmatprep.subr.bf16.mxu0 0
        %1295 = vmatpush1.bf16.msra.mxu0 0
        %1296 = vmatprep.subr.bf16.mxu0 0
        %1297 = vmatpush1.bf16.msra.mxu0 0
        %1298 = vmatprep.subr.bf16.mxu0 0
        %1299 = vmatpush1.bf16.msra.mxu0 0
        %1300 = vmatprep.mubr.bf16.mxu0 0
        %1301 = vmatmul.mubr.bf16.gmra.mrb[0].mxu0 %v1257
        %v1302 = vpop.f32.mrb[0].mxu0
        %v1303 = vadd.f32 0.0, %v1302
        %v1304 = vpop.f32.mrb[0].mxu0
        %v1305 = vpop.f32.mrb[0].mxu0
        %v1306 = vadd.f32 0.0, %v1305
        %v1307 = vpop.f32.mrb[0].mxu0
        %1308 = vmatprep.mubr.bf16.mxu0 0
        %1309 = vmatmul.mubr.bf16.gmra.mrb[0].mxu0 %v1260
        %v1310 = vpop.f32.mrb[0].mxu0
        %v1311 = vadd.f32 0.0, %v1310
        %v1312 = vpop.f32.mrb[0].mxu0
        %v1313 = vpop.f32.mrb[0].mxu0
        %v1314 = vadd.f32 0.0, %v1313
        %v1315 = vpop.f32.mrb[0].mxu0
        %1316 = vmatprep.mubr.bf16.mxu0 0
        %1317 = vmatmul.mubr.bf16.gmra.mrb[0].mxu0 %v1263
        %v1318 = vpop.f32.mrb[0].mxu0
        %v1319 = vadd.f32 0.0, %v1318
        %v1320 = vpop.f32.mrb[0].mxu0
        %v1321 = vpop.f32.mrb[0].mxu0
        %v1322 = vadd.f32 0.0, %v1321
        %v1323 = vpop.f32.mrb[0].mxu0
        %1324 = vmatprep.mubr.bf16.mxu0 0
        %1325 = vmatmul.mubr.bf16.gmra.mrb[0].mxu0 %v1266
        %v1326 = vpop.f32.mrb[0].mxu0
        %v1327 = vadd.f32 0.0, %v1326
        %v1328 = vpop.f32.mrb[0].mxu0
        %v1329 = vpop.f32.mrb[0].mxu0
        %v1330 = vadd.f32 0.0, %v1329
        %v1331 = vpop.f32.mrb[0].mxu0
        %1332 = vdwg.mxu0
        %v1333 = vsub.f32 %v637, %v1303
        %v1334 = vsub.f32 %v640, %v1306
        %v1335 = vsub.f32 %v645, %v1311
        %v1336 = vsub.f32 %v648, %v1314
        %v1337 = vsub.f32 %v653, %v1319
        %v1338 = vsub.f32 %v656, %v1322
        %v1339 = vsub.f32 %v661, %v1327
        %v1340 = vsub.f32 %v664, %v1330
        %v1341 = vand.u32 2147483647, %v1333
        %v1342 = vand.u32 2147483647, %v1334
        %v1343 = vand.u32 2147483647, %v1335
        %v1344 = vand.u32 2147483647, %v1336
        %v1345 = vand.u32 2147483647, %v1337
        %v1346 = vand.u32 2147483647, %v1338
        %v1347 = vand.u32 2147483647, %v1339
        %v1348 = vand.u32 2147483647, %v1340
        %v1349 = vsel %vm374, %v1341, 0.0
        %v1350 = vsel %vm374, %v1343, 0.0
        %v1351 = vadd.f32 %v1349, %v1350
        %v1352 = vsel %vm374, %v1345, 0.0
        %v1353 = vadd.f32 %v1351, %v1352
        %v1354 = vsel %vm374, %v1347, 0.0
        %v1355 = vadd.f32 %v1353, %v1354
        %v1356 = vsel %vm374, %v1342, 0.0
        %v1357 = vsel %vm374, %v1344, 0.0
        %v1358 = vadd.f32 %v1356, %v1357
        %v1359 = vsel %vm374, %v1346, 0.0
        %v1360 = vadd.f32 %v1358, %v1359
        %v1361 = vsel %vm374, %v1348, 0.0
        %v1362 = vadd.f32 %v1360, %v1361
        %v1363 = vadd.f32 %v1017, %v1355
        %v1364 = vadd.f32 %v1018, %v1362
        %1365 = vst.msk [vmem:[#allocation3] sm:$0xff] %vm374, %v1363
        %1366 = vst.msk [vmem:[#allocation3 + $0x8] sm:$0xff] %vm374, %v1364
        %v1367 = vld [vmem:[#allocation4] sm:$0xff]
        %v1368 = vld [vmem:[#allocation4 + $0x8] sm:$0xff]
        %v1369 = vld [vmem:[%s311] sm:$0xf]
        %v1370 = vld [vmem:[%s311 + $0x4] sm:$0xf]
        %v1371 = vld [vmem:[%s311 + $0x8] sm:$0xf]
        %v1372 = vld [vmem:[%s311 + $0xc] sm:$0xf]
        %v1373 = vld [vmem:[%s311 + $0x10] sm:$0xf]
        %v1374 = vld [vmem:[%s311 + $0x14] sm:$0xf]
        %v1375 = vld [vmem:[%s311 + $0x18] sm:$0xf]
        %v1376 = vld [vmem:[%s311 + $0x1c] sm:$0xf]
        %v1385 = vunpack.c.l.b16 %v1369
        %v1386 = vunpack.c.l.b16 %v1370
        %v1387 = vunpack.c.l.b16 %v1371
        %v1388 = vunpack.c.l.b16 %v1372
        %v1389 = vunpack.c.l.b16 %v1373
        %v1390 = vunpack.c.l.b16 %v1374
        %v1391 = vunpack.c.l.b16 %v1375
        %v1392 = vunpack.c.l.b16 %v1376
        %v1393 = vpack.c.b16 %v1386, %v1385
        %v1394 = vpack.c.b16 %v1388, %v1387
        %v1395 = vpack.c.b16 %v1390, %v1389
        %v1396 = vpack.c.b16 %v1392, %v1391
        %v1399 = vunpack.c.l.b16 %v334
        %v1400 = vunpack.c.l.b16 %v335
        %v1401 = vpack.c.b16 %v1400, %v1399
        %v1404 = vsel %vm374, %v1393, 0
        %v1407 = vsel %vm374, %v1394, 0
        %v1410 = vsel %vm374, %v1395, 0
        %v1413 = vsel %vm374, %v1396, 0
        %1415 = vmatprep.subr.bf16.mxu0 0
        %1416 = vmatpush1.bf16.msra.mxu0 %v1401
        %1417 = vmatprep.subr.bf16.mxu0 0
        %1418 = vmatpush1.bf16.msra.mxu0 0
        %1419 = vmatprep.subr.bf16.mxu0 0
        %1420 = vmatpush1.bf16.msra.mxu0 0
        %1421 = vmatprep.subr.bf16.mxu0 0
        %1422 = vmatpush1.bf16.msra.mxu0 0
        %1423 = vmatprep.subr.bf16.mxu0 0
        %1424 = vmatpush1.bf16.msra.mxu0 0
        %1425 = vmatprep.subr.bf16.mxu0 0
        %1426 = vmatpush1.bf16.msra.mxu0 0
        %1427 = vmatprep.subr.bf16.mxu0 0
        %1428 = vmatpush1.bf16.msra.mxu0 0
        %1429 = vmatprep.subr.bf16.mxu0 0
        %1430 = vmatpush1.bf16.msra.mxu0 0
        %1431 = vmatprep.subr.bf16.mxu0 0
        %1432 = vmatpush1.bf16.msra.mxu0 0
        %1433 = vmatprep.subr.bf16.mxu0 0
        %1434 = vmatpush1.bf16.msra.mxu0 0
        %1435 = vmatprep.subr.bf16.mxu0 0
        %1436 = vmatpush1.bf16.msra.mxu0 0
        %1437 = vmatprep.subr.bf16.mxu0 0
        %1438 = vmatpush1.bf16.msra.mxu0 0
        %1439 = vmatprep.subr.bf16.mxu0 0
        %1440 = vmatpush1.bf16.msra.mxu0 0
        %1441 = vmatprep.subr.bf16.mxu0 0
        %1442 = vmatpush1.bf16.msra.mxu0 0
        %1443 = vmatprep.subr.bf16.mxu0 0
        %1444 = vmatpush1.bf16.msra.mxu0 0
        %1445 = vmatprep.subr.bf16.mxu0 0
        %1446 = vmatpush1.bf16.msra.mxu0 0
        %1447 = vmatprep.mubr.bf16.mxu0 0
        %1448 = vmatmul.mubr.bf16.gmra.mrb[0].mxu0 %v1404
        %v1449 = vpop.f32.mrb[0].mxu0
        %v1450 = vadd.f32 0.0, %v1449
        %v1451 = vpop.f32.mrb[0].mxu0
        %v1452 = vpop.f32.mrb[0].mxu0
        %v1453 = vadd.f32 0.0, %v1452
        %v1454 = vpop.f32.mrb[0].mxu0
        %1455 = vmatprep.mubr.bf16.mxu0 0
        %1456 = vmatmul.mubr.bf16.gmra.mrb[0].mxu0 %v1407
        %v1457 = vpop.f32.mrb[0].mxu0
        %v1458 = vadd.f32 0.0, %v1457
        %v1459 = vpop.f32.mrb[0].mxu0
        %v1460 = vpop.f32.mrb[0].mxu0
        %v1461 = vadd.f32 0.0, %v1460
        %v1462 = vpop.f32.mrb[0].mxu0
        %1463 = vmatprep.mubr.bf16.mxu0 0
        %1464 = vmatmul.mubr.bf16.gmra.mrb[0].mxu0 %v1410
        %v1465 = vpop.f32.mrb[0].mxu0
        %v1466 = vadd.f32 0.0, %v1465
        %v1467 = vpop.f32.mrb[0].mxu0
        %v1468 = vpop.f32.mrb[0].mxu0
        %v1469 = vadd.f32 0.0, %v1468
        %v1470 = vpop.f32.mrb[0].mxu0
        %1471 = vmatprep.mubr.bf16.mxu0 0
        %1472 = vmatmul.mubr.bf16.gmra.mrb[0].mxu0 %v1413
        %v1473 = vpop.f32.mrb[0].mxu0
        %v1474 = vadd.f32 0.0, %v1473
        %v1475 = vpop.f32.mrb[0].mxu0
        %v1476 = vpop.f32.mrb[0].mxu0
        %v1477 = vadd.f32 0.0, %v1476
        %v1478 = vpop.f32.mrb[0].mxu0
        %1479 = vdwg.mxu0
        %1480 = vxpose.xlu0.b32.start [1/16] %v1450, 128
        %1481 = vxpose.xlu0.b32.cont [2/16] %v1453, 128
        %1482 = vxpose.xlu0.b32.cont [3/16] 0.0, 128
        %1483 = vxpose.xlu0.b32.cont [4/16] 0.0, 128
        %1484 = vxpose.xlu0.b32.cont [5/16] 0.0, 128
        %1485 = vxpose.xlu0.b32.cont [6/16] 0.0, 128
        %1486 = vxpose.xlu0.b32.cont [7/16] 0.0, 128
        %1487 = vxpose.xlu0.b32.cont [8/16] 0.0, 128
        %1488 = vxpose.xlu0.b32.cont [9/16] 0.0, 128
        %1489 = vxpose.xlu0.b32.cont [10/16] 0.0, 128
        %1490 = vxpose.xlu0.b32.cont [11/16] 0.0, 128
        %1491 = vxpose.xlu0.b32.cont [12/16] 0.0, 128
        %1492 = vxpose.xlu0.b32.cont [13/16] 0.0, 128
        %1493 = vxpose.xlu0.b32.cont [14/16] 0.0, 128
        %1494 = vxpose.xlu0.b32.cont [15/16] 0.0, 128
        %1495 = vxpose.xlu0.b32.end [16/16] 0.0, 128
        %v1496 = vpop.trf.xlu0
        %v1497 = vpop.trf.xlu0
        %v1498 = vpop.trf.xlu0
        %v1499 = vpop.trf.xlu0
        %v1500 = vpop.trf.xlu0
        %v1501 = vpop.trf.xlu0
        %v1502 = vpop.trf.xlu0
        %v1503 = vpop.trf.xlu0
        %v1504 = vpop.trf.xlu0
        %v1505 = vpop.trf.xlu0
        %v1506 = vpop.trf.xlu0
        %v1507 = vpop.trf.xlu0
        %v1508 = vpop.trf.xlu0
        %v1509 = vpop.trf.xlu0
        %v1510 = vpop.trf.xlu0
        %v1511 = vpop.trf.xlu0
        %1512 = vxpose.xlu0.b32.start [1/16] %v1458, 128
        %1513 = vxpose.xlu0.b32.cont [2/16] %v1461, 128
        %1514 = vxpose.xlu0.b32.cont [3/16] 0.0, 128
        %1515 = vxpose.xlu0.b32.cont [4/16] 0.0, 128
        %1516 = vxpose.xlu0.b32.cont [5/16] 0.0, 128
        %1517 = vxpose.xlu0.b32.cont [6/16] 0.0, 128
        %1518 = vxpose.xlu0.b32.cont [7/16] 0.0, 128
        %1519 = vxpose.xlu0.b32.cont [8/16] 0.0, 128
        %1520 = vxpose.xlu0.b32.cont [9/16] 0.0, 128
        %1521 = vxpose.xlu0.b32.cont [10/16] 0.0, 128
        %1522 = vxpose.xlu0.b32.cont [11/16] 0.0, 128
        %1523 = vxpose.xlu0.b32.cont [12/16] 0.0, 128
        %1524 = vxpose.xlu0.b32.cont [13/16] 0.0, 128
        %1525 = vxpose.xlu0.b32.cont [14/16] 0.0, 128
        %1526 = vxpose.xlu0.b32.cont [15/16] 0.0, 128
        %1527 = vxpose.xlu0.b32.end [16/16] 0.0, 128
        %v1528 = vpop.trf.xlu0
        %v1529 = vpop.trf.xlu0
        %v1530 = vpop.trf.xlu0
        %v1531 = vpop.trf.xlu0
        %v1532 = vpop.trf.xlu0
        %v1533 = vpop.trf.xlu0
        %v1534 = vpop.trf.xlu0
        %v1535 = vpop.trf.xlu0
        %v1536 = vpop.trf.xlu0
        %v1537 = vpop.trf.xlu0
        %v1538 = vpop.trf.xlu0
        %v1539 = vpop.trf.xlu0
        %v1540 = vpop.trf.xlu0
        %v1541 = vpop.trf.xlu0
        %v1542 = vpop.trf.xlu0
        %v1543 = vpop.trf.xlu0
        %1544 = vxpose.xlu0.b32.start [1/16] %v1466, 128
        %1545 = vxpose.xlu0.b32.cont [2/16] %v1469, 128
        %1546 = vxpose.xlu0.b32.cont [3/16] 0.0, 128
        %1547 = vxpose.xlu0.b32.cont [4/16] 0.0, 128
        %1548 = vxpose.xlu0.b32.cont [5/16] 0.0, 128
        %1549 = vxpose.xlu0.b32.cont [6/16] 0.0, 128
        %1550 = vxpose.xlu0.b32.cont [7/16] 0.0, 128
        %1551 = vxpose.xlu0.b32.cont [8/16] 0.0, 128
        %1552 = vxpose.xlu0.b32.cont [9/16] 0.0, 128
        %1553 = vxpose.xlu0.b32.cont [10/16] 0.0, 128
        %1554 = vxpose.xlu0.b32.cont [11/16] 0.0, 128
        %1555 = vxpose.xlu0.b32.cont [12/16] 0.0, 128
        %1556 = vxpose.xlu0.b32.cont [13/16] 0.0, 128
        %1557 = vxpose.xlu0.b32.cont [14/16] 0.0, 128
        %1558 = vxpose.xlu0.b32.cont [15/16] 0.0, 128
        %1559 = vxpose.xlu0.b32.end [16/16] 0.0, 128
        %v1560 = vpop.trf.xlu0
        %v1561 = vpop.trf.xlu0
        %v1562 = vpop.trf.xlu0
        %v1563 = vpop.trf.xlu0
        %v1564 = vpop.trf.xlu0
        %v1565 = vpop.trf.xlu0
        %v1566 = vpop.trf.xlu0
        %v1567 = vpop.trf.xlu0
        %v1568 = vpop.trf.xlu0
        %v1569 = vpop.trf.xlu0
        %v1570 = vpop.trf.xlu0
        %v1571 = vpop.trf.xlu0
        %v1572 = vpop.trf.xlu0
        %v1573 = vpop.trf.xlu0
        %v1574 = vpop.trf.xlu0
        %v1575 = vpop.trf.xlu0
        %1576 = vxpose.xlu0.b32.start [1/16] %v1474, 128
        %1577 = vxpose.xlu0.b32.cont [2/16] %v1477, 128
        %1578 = vxpose.xlu0.b32.cont [3/16] 0.0, 128
        %1579 = vxpose.xlu0.b32.cont [4/16] 0.0, 128
        %1580 = vxpose.xlu0.b32.cont [5/16] 0.0, 128
        %1581 = vxpose.xlu0.b32.cont [6/16] 0.0, 128
        %1582 = vxpose.xlu0.b32.cont [7/16] 0.0, 128
        %1583 = vxpose.xlu0.b32.cont [8/16] 0.0, 128
        %1584 = vxpose.xlu0.b32.cont [9/16] 0.0, 128
        %1585 = vxpose.xlu0.b32.cont [10/16] 0.0, 128
        %1586 = vxpose.xlu0.b32.cont [11/16] 0.0, 128
        %1587 = vxpose.xlu0.b32.cont [12/16] 0.0, 128
        %1588 = vxpose.xlu0.b32.cont [13/16] 0.0, 128
        %1589 = vxpose.xlu0.b32.cont [14/16] 0.0, 128
        %1590 = vxpose.xlu0.b32.cont [15/16] 0.0, 128
        %1591 = vxpose.xlu0.b32.end [16/16] 0.0, 128
        %v1592 = vpop.trf.xlu0
        %v1593 = vpop.trf.xlu0
        %v1594 = vpop.trf.xlu0
        %v1595 = vpop.trf.xlu0
        %v1596 = vpop.trf.xlu0
        %v1597 = vpop.trf.xlu0
        %v1598 = vpop.trf.xlu0
        %v1599 = vpop.trf.xlu0
        %v1600 = vpop.trf.xlu0
        %v1601 = vpop.trf.xlu0
        %v1602 = vpop.trf.xlu0
        %v1603 = vpop.trf.xlu0
        %v1604 = vpop.trf.xlu0
        %v1605 = vpop.trf.xlu0
        %v1606 = vpop.trf.xlu0
        %v1607 = vpop.trf.xlu0
        %v1608 = vpack.c.bf16 %v1497, %v1496
        %v1609 = vpack.c.bf16 %v1529, %v1528
        %v1610 = vpack.c.bf16 %v1561, %v1560
        %v1611 = vpack.c.bf16 %v1593, %v1592
        %v1614 = vunpack.c.l.b16 %v338
        %v1615 = vunpack.c.l.b16 %v339
        %v1616 = vpack.c.b16 %v1615, %v1614
        %v1619 = vsel %vm374, %v1608, 0
        %v1622 = vsel %vm374, %v1609, 0
        %v1625 = vsel %vm374, %v1610, 0
        %v1628 = vsel %vm374, %v1611, 0
        %1630 = vmatprep.subr.bf16.mxu0 0
        %1631 = vmatpush1.bf16.msra.mxu0 %v1616
        %1632 = vmatprep.subr.bf16.mxu0 0
        %1633 = vmatpush1.bf16.msra.mxu0 0
        %1634 = vmatprep.subr.bf16.mxu0 0
        %1635 = vmatpush1.bf16.msra.mxu0 0
        %1636 = vmatprep.subr.bf16.mxu0 0
        %1637 = vmatpush1.bf16.msra.mxu0 0
        %1638 = vmatprep.subr.bf16.mxu0 0
        %1639 = vmatpush1.bf16.msra.mxu0 0
        %1640 = vmatprep.subr.bf16.mxu0 0
        %1641 = vmatpush1.bf16.msra.mxu0 0
        %1642 = vmatprep.subr.bf16.mxu0 0
        %1643 = vmatpush1.bf16.msra.mxu0 0
        %1644 = vmatprep.subr.bf16.mxu0 0
        %1645 = vmatpush1.bf16.msra.mxu0 0
        %1646 = vmatprep.subr.bf16.mxu0 0
        %1647 = vmatpush1.bf16.msra.mxu0 0
        %1648 = vmatprep.subr.bf16.mxu0 0
        %1649 = vmatpush1.bf16.msra.mxu0 0
        %1650 = vmatprep.subr.bf16.mxu0 0
        %1651 = vmatpush1.bf16.msra.mxu0 0
        %1652 = vmatprep.subr.bf16.mxu0 0
        %1653 = vmatpush1.bf16.msra.mxu0 0
        %1654 = vmatprep.subr.bf16.mxu0 0
        %1655 = vmatpush1.bf16.msra.mxu0 0
        %1656 = vmatprep.subr.bf16.mxu0 0
        %1657 = vmatpush1.bf16.msra.mxu0 0
        %1658 = vmatprep.subr.bf16.mxu0 0
        %1659 = vmatpush1.bf16.msra.mxu0 0
        %1660 = vmatprep.subr.bf16.mxu0 0
        %1661 = vmatpush1.bf16.msra.mxu0 0
        %1662 = vmatprep.mubr.bf16.mxu0 0
        %1663 = vmatmul.mubr.bf16.gmra.mrb[0].mxu0 %v1619
        %v1664 = vpop.f32.mrb[0].mxu0
        %v1665 = vadd.f32 0.0, %v1664
        %v1666 = vpop.f32.mrb[0].mxu0
        %v1667 = vpop.f32.mrb[0].mxu0
        %v1668 = vadd.f32 0.0, %v1667
        %v1669 = vpop.f32.mrb[0].mxu0
        %1670 = vmatprep.mubr.bf16.mxu0 0
        %1671 = vmatmul.mubr.bf16.gmra.mrb[0].mxu0 %v1622
        %v1672 = vpop.f32.mrb[0].mxu0
        %v1673 = vadd.f32 0.0, %v1672
        %v1674 = vpop.f32.mrb[0].mxu0
        %v1675 = vpop.f32.mrb[0].mxu0
        %v1676 = vadd.f32 0.0, %v1675
        %v1677 = vpop.f32.mrb[0].mxu0
        %1678 = vmatprep.mubr.bf16.mxu0 0
        %1679 = vmatmul.mubr.bf16.gmra.mrb[0].mxu0 %v1625
        %v1680 = vpop.f32.mrb[0].mxu0
        %v1681 = vadd.f32 0.0, %v1680
        %v1682 = vpop.f32.mrb[0].mxu0
        %v1683 = vpop.f32.mrb[0].mxu0
        %v1684 = vadd.f32 0.0, %v1683
        %v1685 = vpop.f32.mrb[0].mxu0
        %1686 = vmatprep.mubr.bf16.mxu0 0
        %1687 = vmatmul.mubr.bf16.gmra.mrb[0].mxu0 %v1628
        %v1688 = vpop.f32.mrb[0].mxu0
        %v1689 = vadd.f32 0.0, %v1688
        %v1690 = vpop.f32.mrb[0].mxu0
        %v1691 = vpop.f32.mrb[0].mxu0
        %v1692 = vadd.f32 0.0, %v1691
        %v1693 = vpop.f32.mrb[0].mxu0
        %1694 = vdwg.mxu0
        %v1695 = vsub.f32 %v637, %v1665
        %v1696 = vsub.f32 %v640, %v1668
        %v1697 = vsub.f32 %v645, %v1673
        %v1698 = vsub.f32 %v648, %v1676
        %v1699 = vsub.f32 %v653, %v1681
        %v1700 = vsub.f32 %v656, %v1684
        %v1701 = vsub.f32 %v661, %v1689
        %v1702 = vsub.f32 %v664, %v1692
        %v1703 = vand.u32 2147483647, %v1695
        %v1704 = vand.u32 2147483647, %v1696
        %v1705 = vand.u32 2147483647, %v1697
        %v1706 = vand.u32 2147483647, %v1698
        %v1707 = vand.u32 2147483647, %v1699
        %v1708 = vand.u32 2147483647, %v1700
        %v1709 = vand.u32 2147483647, %v1701
        %v1710 = vand.u32 2147483647, %v1702
        %v1711 = vsel %vm374, %v1703, 0.0
        %v1712 = vsel %vm374, %v1705, 0.0
        %v1713 = vadd.f32 %v1711, %v1712
        %v1714 = vsel %vm374, %v1707, 0.0
        %v1715 = vadd.f32 %v1713, %v1714
        %v1716 = vsel %vm374, %v1709, 0.0
        %v1717 = vadd.f32 %v1715, %v1716
        %v1718 = vsel %vm374, %v1704, 0.0
        %v1719 = vsel %vm374, %v1706, 0.0
        %v1720 = vadd.f32 %v1718, %v1719
        %v1721 = vsel %vm374, %v1708, 0.0
        %v1722 = vadd.f32 %v1720, %v1721
        %v1723 = vsel %vm374, %v1710, 0.0
        %v1724 = vadd.f32 %v1722, %v1723
        %v1725 = vadd.f32 %v1367, %v1717
        %v1726 = vadd.f32 %v1368, %v1724
        %1727 = vst.msk [vmem:[#allocation4] sm:$0xff] %vm374, %v1725
        %1728 = vst.msk [vmem:[#allocation4 + $0x8] sm:$0xff] %vm374, %v1726
        %p1729 = scmp.eq.s32.totalorder %s19, 1
        // Predicated region
        $region53: #{frcl_forward.1} parent=47 // pred_check
          %p1730 = pneg %p1729
        $region54: #{frcl_forward.1} parent=47 // pred_check_branch
          %1732 = sbr.rel (%p1730) target = $region56
        $region55: #{frcl_forward.1} parent=47 // pred_region
          %v1733 = vld [vmem:[#allocation2] sm:$0xff]
          %v1734 = vld [vmem:[#allocation2 + $0x8] sm:$0xff]
          %v1735 = vld [vmem:[#allocation3] sm:$0xff]
          %v1736 = vld [vmem:[#allocation3 + $0x8] sm:$0xff]
          %v1737 = vld [vmem:[#allocation4] sm:$0xff]
          %v1738 = vld [vmem:[#allocation4 + $0x8] sm:$0xff]
          %v1739 = vsel %vm374, %v1733, 0.0
          %v1740 = vsel %vm374, %v1734, 0.0
          %v1741 = vadd.f32 %v1739, %v1740
          %1742 = vadd.xlane.f32.xlu0 %v1741
          %v1743 = vpop.xlane.xlu0 %1742
          %v1744 = vrot.slane %v1743, 4
          %v1745 = vadd.f32 %v1743, %v1744
          %v1746 = vrot.slane %v1745, 2
          %v1747 = vadd.f32 %v1745, %v1746
          %v1748 = vrot.slane %v1747, 1
          %v1749 = vadd.f32 %v1747, %v1748
          %s1750 = vtos %v1749
          %s1751 = scalar_lea.smem [#allocation5], 0
          %1752 = sst [smem:[%s1751]] %s1750
          %vm1753 = vcmask 64512
          %v1754 = vsel %vm1753, %v1733, 0.0
          %1755 = vadd.xlane.f32.xlu0 %v1754
          %v1756 = vpop.xlane.xlu0 %1755
          %v1757 = vrot.slane %v1756, 4
          %v1758 = vadd.f32 %v1756, %v1757
          %v1759 = vrot.slane %v1758, 2
          %v1760 = vadd.f32 %v1758, %v1759
          %v1761 = vrot.slane %v1760, 1
          %v1762 = vadd.f32 %v1760, %v1761
          %s1763 = vtos %v1762
          %s1764 = scalar_lea.smem [#allocation5], 1
          %1765 = sst [smem:[%s1764]] %s1763
          %v1766 = vsel %vm374, %v1735, 0.0
          %v1767 = vsel %vm374, %v1736, 0.0
          %v1768 = vadd.f32 %v1766, %v1767
          %1769 = vadd.xlane.f32.xlu0 %v1768
          %v1770 = vpop.xlane.xlu0 %1769
          %v1771 = vrot.slane %v1770, 4
          %v1772 = vadd.f32 %v1770, %v1771
          %v1773 = vrot.slane %v1772, 2
          %v1774 = vadd.f32 %v1772, %v1773
          %v1775 = vrot.slane %v1774, 1
          %v1776 = vadd.f32 %v1774, %v1775
          %s1777 = vtos %v1776
          %s1778 = scalar_lea.smem [#allocation5], 2
          %1779 = sst [smem:[%s1778]] %s1777
          %v1780 = vsel %vm1753, %v1735, 0.0
          %1781 = vadd.xlane.f32.xlu0 %v1780
          %v1782 = vpop.xlane.xlu0 %1781
          %v1783 = vrot.slane %v1782, 4
          %v1784 = vadd.f32 %v1782, %v1783
          %v1785 = vrot.slane %v1784, 2
          %v1786 = vadd.f32 %v1784, %v1785
          %v1787 = vrot.slane %v1786, 1
          %v1788 = vadd.f32 %v1786, %v1787
          %s1789 = vtos %v1788
          %s1790 = scalar_lea.smem [#allocation5], 3
          %1791 = sst [smem:[%s1790]] %s1789
          %v1792 = vsel %vm374, %v1737, 0.0
          %v1793 = vsel %vm374, %v1738, 0.0
          %v1794 = vadd.f32 %v1792, %v1793
          %1795 = vadd.xlane.f32.xlu0 %v1794
          %v1796 = vpop.xlane.xlu0 %1795
          %v1797 = vrot.slane %v1796, 4
          %v1798 = vadd.f32 %v1796, %v1797
          %v1799 = vrot.slane %v1798, 2
          %v1800 = vadd.f32 %v1798, %v1799
          %v1801 = vrot.slane %v1800, 1
          %v1802 = vadd.f32 %v1800, %v1801
          %s1803 = vtos %v1802
          %s1804 = scalar_lea.smem [#allocation5], 4
          %1805 = sst [smem:[%s1804]] %s1803
          %v1806 = vsel %vm1753, %v1737, 0.0
          %1807 = vadd.xlane.f32.xlu0 %v1806
          %v1808 = vpop.xlane.xlu0 %1807
          %v1809 = vrot.slane %v1808, 4
          %v1810 = vadd.f32 %v1808, %v1809
          %v1811 = vrot.slane %v1810, 2
          %v1812 = vadd.f32 %v1810, %v1811
          %v1813 = vrot.slane %v1812, 1
          %v1814 = vadd.f32 %v1812, %v1813
          %s1815 = vtos %v1814
          %s1816 = scalar_lea.smem [#allocation5], 5
          %1817 = sst [smem:[%s1816]] %s1815
        $region56: #{frcl_forward.1} parent=47 // pred_fallthru
          _
        // Predicated region
        $region57: #{frcl_forward.1} parent=47 // pred_check
          %p1818 = pneg %p194
        $region58: #{frcl_forward.1} parent=47 // pred_check_branch
          %1820 = sbr.rel (%p1818) target = $region60
        $region59: #{frcl_forward.1} parent=47 // pred_region
          %s1822 = ssub.s32 16, 16
          %1823 = vsyncadd [#allocation6], %s1822
          %s1825 = sshll.u32 %s7, 4
          %s1826 = int_to_ptr.vmem [resolvable:$true] %s1825
          %1828 = dma.smem_to_vmem [#allocation5], 16, %s1826, [#allocation6]
        $region60: #{frcl_forward.1} parent=47 // pred_fallthru
          _
        // Predicated region
        $region61: #{frcl_forward.1} parent=47 // pred_check
          %p1829 = pneg %p194
        $region62: #{frcl_forward.1} parent=47 // pred_check_branch
          %1831 = sbr.rel (%p1829) target = $region64
        $region63: #{frcl_forward.1} parent=47 // pred_region
          %1832 = dma.done [#allocation6], 16
        $region64: #{frcl_forward.1} parent=47 // pred_fallthru
          _
        %1833 = sfence
      $region48: #{frcl_forward.1} parent=5 // pred_fallthru
        _
      %p1834 = scmp.le.s32.totalorder 2, %s14
      // Predicated region
      $region65: #{frcl_forward.1} parent=5 // pred_check
        %p1835 = pneg %p1834
      $region66: #{frcl_forward.1} parent=5 // pred_check_branch
        %1837 = sbr.rel (%p1835) target = $region68
      $region67: #{frcl_forward.1} parent=5 // pred_region
        %s1838 = ssub.s32 %s14, 2
      $region68: #{frcl_forward.1} parent=5 // pred_fallthru
        _
    $region6: #{frcl_forward.1} parent=1 // loop_footer
      %s18 = sadd.s32 1, %s14
    $region7: #{frcl_forward.1} parent=1 // loop_footer_branch
      %13 = sbr.rel target = $region3
    $region8: #{frcl_forward.1} parent=1 // loop_exit
      _
    %1839 = vsyncpa [#allocation6], 1
    %s1840 = scalar_lea.sflag [#allocation6], 1
    %1841 = vsyncpa %s1840, 1

// kernel: frcl_forward.1
$region0: #{frcl_forward.1}
  #allocation0 [shape = 'u32[]', space=smem, size = 0x4, offset = 0x4, fixed_abs, tag = 'smem constant byte address 0x4 - core index']
  #allocation1 [shape = 'u32[144,128]{1,0:T(1,128)}', space=vmem, size = 0x12000, scoped, tag = 'internal scratch']
  #allocation2 [shape = 'f32[16,16]{1,0:T(8,128)}', space=vmem, size = 0x2000, scoped, tag = 'scratch operand']
  #allocation3 [shape = 'f32[16,16]{1,0:T(8,128)}', space=vmem, size = 0x2000, scoped, tag = 'scratch operand']
  #allocation4 [shape = 'f32[16,16]{1,0:T(8,128)}', space=vmem, size = 0x2000, scoped, tag = 'scratch operand']
  %s0 = inlined_call_operand.vmem [shape: bf16[8,16,16], index: 0, kind: input, shape index: {}]
  %s1 = inlined_call_operand.vmem [shape: bf16[8,16,16], index: 1, kind: input, shape index: {}]
  %s2 = inlined_call_operand.vmem [shape: bf16[8,16,16], index: 2, kind: input, shape index: {}]
  %s3 = inlined_call_operand.vmem [shape: bf16[16,16], index: 3, kind: input, shape index: {}]
  %s4 = inlined_call_operand.vmem [shape: bf16[16,16], index: 4, kind: input, shape index: {}]
  %s5 = inlined_call_operand.vmem [shape: bf16[16,16], index: 5, kind: input, shape index: {}]
  %s6 = inlined_call_operand.vmem [shape: bf16[16,16], index: 6, kind: input, shape index: {}]
  %s7 = inlined_call_operand.vmem [shape: f32[6], index: 7, kind: output, shape index: {}]
  %s8 = sld [smem:[#allocation0]]
  $region69: #{frcl_forward.1} parent=0
    _
  %s10 = ssub.s32 1, %s8
  %s11 = scalar_select 0, %s10, %s8
  $region1: #{frcl_forward.1} parent=0
    #allocation5 [shape = 'u8[512]{0}', space=smem, size = 0x200, scoped, tag = 'output window, operand 0, single buffered']
    #allocation6 [shape = 's32[2]{0}', space=sflag, size = 0x8, scoped, tag = 'scoped memory for frcl_forward.1']
    %12 = vsyncpa [#allocation6], 0
    loop: start=0, step=1, limit=4
    $region2: #{frcl_forward.1} parent=1 // loop_pre_header
      _
    $region3: #{frcl_forward.1} parent=1 // loop_header
      %s14 = sphi 0, %s18
      %p15 = scmp.ge.s32.totalorder %s14, 4
      %s24 = sphi 0, %s26
      %s27 = sphi 0, %s24
      %s28 = sphi 0, %s27
      %s44 = sphi 0, %s28
      %s50 = sphi 0, %s52
      %s53 = sphi 0, %s50
      %s54 = sphi 0, %s53
      %s70 = sphi 0, %s54
      %s76 = sphi 0, %s78
      %s79 = sphi 0, %s76
      %s80 = sphi 0, %s79
      %s96 = sphi 0, %s80
      %s100 = sphi 0, %s100
      %s102 = sphi 0, %s100
      %s103 = sphi 0, %s102
      %s117 = sphi 0, %s103
      %s121 = sphi 0, %s121
      %s123 = sphi 0, %s121
      %s124 = sphi 0, %s123
      %s138 = sphi 0, %s124
      %s142 = sphi 0, %s142
      %s144 = sphi 0, %s142
      %s145 = sphi 0, %s144
      %s159 = sphi 0, %s145
      %s163 = sphi 0, %s163
      %s165 = sphi 0, %s163
      %s166 = sphi 0, %s165
      %s180 = sphi 0, %s166
      %s184 = sphi 0, %s184
      %s186 = sphi 0, %s184
      %s187 = sphi 0, %s186
      %s201 = sphi 0, %s187
    $region4: #{frcl_forward.1} parent=1 // loop_header_branch
      %17 = sbr.rel (%p15) target = $region8
    $region5: #{frcl_forward.1} parent=1 // loop_body
      %s19 = ssub.s32 %s14, 1
      %s20 = ssub.s32 %s14, 2
      %s21 = sadd.s32 %s14, 1
      %s22 = ssub.s32 %s14, %s21
      %p23 = scmp.eq.s32.totalorder %s22, 0
      %s25 = sadd.s32 %s24, 1
      %s26 = scalar_select %p23, %s24, %s25
      %p29 = pneg %p23
      %p30 = scmp.eq.s32.totalorder %s14, 1
      %p31 = por %p29, %p30
      %p32 = scmp.ne.s32.totalorder %s24, %s27
      %p33 = scmp.eq.s32.totalorder %s14, 0
      %p34 = por %p32, %p33
      %p35 = scmp.ne.s32.totalorder %s24, %s27
      %p36 = scmp.eq.s32.totalorder %s19, 1
      %p37 = por %p35, %p36
      %p38 = scmp.ne.s32.totalorder %s27, %s28
      %p39 = scmp.eq.s32.totalorder %s19, 0
      %p40 = por %p38, %p39
      %p41 = scmp.ne.s32.totalorder %s27, %s28
      %p42 = scmp.eq.s32.totalorder %s20, 1
      %p43 = por %p41, %p42
      %p45 = scmp.ne.s32.totalorder %s28, %s44
      %p46 = scmp.eq.s32.totalorder %s20, 0
      %p47 = por %p45, %p46
      %s48 = ssub.s32 %s14, %s21
      %p49 = scmp.eq.s32.totalorder %s48, 0
      %s51 = sadd.s32 %s50, 1
      %s52 = scalar_select %p49, %s50, %s51
      %p55 = pneg %p49
      %p56 = scmp.eq.s32.totalorder %s14, 1
      %p57 = por %p55, %p56
      %p58 = scmp.ne.s32.totalorder %s50, %s53
      %p59 = scmp.eq.s32.totalorder %s14, 0
      %p60 = por %p58, %p59
      %p61 = scmp.ne.s32.totalorder %s50, %s53
      %p62 = scmp.eq.s32.totalorder %s19, 1
      %p63 = por %p61, %p62
      %p64 = scmp.ne.s32.totalorder %s53, %s54
      %p65 = scmp.eq.s32.totalorder %s19, 0
      %p66 = por %p64, %p65
      %p67 = scmp.ne.s32.totalorder %s53, %s54
      %p68 = scmp.eq.s32.totalorder %s20, 1
      %p69 = por %p67, %p68
      %p71 = scmp.ne.s32.totalorder %s54, %s70
      %p72 = scmp.eq.s32.totalorder %s20, 0
      %p73 = por %p71, %p72
      %s74 = ssub.s32 %s14, %s21
      %p75 = scmp.eq.s32.totalorder %s74, 0
      %s77 = sadd.s32 %s76, 1
      %s78 = scalar_select %p75, %s76, %s77
      %p81 = pneg %p75
      %p82 = scmp.eq.s32.totalorder %s14, 1
      %p83 = por %p81, %p82
      %p84 = scmp.ne.s32.totalorder %s76, %s79
      %p85 = scmp.eq.s32.totalorder %s14, 0
      %p86 = por %p84, %p85
      %p87 = scmp.ne.s32.totalorder %s76, %s79
      %p88 = scmp.eq.s32.totalorder %s19, 1
      %p89 = por %p87, %p88
      %p90 = scmp.ne.s32.totalorder %s79, %s80
      %p91 = scmp.eq.s32.totalorder %s19, 0
      %p92 = por %p90, %p91
      %p93 = scmp.ne.s32.totalorder %s79, %s80
      %p94 = scmp.eq.s32.totalorder %s20, 1
      %p95 = por %p93, %p94
      %p97 = scmp.ne.s32.totalorder %s80, %s96
      %p98 = scmp.eq.s32.totalorder %s20, 0
      %p99 = por %p97, %p98
      %s101 = sadd.s32 %s100, 1
      %p104 = scmp.eq.s32.totalorder %s14, 1
      %p105 = scmp.ne.s32.totalorder %s100, %s102
      %p106 = scmp.eq.s32.totalorder %s14, 0
      %p107 = por %p105, %p106
      %p108 = scmp.ne.s32.totalorder %s100, %s102
      %p109 = scmp.eq.s32.totalorder %s19, 1
      %p110 = por %p108, %p109
      %p111 = scmp.ne.s32.totalorder %s102, %s103
      %p112 = scmp.eq.s32.totalorder %s19, 0
      %p113 = por %p111, %p112
      %p114 = scmp.ne.s32.totalorder %s102, %s103
      %p115 = scmp.eq.s32.totalorder %s20, 1
      %p116 = por %p114, %p115
      %p118 = scmp.ne.s32.totalorder %s103, %s117
      %p119 = scmp.eq.s32.totalorder %s20, 0
      %p120 = por %p118, %p119
      %s122 = sadd.s32 %s121, 1
      %p125 = scmp.eq.s32.totalorder %s14, 1
      %p126 = scmp.ne.s32.totalorder %s121, %s123
      %p127 = scmp.eq.s32.totalorder %s14, 0
      %p128 = por %p126, %p127
      %p129 = scmp.ne.s32.totalorder %s121, %s123
      %p130 = scmp.eq.s32.totalorder %s19, 1
      %p131 = por %p129, %p130
      %p132 = scmp.ne.s32.totalorder %s123, %s124
      %p133 = scmp.eq.s32.totalorder %s19, 0
      %p134 = por %p132, %p133
      %p135 = scmp.ne.s32.totalorder %s123, %s124
      %p136 = scmp.eq.s32.totalorder %s20, 1
      %p137 = por %p135, %p136
      %p139 = scmp.ne.s32.totalorder %s124, %s138
      %p140 = scmp.eq.s32.totalorder %s20, 0
      %p141 = por %p139, %p140
      %s143 = sadd.s32 %s142, 1
      %p146 = scmp.eq.s32.totalorder %s14, 1
      %p147 = scmp.ne.s32.totalorder %s142, %s144
      %p148 = scmp.eq.s32.totalorder %s14, 0
      %p149 = por %p147, %p148
      %p150 = scmp.ne.s32.totalorder %s142, %s144
      %p151 = scmp.eq.s32.totalorder %s19, 1
      %p152 = por %p150, %p151
      %p153 = scmp.ne.s32.totalorder %s144, %s145
      %p154 = scmp.eq.s32.totalorder %s19, 0
      %p155 = por %p153, %p154
      %p156 = scmp.ne.s32.totalorder %s144, %s145
      %p157 = scmp.eq.s32.totalorder %s20, 1
      %p158 = por %p156, %p157
      %p160 = scmp.ne.s32.totalorder %s145, %s159
      %p161 = scmp.eq.s32.totalorder %s20, 0
      %p162 = por %p160, %p161
      %s164 = sadd.s32 %s163, 1
      %p167 = scmp.eq.s32.totalorder %s14, 1
      %p168 = scmp.ne.s32.totalorder %s163, %s165
      %p169 = scmp.eq.s32.totalorder %s14, 0
      %p170 = por %p168, %p169
      %p171 = scmp.ne.s32.totalorder %s163, %s165
      %p172 = scmp.eq.s32.totalorder %s19, 1
      %p173 = por %p171, %p172
      %p174 = scmp.ne.s32.totalorder %s165, %s166
      %p175 = scmp.eq.s32.totalorder %s19, 0
      %p176 = por %p174, %p175
      %p177 = scmp.ne.s32.totalorder %s165, %s166
      %p178 = scmp.eq.s32.totalorder %s20, 1
      %p179 = por %p177, %p178
      %p181 = scmp.ne.s32.totalorder %s166, %s180
      %p182 = scmp.eq.s32.totalorder %s20, 0
      %p183 = por %p181, %p182
      %s185 = sadd.s32 %s184, 1
      %p188 = scmp.eq.s32.totalorder %s14, 1
      %p189 = scmp.ne.s32.totalorder %s184, %s186
      %p190 = scmp.eq.s32.totalorder %s14, 0
      %p191 = por %p189, %p190
      %p192 = scmp.ne.s32.totalorder %s184, %s186
      %p193 = scmp.eq.s32.totalorder %s19, 1
      %p194 = por %p192, %p193
      %p195 = scmp.ne.s32.totalorder %s186, %s187
      %p196 = scmp.eq.s32.totalorder %s19, 0
      %p197 = por %p195, %p196
      %p198 = scmp.ne.s32.totalorder %s186, %s187
      %p199 = scmp.eq.s32.totalorder %s20, 1
      %p200 = por %p198, %p199
      %p202 = scmp.ne.s32.totalorder %s187, %s201
      %p203 = scmp.eq.s32.totalorder %s20, 0
      %p204 = por %p202, %p203
      %p205 = scmp.le.s32.totalorder 1, %s14
      %p206 = scmp.lt.s32.totalorder %s14, 3
      %p207 = pnand %p205, %p206
      %p208 = pneg %p207
      // Predicated region
      $region9: #{frcl_forward.1} parent=5 // pred_check
        _
      $region10: #{frcl_forward.1} parent=5 // pred_check_branch
        %210 = sbr.rel (%p207) target = $region12
      $region11: #{frcl_forward.1} parent=5 // pred_region
        %s211 = ssub.s32 %s14, 1
        // Predicated region
        $region13: #{frcl_forward.1} parent=11 // pred_check
          %p212 = pneg %p113
        $region14: #{frcl_forward.1} parent=11 // pred_check_branch
          %214 = sbr.rel (%p212) target = $region16
        $region15: #{frcl_forward.1} parent=11 // pred_region
          _
        $region16: #{frcl_forward.1} parent=11 // pred_fallthru
          _
        // Predicated region
        $region17: #{frcl_forward.1} parent=11 // pred_check
          %p215 = pneg %p134
        $region18: #{frcl_forward.1} parent=11 // pred_check_branch
          %217 = sbr.rel (%p215) target = $region20
        $region19: #{frcl_forward.1} parent=11 // pred_region
          _
        $region20: #{frcl_forward.1} parent=11 // pred_fallthru
          _
        // Predicated region
        $region21: #{frcl_forward.1} parent=11 // pred_check
          %p218 = pneg %p155
        $region22: #{frcl_forward.1} parent=11 // pred_check_branch
          %220 = sbr.rel (%p218) target = $region24
        $region23: #{frcl_forward.1} parent=11 // pred_region
          _
        $region24: #{frcl_forward.1} parent=11 // pred_fallthru
          _
        // Predicated region
        $region25: #{frcl_forward.1} parent=11 // pred_check
          %p221 = pneg %p176
        $region26: #{frcl_forward.1} parent=11 // pred_check_branch
          %223 = sbr.rel (%p221) target = $region28
        $region27: #{frcl_forward.1} parent=11 // pred_region
          _
        $region28: #{frcl_forward.1} parent=11 // pred_fallthru
          _
      $region12: #{frcl_forward.1} parent=5 // pred_fallthru
        _
      %p224 = scmp.lt.s32.totalorder %s14, 2
      // Predicated region
      $region29: #{frcl_forward.1} parent=5 // pred_check
        %p225 = pneg %p224
      $region30: #{frcl_forward.1} parent=5 // pred_check_branch
        %227 = sbr.rel (%p225) target = $region32
      $region31: #{frcl_forward.1} parent=5 // pred_region
        // Predicated region
        $region33: #{frcl_forward.1} parent=31 // pred_check
          %p228 = pneg %p34
        $region34: #{frcl_forward.1} parent=31 // pred_check_branch
          %230 = sbr.rel (%p228) target = $region36
        $region35: #{frcl_forward.1} parent=31 // pred_region
          %s231 = smul.u32 4, %s14
          %p232 = scmp.lt.s32.totalorder %s231, 7
          %s233 = scalar_select %p232, %s231, 7
          %s234 = smul.addr %s233, 2
          %s235 = smul.addr %s234, 4
          %s236 = scalar_lea.vmem %s0, %s235
          %s237 = smul.u32 4, %s14
        $region36: #{frcl_forward.1} parent=31 // pred_fallthru
          _
        // Predicated region
        $region37: #{frcl_forward.1} parent=31 // pred_check
          %p238 = pneg %p60
        $region38: #{frcl_forward.1} parent=31 // pred_check_branch
          %240 = sbr.rel (%p238) target = $region40
        $region39: #{frcl_forward.1} parent=31 // pred_region
          %s241 = smul.u32 4, %s14
          %p242 = scmp.lt.s32.totalorder %s241, 7
          %s243 = scalar_select %p242, %s241, 7
          %s244 = smul.addr %s243, 2
          %s245 = smul.addr %s244, 4
          %s246 = scalar_lea.vmem %s1, %s245
          %s247 = smul.u32 4, %s14
        $region40: #{frcl_forward.1} parent=31 // pred_fallthru
          _
        // Predicated region
        $region41: #{frcl_forward.1} parent=31 // pred_check
          %p248 = pneg %p86
        $region42: #{frcl_forward.1} parent=31 // pred_check_branch
          %250 = sbr.rel (%p248) target = $region44
        $region43: #{frcl_forward.1} parent=31 // pred_region
          %s251 = smul.u32 4, %s14
          %p252 = scmp.lt.s32.totalorder %s251, 7
          %s253 = scalar_select %p252, %s251, 7
          %s254 = smul.addr %s253, 2
          %s255 = smul.addr %s254, 4
          %s256 = scalar_lea.vmem %s2, %s255
          %s257 = smul.u32 4, %s14
        $region44: #{frcl_forward.1} parent=31 // pred_fallthru
          _
      $region32: #{frcl_forward.1} parent=5 // pred_fallthru
        _
      %p258 = scmp.le.s32.totalorder 1, %s14
      %p259 = scmp.lt.s32.totalorder %s14, 3
      %p260 = pnand %p258, %p259
      %p261 = pneg %p260
      // Predicated region
      $region45: #{frcl_forward.1} parent=5 // pred_check
        _
      $region46: #{frcl_forward.1} parent=5 // pred_check_branch
        %263 = sbr.rel (%p260) target = $region48
      $region47: #{frcl_forward.1} parent=5 // pred_region
        %s264 = ssub.s32 %s14, 1
        %s265 = smul.u32 4, %s19
        %p266 = scmp.lt.s32.totalorder %s265, 7
        %s267 = scalar_select %p266, %s265, 7
        %s268 = smul.addr %s267, 2
        %s269 = smul.addr %s268, 4
        %s270 = scalar_lea.vmem %s0, %s269
        %p271 = pneg %p40
        %p272 = pneg %p37
        %s273 = smul.u32 4, %s19
        %p274 = scmp.lt.s32.totalorder %s273, 7
        %s275 = scalar_select %p274, %s273, 7
        %s276 = smul.addr %s275, 2
        %s277 = smul.addr %s276, 4
        %s278 = scalar_lea.vmem %s1, %s277
        %p279 = pneg %p66
        %p280 = pneg %p63
        %s281 = smul.u32 4, %s19
        %p282 = scmp.lt.s32.totalorder %s281, 7
        %s283 = scalar_select %p282, %s281, 7
        %s284 = smul.addr %s283, 2
        %s285 = smul.addr %s284, 4
        %s286 = scalar_lea.vmem %s2, %s285
        %p287 = pneg %p92
        %p288 = pneg %p89
        %p289 = pneg %p113
        %p290 = pneg %p110
        %p291 = pneg %p134
        %p292 = pneg %p131
        %p293 = pneg %p155
        %p294 = pneg %p152
        %p295 = pneg %p176
        %p296 = pneg %p173
        %p297 = pneg %p197
        %p298 = pneg %p194
        %s299 = smul.u32 4, %s19
        %p300 = scmp.lt.s32.totalorder %s299, 7
        %s301 = scalar_select %p300, %s299, 7
        %s302 = smul.addr %s301, 2
        %s303 = smul.addr %s302, 4
        %s304 = scalar_lea.vmem %s0, %s303
        %s305 = smul.u32 4, %s19
        %s306 = smul.u32 4, %s19
        %p307 = scmp.lt.s32.totalorder %s306, 7
        %s308 = scalar_select %p307, %s306, 7
        %s309 = smul.addr %s308, 2
        %s310 = smul.addr %s309, 4
        %s311 = scalar_lea.vmem %s1, %s310
        %s312 = smul.u32 4, %s19
        %s313 = smul.u32 4, %s19
        %p314 = scmp.lt.s32.totalorder %s313, 7
        %s315 = scalar_select %p314, %s313, 7
        %s316 = smul.addr %s315, 2
        %s317 = smul.addr %s316, 4
        %s318 = scalar_lea.vmem %s2, %s317
        %s319 = smul.u32 4, %s19
        %p321 = scmp.eq.s32.totalorder %s19, 0
        // Predicated region
        $region49: #{frcl_forward.1} parent=47 // pred_check
          %p322 = pneg %p321
        $region50: #{frcl_forward.1} parent=47 // pred_check_branch
          %324 = sbr.rel (%p322) target = $region52
        $region51: #{frcl_forward.1} parent=47 // pred_region
          %vm325 = vcmask 130048
          %326 = vst.msk [vmem:[#allocation2] sm:$0xff] %vm325, 0.0
          %327 = vst.msk [vmem:[#allocation2 + $0x8] sm:$0xff] %vm325, 0.0
          %328 = vst.msk [vmem:[#allocation3] sm:$0xff] %vm325, 0.0
          %329 = vst.msk [vmem:[#allocation3 + $0x8] sm:$0xff] %vm325, 0.0
          %330 = vst.msk [vmem:[#allocation4] sm:$0xff] %vm325, 0.0
          %331 = vst.msk [vmem:[#allocation4 + $0x8] sm:$0xff] %vm325, 0.0
        $region52: #{frcl_forward.1} parent=47 // pred_fallthru
          _
        %v332 = vld [vmem:[%s3] sm:$0xf]
        %v333 = vld [vmem:[%s3 + $0x4] sm:$0xf]
        %v334 = vld [vmem:[%s4] sm:$0xf]
        %v335 = vld [vmem:[%s4 + $0x4] sm:$0xf]
        %v336 = vld [vmem:[%s5] sm:$0xf]
        %v337 = vld [vmem:[%s5 + $0x4] sm:$0xf]
        %v338 = vld [vmem:[%s6] sm:$0xf]
        %v339 = vld [vmem:[%s6 + $0x4] sm:$0xf]
        %v340 = vld [vmem:[%s318] sm:$0xf]
        %v341 = vld [vmem:[%s318 + $0x4] sm:$0xf]
        %v342 = vld [vmem:[%s318 + $0x8] sm:$0xf]
        %v343 = vld [vmem:[%s318 + $0xc] sm:$0xf]
        %v344 = vld [vmem:[%s318 + $0x10] sm:$0xf]
        %v345 = vld [vmem:[%s318 + $0x14] sm:$0xf]
        %v346 = vld [vmem:[%s318 + $0x18] sm:$0xf]
        %v347 = vld [vmem:[%s318 + $0x1c] sm:$0xf]
        %v356 = vunpack.c.l.b16 %v340
        %v357 = vunpack.c.l.b16 %v341
        %v358 = vunpack.c.l.b16 %v342
        %v359 = vunpack.c.l.b16 %v343
        %v360 = vunpack.c.l.b16 %v344
        %v361 = vunpack.c.l.b16 %v345
        %v362 = vunpack.c.l.b16 %v346
        %v363 = vunpack.c.l.b16 %v347
        %v364 = vpack.c.b16 %v357, %v356
        %v365 = vpack.c.b16 %v359, %v358
        %v366 = vpack.c.b16 %v361, %v360
        %v367 = vpack.c.b16 %v363, %v362
        %v370 = vunpack.c.l.b16 %v332
        %v371 = vunpack.c.l.b16 %v333
        %v372 = vpack.c.b16 %v371, %v370
        %vm374 = vcmask 130048
        %v376 = vsel %vm374, %v364, 0
        %v379 = vsel %vm374, %v365, 0
        %v382 = vsel %vm374, %v366, 0
        %v385 = vsel %vm374, %v367, 0
        %387 = vmatprep.subr.bf16.mxu0 0
        %388 = vmatpush1.bf16.msra.mxu0 %v372
        %389 = vmatprep.subr.bf16.mxu0 0
        %390 = vmatpush1.bf16.msra.mxu0 0
        %391 = vmatprep.subr.bf16.mxu0 0
        %392 = vmatpush1.bf16.msra.mxu0 0
        %393 = vmatprep.subr.bf16.mxu0 0
        %394 = vmatpush1.bf16.msra.mxu0 0
        %395 = vmatprep.subr.bf16.mxu0 0
        %396 = vmatpush1.bf16.msra.mxu0 0
        %397 = vmatprep.subr.bf16.mxu0 0
        %398 = vmatpush1.bf16.msra.mxu0 0
        %399 = vmatprep.subr.bf16.mxu0 0
        %400 = vmatpush1.bf16.msra.mxu0 0
        %401 = vmatprep.subr.bf16.mxu0 0
        %402 = vmatpush1.bf16.msra.mxu0 0
        %403 = vmatprep.subr.bf16.mxu0 0
        %404 = vmatpush1.bf16.msra.mxu0 0
        %405 = vmatprep.subr.bf16.mxu0 0
        %406 = vmatpush1.bf16.msra.mxu0 0
        %407 = vmatprep.subr.bf16.mxu0 0
        %408 = vmatpush1.bf16.msra.mxu0 0
        %409 = vmatprep.subr.bf16.mxu0 0
        %410 = vmatpush1.bf16.msra.mxu0 0
        %411 = vmatprep.subr.bf16.mxu0 0
        %412 = vmatpush1.bf16.msra.mxu0 0
        %413 = vmatprep.subr.bf16.mxu0 0
        %414 = vmatpush1.bf16.msra.mxu0 0
        %415 = vmatprep.subr.bf16.mxu0 0
        %416 = vmatpush1.bf16.msra.mxu0 0
        %417 = vmatprep.subr.bf16.mxu0 0
        %418 = vmatpush1.bf16.msra.mxu0 0
        %419 = vmatprep.mubr.bf16.mxu0 0
        %420 = vmatmul.mubr.bf16.gmra.mrb[0].mxu0 %v376
        %v421 = vpop.f32.mrb[0].mxu0
        %v422 = vadd.f32 0.0, %v421
        %v423 = vpop.f32.mrb[0].mxu0
        %v424 = vpop.f32.mrb[0].mxu0
        %v425 = vadd.f32 0.0, %v424
        %v426 = vpop.f32.mrb[0].mxu0
        %427 = vmatprep.mubr.bf16.mxu0 0
        %428 = vmatmul.mubr.bf16.gmra.mrb[0].mxu0 %v379
        %v429 = vpop.f32.mrb[0].mxu0
        %v430 = vadd.f32 0.0, %v429
        %v431 = vpop.f32.mrb[0].mxu0
        %v432 = vpop.f32.mrb[0].mxu0
        %v433 = vadd.f32 0.0, %v432
        %v434 = vpop.f32.mrb[0].mxu0
        %435 = vmatprep.mubr.bf16.mxu0 0
        %436 = vmatmul.mubr.bf16.gmra.mrb[0].mxu0 %v382
        %v437 = vpop.f32.mrb[0].mxu0
        %v438 = vadd.f32 0.0, %v437
        %v439 = vpop.f32.mrb[0].mxu0
        %v440 = vpop.f32.mrb[0].mxu0
        %v441 = vadd.f32 0.0, %v440
        %v442 = vpop.f32.mrb[0].mxu0
        %443 = vmatprep.mubr.bf16.mxu0 0
        %444 = vmatmul.mubr.bf16.gmra.mrb[0].mxu0 %v385
        %v445 = vpop.f32.mrb[0].mxu0
        %v446 = vadd.f32 0.0, %v445
        %v447 = vpop.f32.mrb[0].mxu0
        %v448 = vpop.f32.mrb[0].mxu0
        %v449 = vadd.f32 0.0, %v448
        %v450 = vpop.f32.mrb[0].mxu0
        %451 = vdwg.mxu0
        %v452 = vpack.c.bf16 %v425, %v422
        %v453 = vpack.c.bf16 %v433, %v430
        %v454 = vpack.c.bf16 %v441, %v438
        %v455 = vpack.c.bf16 %v449, %v446
        %v458 = vunpack.c.l.b16 %v336
        %v459 = vunpack.c.l.b16 %v337
        %v460 = vpack.c.b16 %v459, %v458
        %v462 = vsel %vm374, %v460, 0
        %464 = vmatprep.subr.bf16.mxu0 0
        %465 = vmatpush1.bf16.msra.mxu0 %v452
        %466 = vmatprep.subr.bf16.mxu0 0
        %467 = vmatpush1.bf16.msra.mxu0 0
        %468 = vmatprep.subr.bf16.mxu0 0
        %469 = vmatpush1.bf16.msra.mxu0 0
        %470 = vmatprep.subr.bf16.mxu0 0
        %471 = vmatpush1.bf16.msra.mxu0 0
        %472 = vmatprep.subr.bf16.mxu0 0
        %473 = vmatpush1.bf16.msra.mxu0 0
        %474 = vmatprep.subr.bf16.mxu0 0
        %475 = vmatpush1.bf16.msra.mxu0 0
        %476 = vmatprep.subr.bf16.mxu0 0
        %477 = vmatpush1.bf16.msra.mxu0 0
        %478 = vmatprep.subr.bf16.mxu0 0
        %479 = vmatpush1.bf16.msra.mxu0 0
        %480 = vmatprep.subr.bf16.mxu0 0
        %481 = vmatpush1.bf16.msra.mxu0 0
        %482 = vmatprep.subr.bf16.mxu0 0
        %483 = vmatpush1.bf16.msra.mxu0 0
        %484 = vmatprep.subr.bf16.mxu0 0
        %485 = vmatpush1.bf16.msra.mxu0 0
        %486 = vmatprep.subr.bf16.mxu0 0
        %487 = vmatpush1.bf16.msra.mxu0 0
        %488 = vmatprep.subr.bf16.mxu0 0
        %489 = vmatpush1.bf16.msra.mxu0 0
        %490 = vmatprep.subr.bf16.mxu0 0
        %491 = vmatpush1.bf16.msra.mxu0 0
        %492 = vmatprep.subr.bf16.mxu0 0
        %493 = vmatpush1.bf16.msra.mxu0 0
        %494 = vmatprep.subr.bf16.mxu0 0
        %495 = vmatpush1.bf16.msra.mxu0 0
        %496 = vmatprep.mubr.bf16.mxu0 0
        %497 = vmatmul.mubr.bf16.gmra.mrb[0].mxu0 %v462
        %v498 = vpop.f32.mrb[0].mxu0
        %v499 = vadd.f32 0.0, %v498
        %v500 = vpop.f32.mrb[0].mxu0
        %v501 = vpop.f32.mrb[0].mxu0
        %v502 = vadd.f32 0.0, %v501
        %v503 = vpop.f32.mrb[0].mxu0
        %504 = vdwg.mxu0
        %505 = vmatprep.subr.bf16.mxu0 0
        %506 = vmatpush1.bf16.msra.mxu0 %v453
        %507 = vmatprep.subr.bf16.mxu0 0
        %508 = vmatpush1.bf16.msra.mxu0 0
        %509 = vmatprep.subr.bf16.mxu0 0
        %510 = vmatpush1.bf16.msra.mxu0 0
        %511 = vmatprep.subr.bf16.mxu0 0
        %512 = vmatpush1.bf16.msra.mxu0 0
        %513 = vmatprep.subr.bf16.mxu0 0
        %514 = vmatpush1.bf16.msra.mxu0 0
        %515 = vmatprep.subr.bf16.mxu0 0
        %516 = vmatpush1.bf16.msra.mxu0 0
        %517 = vmatprep.subr.bf16.mxu0 0
        %518 = vmatpush1.bf16.msra.mxu0 0
        %519 = vmatprep.subr.bf16.mxu0 0
        %520 = vmatpush1.bf16.msra.mxu0 0
        %521 = vmatprep.subr.bf16.mxu0 0
        %522 = vmatpush1.bf16.msra.mxu0 0
        %523 = vmatprep.subr.bf16.mxu0 0
        %524 = vmatpush1.bf16.msra.mxu0 0
        %525 = vmatprep.subr.bf16.mxu0 0
        %526 = vmatpush1.bf16.msra.mxu0 0
        %527 = vmatprep.subr.bf16.mxu0 0
        %528 = vmatpush1.bf16.msra.mxu0 0
        %529 = vmatprep.subr.bf16.mxu0 0
        %530 = vmatpush1.bf16.msra.mxu0 0
        %531 = vmatprep.subr.bf16.mxu0 0
        %532 = vmatpush1.bf16.msra.mxu0 0
        %533 = vmatprep.subr.bf16.mxu0 0
        %534 = vmatpush1.bf16.msra.mxu0 0
        %535 = vmatprep.subr.bf16.mxu0 0
        %536 = vmatpush1.bf16.msra.mxu0 0
        %537 = vmatprep.mubr.bf16.mxu0 0
        %538 = vmatmul.mubr.bf16.gmra.mrb[0].mxu0 %v462
        %v539 = vpop.f32.mrb[0].mxu0
        %v540 = vadd.f32 0.0, %v539
        %v541 = vpop.f32.mrb[0].mxu0
        %v542 = vpop.f32.mrb[0].mxu0
        %v543 = vadd.f32 0.0, %v542
        %v544 = vpop.f32.mrb[0].mxu0
        %545 = vdwg.mxu0
        %546 = vmatprep.subr.bf16.mxu0 0
        %547 = vmatpush1.bf16.msra.mxu0 %v454
        %548 = vmatprep.subr.bf16.mxu0 0
        %549 = vmatpush1.bf16.msra.mxu0 0
        %550 = vmatprep.subr.bf16.mxu0 0
        %551 = vmatpush1.bf16.msra.mxu0 0
        %552 = vmatprep.subr.bf16.mxu0 0
        %553 = vmatpush1.bf16.msra.mxu0 0
        %554 = vmatprep.subr.bf16.mxu0 0
        %555 = vmatpush1.bf16.msra.mxu0 0
        %556 = vmatprep.subr.bf16.mxu0 0
        %557 = vmatpush1.bf16.msra.mxu0 0
        %558 = vmatprep.subr.bf16.mxu0 0
        %559 = vmatpush1.bf16.msra.mxu0 0
        %560 = vmatprep.subr.bf16.mxu0 0
        %561 = vmatpush1.bf16.msra.mxu0 0
        %562 = vmatprep.subr.bf16.mxu0 0
        %563 = vmatpush1.bf16.msra.mxu0 0
        %564 = vmatprep.subr.bf16.mxu0 0
        %565 = vmatpush1.bf16.msra.mxu0 0
        %566 = vmatprep.subr.bf16.mxu0 0
        %567 = vmatpush1.bf16.msra.mxu0 0
        %568 = vmatprep.subr.bf16.mxu0 0
        %569 = vmatpush1.bf16.msra.mxu0 0
        %570 = vmatprep.subr.bf16.mxu0 0
        %571 = vmatpush1.bf16.msra.mxu0 0
        %572 = vmatprep.subr.bf16.mxu0 0
        %573 = vmatpush1.bf16.msra.mxu0 0
        %574 = vmatprep.subr.bf16.mxu0 0
        %575 = vmatpush1.bf16.msra.mxu0 0
        %576 = vmatprep.subr.bf16.mxu0 0
        %577 = vmatpush1.bf16.msra.mxu0 0
        %578 = vmatprep.mubr.bf16.mxu0 0
        %579 = vmatmul.mubr.bf16.gmra.mrb[0].mxu0 %v462
        %v580 = vpop.f32.mrb[0].mxu0
        %v581 = vadd.f32 0.0, %v580
        %v582 = vpop.f32.mrb[0].mxu0
        %v583 = vpop.f32.mrb[0].mxu0
        %v584 = vadd.f32 0.0, %v583
        %v585 = vpop.f32.mrb[0].mxu0
        %586 = vdwg.mxu0
        %587 = vmatprep.subr.bf16.mxu0 0
        %588 = vmatpush1.bf16.msra.mxu0 %v455
        %589 = vmatprep.subr.bf16.mxu0 0
        %590 = vmatpush1.bf16.msra.mxu0 0
        %591 = vmatprep.subr.bf16.mxu0 0
        %592 = vmatpush1.bf16.msra.mxu0 0
        %593 = vmatprep.subr.bf16.mxu0 0
        %594 = vmatpush1.bf16.msra.mxu0 0
        %595 = vmatprep.subr.bf16.mxu0 0
        %596 = vmatpush1.bf16.msra.mxu0 0
        %597 = vmatprep.subr.bf16.mxu0 0
        %598 = vmatpush1.bf16.msra.mxu0 0
        %599 = vmatprep.subr.bf16.mxu0 0
        %600 = vmatpush1.bf16.msra.mxu0 0
        %601 = vmatprep.subr.bf16.mxu0 0
        %602 = vmatpush1.bf16.msra.mxu0 0
        %603 = vmatprep.subr.bf16.mxu0 0
        %604 = vmatpush1.bf16.msra.mxu0 0
        %605 = vmatprep.subr.bf16.mxu0 0
        %606 = vmatpush1.bf16.msra.mxu0 0
        %607 = vmatprep.subr.bf16.mxu0 0
        %608 = vmatpush1.bf16.msra.mxu0 0
        %609 = vmatprep.subr.bf16.mxu0 0
        %610 = vmatpush1.bf16.msra.mxu0 0
        %611 = vmatprep.subr.bf16.mxu0 0
        %612 = vmatpush1.bf16.msra.mxu0 0
        %613 = vmatprep.subr.bf16.mxu0 0
        %614 = vmatpush1.bf16.msra.mxu0 0
        %615 = vmatprep.subr.bf16.mxu0 0
        %616 = vmatpush1.bf16.msra.mxu0 0
        %617 = vmatprep.subr.bf16.mxu0 0
        %618 = vmatpush1.bf16.msra.mxu0 0
        %619 = vmatprep.mubr.bf16.mxu0 0
        %620 = vmatmul.mubr.bf16.gmra.mrb[0].mxu0 %v462
        %v621 = vpop.f32.mrb[0].mxu0
        %v622 = vadd.f32 0.0, %v621
        %v623 = vpop.f32.mrb[0].mxu0
        %v624 = vpop.f32.mrb[0].mxu0
        %v625 = vadd.f32 0.0, %v624
        %v626 = vpop.f32.mrb[0].mxu0
        %627 = vdwg.mxu0
        %v628 = vld [vmem:[#allocation2] sm:$0xff]
        %v629 = vld [vmem:[#allocation2 + $0x8] sm:$0xff]
        %v630 = vld [vmem:[%s304] sm:$0xf]
        %v631 = vld [vmem:[%s304 + $0x4] sm:$0xf]
        %v632 = vld [vmem:[%s304 + $0x8] sm:$0xf]
        %v633 = vld [vmem:[%s304 + $0xc] sm:$0xf]
        %v634 = vld [vmem:[%s304 + $0x10] sm:$0xf]
        %v635 = vld [vmem:[%s304 + $0x14] sm:$0xf]
        %v636 = vld [vmem:[%s304 + $0x18] sm:$0xf]
        %v637 = vld [vmem:[%s304 + $0x1c] sm:$0xf]
        %v646 = vunpack.c.l.b16 %v630
        %v647 = vunpack.c.l.b16 %v631
        %v648 = vunpack.c.l.b16 %v632
        %v649 = vunpack.c.l.b16 %v633
        %v650 = vunpack.c.l.b16 %v634
        %v651 = vunpack.c.l.b16 %v635
        %v652 = vunpack.c.l.b16 %v636
        %v653 = vunpack.c.l.b16 %v637
        %v654 = vpack.c.b16 %v647, %v646
        %v655 = vpack.c.b16 %v649, %v648
        %v656 = vpack.c.b16 %v651, %v650
        %v657 = vpack.c.b16 %v653, %v652
        %v659 = vsel %vm374, %v654, 0
        %v662 = vsel %vm374, %v655, 0
        %v665 = vsel %vm374, %v656, 0
        %v668 = vsel %vm374, %v657, 0
        %670 = vmatprep.subr.bf16.mxu0 0
        %671 = vmatpush1.bf16.msra.mxu0 %v372
        %672 = vmatprep.subr.bf16.mxu0 0
        %673 = vmatpush1.bf16.msra.mxu0 0
        %674 = vmatprep.subr.bf16.mxu0 0
        %675 = vmatpush1.bf16.msra.mxu0 0
        %676 = vmatprep.subr.bf16.mxu0 0
        %677 = vmatpush1.bf16.msra.mxu0 0
        %678 = vmatprep.subr.bf16.mxu0 0
        %679 = vmatpush1.bf16.msra.mxu0 0
        %680 = vmatprep.subr.bf16.mxu0 0
        %681 = vmatpush1.bf16.msra.mxu0 0
        %682 = vmatprep.subr.bf16.mxu0 0
        %683 = vmatpush1.bf16.msra.mxu0 0
        %684 = vmatprep.subr.bf16.mxu0 0
        %685 = vmatpush1.bf16.msra.mxu0 0
        %686 = vmatprep.subr.bf16.mxu0 0
        %687 = vmatpush1.bf16.msra.mxu0 0
        %688 = vmatprep.subr.bf16.mxu0 0
        %689 = vmatpush1.bf16.msra.mxu0 0
        %690 = vmatprep.subr.bf16.mxu0 0
        %691 = vmatpush1.bf16.msra.mxu0 0
        %692 = vmatprep.subr.bf16.mxu0 0
        %693 = vmatpush1.bf16.msra.mxu0 0
        %694 = vmatprep.subr.bf16.mxu0 0
        %695 = vmatpush1.bf16.msra.mxu0 0
        %696 = vmatprep.subr.bf16.mxu0 0
        %697 = vmatpush1.bf16.msra.mxu0 0
        %698 = vmatprep.subr.bf16.mxu0 0
        %699 = vmatpush1.bf16.msra.mxu0 0
        %700 = vmatprep.subr.bf16.mxu0 0
        %701 = vmatpush1.bf16.msra.mxu0 0
        %702 = vmatprep.mubr.bf16.mxu0 0
        %703 = vmatmul.mubr.bf16.gmra.mrb[0].mxu0 %v659
        %v704 = vpop.f32.mrb[0].mxu0
        %v705 = vadd.f32 0.0, %v704
        %v706 = vpop.f32.mrb[0].mxu0
        %v707 = vpop.f32.mrb[0].mxu0
        %v708 = vadd.f32 0.0, %v707
        %v709 = vpop.f32.mrb[0].mxu0
        %710 = vmatprep.mubr.bf16.mxu0 0
        %711 = vmatmul.mubr.bf16.gmra.mrb[0].mxu0 %v662
        %v712 = vpop.f32.mrb[0].mxu0
        %v713 = vadd.f32 0.0, %v712
        %v714 = vpop.f32.mrb[0].mxu0
        %v715 = vpop.f32.mrb[0].mxu0
        %v716 = vadd.f32 0.0, %v715
        %v717 = vpop.f32.mrb[0].mxu0
        %718 = vmatprep.mubr.bf16.mxu0 0
        %719 = vmatmul.mubr.bf16.gmra.mrb[0].mxu0 %v665
        %v720 = vpop.f32.mrb[0].mxu0
        %v721 = vadd.f32 0.0, %v720
        %v722 = vpop.f32.mrb[0].mxu0
        %v723 = vpop.f32.mrb[0].mxu0
        %v724 = vadd.f32 0.0, %v723
        %v725 = vpop.f32.mrb[0].mxu0
        %726 = vmatprep.mubr.bf16.mxu0 0
        %727 = vmatmul.mubr.bf16.gmra.mrb[0].mxu0 %v668
        %v728 = vpop.f32.mrb[0].mxu0
        %v729 = vadd.f32 0.0, %v728
        %v730 = vpop.f32.mrb[0].mxu0
        %v731 = vpop.f32.mrb[0].mxu0
        %v732 = vadd.f32 0.0, %v731
        %v733 = vpop.f32.mrb[0].mxu0
        %734 = vdwg.mxu0
        %v735 = vpack.c.bf16 %v708, %v705
        %v736 = vpack.c.bf16 %v716, %v713
        %v737 = vpack.c.bf16 %v724, %v721
        %v738 = vpack.c.bf16 %v732, %v729
        %739 = vmatprep.subr.bf16.mxu0 0
        %740 = vmatpush1.bf16.msra.mxu0 %v735
        %741 = vmatprep.subr.bf16.mxu0 0
        %742 = vmatpush1.bf16.msra.mxu0 0
        %743 = vmatprep.subr.bf16.mxu0 0
        %744 = vmatpush1.bf16.msra.mxu0 0
        %745 = vmatprep.subr.bf16.mxu0 0
        %746 = vmatpush1.bf16.msra.mxu0 0
        %747 = vmatprep.subr.bf16.mxu0 0
        %748 = vmatpush1.bf16.msra.mxu0 0
        %749 = vmatprep.subr.bf16.mxu0 0
        %750 = vmatpush1.bf16.msra.mxu0 0
        %751 = vmatprep.subr.bf16.mxu0 0
        %752 = vmatpush1.bf16.msra.mxu0 0
        %753 = vmatprep.subr.bf16.mxu0 0
        %754 = vmatpush1.bf16.msra.mxu0 0
        %755 = vmatprep.subr.bf16.mxu0 0
        %756 = vmatpush1.bf16.msra.mxu0 0
        %757 = vmatprep.subr.bf16.mxu0 0
        %758 = vmatpush1.bf16.msra.mxu0 0
        %759 = vmatprep.subr.bf16.mxu0 0
        %760 = vmatpush1.bf16.msra.mxu0 0
        %761 = vmatprep.subr.bf16.mxu0 0
        %762 = vmatpush1.bf16.msra.mxu0 0
        %763 = vmatprep.subr.bf16.mxu0 0
        %764 = vmatpush1.bf16.msra.mxu0 0
        %765 = vmatprep.subr.bf16.mxu0 0
        %766 = vmatpush1.bf16.msra.mxu0 0
        %767 = vmatprep.subr.bf16.mxu0 0
        %768 = vmatpush1.bf16.msra.mxu0 0
        %769 = vmatprep.subr.bf16.mxu0 0
        %770 = vmatpush1.bf16.msra.mxu0 0
        %771 = vmatprep.mubr.bf16.mxu0 0
        %772 = vmatmul.mubr.bf16.gmra.mrb[0].mxu0 %v462
        %v773 = vpop.f32.mrb[0].mxu0
        %v774 = vadd.f32 0.0, %v773
        %v775 = vpop.f32.mrb[0].mxu0
        %v776 = vpop.f32.mrb[0].mxu0
        %v777 = vadd.f32 0.0, %v776
        %v778 = vpop.f32.mrb[0].mxu0
        %779 = vdwg.mxu0
        %780 = vmatprep.subr.bf16.mxu0 0
        %781 = vmatpush1.bf16.msra.mxu0 %v736
        %782 = vmatprep.subr.bf16.mxu0 0
        %783 = vmatpush1.bf16.msra.mxu0 0
        %784 = vmatprep.subr.bf16.mxu0 0
        %785 = vmatpush1.bf16.msra.mxu0 0
        %786 = vmatprep.subr.bf16.mxu0 0
        %787 = vmatpush1.bf16.msra.mxu0 0
        %788 = vmatprep.subr.bf16.mxu0 0
        %789 = vmatpush1.bf16.msra.mxu0 0
        %790 = vmatprep.subr.bf16.mxu0 0
        %791 = vmatpush1.bf16.msra.mxu0 0
        %792 = vmatprep.subr.bf16.mxu0 0
        %793 = vmatpush1.bf16.msra.mxu0 0
        %794 = vmatprep.subr.bf16.mxu0 0
        %795 = vmatpush1.bf16.msra.mxu0 0
        %796 = vmatprep.subr.bf16.mxu0 0
        %797 = vmatpush1.bf16.msra.mxu0 0
        %798 = vmatprep.subr.bf16.mxu0 0
        %799 = vmatpush1.bf16.msra.mxu0 0
        %800 = vmatprep.subr.bf16.mxu0 0
        %801 = vmatpush1.bf16.msra.mxu0 0
        %802 = vmatprep.subr.bf16.mxu0 0
        %803 = vmatpush1.bf16.msra.mxu0 0
        %804 = vmatprep.subr.bf16.mxu0 0
        %805 = vmatpush1.bf16.msra.mxu0 0
        %806 = vmatprep.subr.bf16.mxu0 0
        %807 = vmatpush1.bf16.msra.mxu0 0
        %808 = vmatprep.subr.bf16.mxu0 0
        %809 = vmatpush1.bf16.msra.mxu0 0
        %810 = vmatprep.subr.bf16.mxu0 0
        %811 = vmatpush1.bf16.msra.mxu0 0
        %812 = vmatprep.mubr.bf16.mxu0 0
        %813 = vmatmul.mubr.bf16.gmra.mrb[0].mxu0 %v462
        %v814 = vpop.f32.mrb[0].mxu0
        %v815 = vadd.f32 0.0, %v814
        %v816 = vpop.f32.mrb[0].mxu0
        %v817 = vpop.f32.mrb[0].mxu0
        %v818 = vadd.f32 0.0, %v817
        %v819 = vpop.f32.mrb[0].mxu0
        %820 = vdwg.mxu0
        %821 = vmatprep.subr.bf16.mxu0 0
        %822 = vmatpush1.bf16.msra.mxu0 %v737
        %823 = vmatprep.subr.bf16.mxu0 0
        %824 = vmatpush1.bf16.msra.mxu0 0
        %825 = vmatprep.subr.bf16.mxu0 0
        %826 = vmatpush1.bf16.msra.mxu0 0
        %827 = vmatprep.subr.bf16.mxu0 0
        %828 = vmatpush1.bf16.msra.mxu0 0
        %829 = vmatprep.subr.bf16.mxu0 0
        %830 = vmatpush1.bf16.msra.mxu0 0
        %831 = vmatprep.subr.bf16.mxu0 0
        %832 = vmatpush1.bf16.msra.mxu0 0
        %833 = vmatprep.subr.bf16.mxu0 0
        %834 = vmatpush1.bf16.msra.mxu0 0
        %835 = vmatprep.subr.bf16.mxu0 0
        %836 = vmatpush1.bf16.msra.mxu0 0
        %837 = vmatprep.subr.bf16.mxu0 0
        %838 = vmatpush1.bf16.msra.mxu0 0
        %839 = vmatprep.subr.bf16.mxu0 0
        %840 = vmatpush1.bf16.msra.mxu0 0
        %841 = vmatprep.subr.bf16.mxu0 0
        %842 = vmatpush1.bf16.msra.mxu0 0
        %843 = vmatprep.subr.bf16.mxu0 0
        %844 = vmatpush1.bf16.msra.mxu0 0
        %845 = vmatprep.subr.bf16.mxu0 0
        %846 = vmatpush1.bf16.msra.mxu0 0
        %847 = vmatprep.subr.bf16.mxu0 0
        %848 = vmatpush1.bf16.msra.mxu0 0
        %849 = vmatprep.subr.bf16.mxu0 0
        %850 = vmatpush1.bf16.msra.mxu0 0
        %851 = vmatprep.subr.bf16.mxu0 0
        %852 = vmatpush1.bf16.msra.mxu0 0
        %853 = vmatprep.mubr.bf16.mxu0 0
        %854 = vmatmul.mubr.bf16.gmra.mrb[0].mxu0 %v462
        %v855 = vpop.f32.mrb[0].mxu0
        %v856 = vadd.f32 0.0, %v855
        %v857 = vpop.f32.mrb[0].mxu0
        %v858 = vpop.f32.mrb[0].mxu0
        %v859 = vadd.f32 0.0, %v858
        %v860 = vpop.f32.mrb[0].mxu0
        %861 = vdwg.mxu0
        %862 = vmatprep.subr.bf16.mxu0 0
        %863 = vmatpush1.bf16.msra.mxu0 %v738
        %864 = vmatprep.subr.bf16.mxu0 0
        %865 = vmatpush1.bf16.msra.mxu0 0
        %866 = vmatprep.subr.bf16.mxu0 0
        %867 = vmatpush1.bf16.msra.mxu0 0
        %868 = vmatprep.subr.bf16.mxu0 0
        %869 = vmatpush1.bf16.msra.mxu0 0
        %870 = vmatprep.subr.bf16.mxu0 0
        %871 = vmatpush1.bf16.msra.mxu0 0
        %872 = vmatprep.subr.bf16.mxu0 0
        %873 = vmatpush1.bf16.msra.mxu0 0
        %874 = vmatprep.subr.bf16.mxu0 0
        %875 = vmatpush1.bf16.msra.mxu0 0
        %876 = vmatprep.subr.bf16.mxu0 0
        %877 = vmatpush1.bf16.msra.mxu0 0
        %878 = vmatprep.subr.bf16.mxu0 0
        %879 = vmatpush1.bf16.msra.mxu0 0
        %880 = vmatprep.subr.bf16.mxu0 0
        %881 = vmatpush1.bf16.msra.mxu0 0
        %882 = vmatprep.subr.bf16.mxu0 0
        %883 = vmatpush1.bf16.msra.mxu0 0
        %884 = vmatprep.subr.bf16.mxu0 0
        %885 = vmatpush1.bf16.msra.mxu0 0
        %886 = vmatprep.subr.bf16.mxu0 0
        %887 = vmatpush1.bf16.msra.mxu0 0
        %888 = vmatprep.subr.bf16.mxu0 0
        %889 = vmatpush1.bf16.msra.mxu0 0
        %890 = vmatprep.subr.bf16.mxu0 0
        %891 = vmatpush1.bf16.msra.mxu0 0
        %892 = vmatprep.subr.bf16.mxu0 0
        %893 = vmatpush1.bf16.msra.mxu0 0
        %894 = vmatprep.mubr.bf16.mxu0 0
        %895 = vmatmul.mubr.bf16.gmra.mrb[0].mxu0 %v462
        %v896 = vpop.f32.mrb[0].mxu0
        %v897 = vadd.f32 0.0, %v896
        %v898 = vpop.f32.mrb[0].mxu0
        %v899 = vpop.f32.mrb[0].mxu0
        %v900 = vadd.f32 0.0, %v899
        %v901 = vpop.f32.mrb[0].mxu0
        %902 = vdwg.mxu0
        %v903 = vsub.f32 %v499, %v774
        %v904 = vsub.f32 %v502, %v777
        %v905 = vsub.f32 %v540, %v815
        %v906 = vsub.f32 %v543, %v818
        %v907 = vsub.f32 %v581, %v856
        %v908 = vsub.f32 %v584, %v859
        %v909 = vsub.f32 %v622, %v897
        %v910 = vsub.f32 %v625, %v900
        %v911 = vand.u32 2147483647, %v903
        %v912 = vand.u32 2147483647, %v904
        %v913 = vand.u32 2147483647, %v905
        %v914 = vand.u32 2147483647, %v906
        %v915 = vand.u32 2147483647, %v907
        %v916 = vand.u32 2147483647, %v908
        %v917 = vand.u32 2147483647, %v909
        %v918 = vand.u32 2147483647, %v910
        %v919 = vsel %vm374, %v911, 0.0
        %v920 = vsel %vm374, %v913, 0.0
        %v921 = vadd.f32 %v919, %v920
        %v922 = vsel %vm374, %v915, 0.0
        %v923 = vadd.f32 %v921, %v922
        %v924 = vsel %vm374, %v917, 0.0
        %v925 = vadd.f32 %v923, %v924
        %v926 = vsel %vm374, %v912, 0.0
        %v927 = vsel %vm374, %v914, 0.0
        %v928 = vadd.f32 %v926, %v927
        %v929 = vsel %vm374, %v916, 0.0
        %v930 = vadd.f32 %v928, %v929
        %v931 = vsel %vm374, %v918, 0.0
        %v932 = vadd.f32 %v930, %v931
        %v933 = vadd.f32 %v628, %v925
        %v934 = vadd.f32 %v629, %v932
        %935 = vst.msk [vmem:[#allocation2] sm:$0xff] %vm374, %v933
        %936 = vst.msk [vmem:[#allocation2 + $0x8] sm:$0xff] %vm374, %v934
        %v937 = vld [vmem:[#allocation3] sm:$0xff]
        %v938 = vld [vmem:[#allocation3 + $0x8] sm:$0xff]
        %v939 = vld [vmem:[%s311] sm:$0xf]
        %v940 = vld [vmem:[%s311 + $0x4] sm:$0xf]
        %v941 = vld [vmem:[%s311 + $0x8] sm:$0xf]
        %v942 = vld [vmem:[%s311 + $0xc] sm:$0xf]
        %v943 = vld [vmem:[%s311 + $0x10] sm:$0xf]
        %v944 = vld [vmem:[%s311 + $0x14] sm:$0xf]
        %v945 = vld [vmem:[%s311 + $0x18] sm:$0xf]
        %v946 = vld [vmem:[%s311 + $0x1c] sm:$0xf]
        %v955 = vunpack.c.l.b16 %v939
        %v956 = vunpack.c.l.b16 %v940
        %v957 = vunpack.c.l.b16 %v941
        %v958 = vunpack.c.l.b16 %v942
        %v959 = vunpack.c.l.b16 %v943
        %v960 = vunpack.c.l.b16 %v944
        %v961 = vunpack.c.l.b16 %v945
        %v962 = vunpack.c.l.b16 %v946
        %v963 = vpack.c.b16 %v956, %v955
        %v964 = vpack.c.b16 %v958, %v957
        %v965 = vpack.c.b16 %v960, %v959
        %v966 = vpack.c.b16 %v962, %v961
        %v968 = vsel %vm374, %v963, 0
        %v971 = vsel %vm374, %v964, 0
        %v974 = vsel %vm374, %v965, 0
        %v977 = vsel %vm374, %v966, 0
        %979 = vmatprep.subr.bf16.mxu0 0
        %980 = vmatpush1.bf16.msra.mxu0 %v372
        %981 = vmatprep.subr.bf16.mxu0 0
        %982 = vmatpush1.bf16.msra.mxu0 0
        %983 = vmatprep.subr.bf16.mxu0 0
        %984 = vmatpush1.bf16.msra.mxu0 0
        %985 = vmatprep.subr.bf16.mxu0 0
        %986 = vmatpush1.bf16.msra.mxu0 0
        %987 = vmatprep.subr.bf16.mxu0 0
        %988 = vmatpush1.bf16.msra.mxu0 0
        %989 = vmatprep.subr.bf16.mxu0 0
        %990 = vmatpush1.bf16.msra.mxu0 0
        %991 = vmatprep.subr.bf16.mxu0 0
        %992 = vmatpush1.bf16.msra.mxu0 0
        %993 = vmatprep.subr.bf16.mxu0 0
        %994 = vmatpush1.bf16.msra.mxu0 0
        %995 = vmatprep.subr.bf16.mxu0 0
        %996 = vmatpush1.bf16.msra.mxu0 0
        %997 = vmatprep.subr.bf16.mxu0 0
        %998 = vmatpush1.bf16.msra.mxu0 0
        %999 = vmatprep.subr.bf16.mxu0 0
        %1000 = vmatpush1.bf16.msra.mxu0 0
        %1001 = vmatprep.subr.bf16.mxu0 0
        %1002 = vmatpush1.bf16.msra.mxu0 0
        %1003 = vmatprep.subr.bf16.mxu0 0
        %1004 = vmatpush1.bf16.msra.mxu0 0
        %1005 = vmatprep.subr.bf16.mxu0 0
        %1006 = vmatpush1.bf16.msra.mxu0 0
        %1007 = vmatprep.subr.bf16.mxu0 0
        %1008 = vmatpush1.bf16.msra.mxu0 0
        %1009 = vmatprep.subr.bf16.mxu0 0
        %1010 = vmatpush1.bf16.msra.mxu0 0
        %1011 = vmatprep.mubr.bf16.mxu0 0
        %1012 = vmatmul.mubr.bf16.gmra.mrb[0].mxu0 %v968
        %v1013 = vpop.f32.mrb[0].mxu0
        %v1014 = vadd.f32 0.0, %v1013
        %v1015 = vpop.f32.mrb[0].mxu0
        %v1016 = vpop.f32.mrb[0].mxu0
        %v1017 = vadd.f32 0.0, %v1016
        %v1018 = vpop.f32.mrb[0].mxu0
        %1019 = vmatprep.mubr.bf16.mxu0 0
        %1020 = vmatmul.mubr.bf16.gmra.mrb[0].mxu0 %v971
        %v1021 = vpop.f32.mrb[0].mxu0
        %v1022 = vadd.f32 0.0, %v1021
        %v1023 = vpop.f32.mrb[0].mxu0
        %v1024 = vpop.f32.mrb[0].mxu0
        %v1025 = vadd.f32 0.0, %v1024
        %v1026 = vpop.f32.mrb[0].mxu0
        %1027 = vmatprep.mubr.bf16.mxu0 0
        %1028 = vmatmul.mubr.bf16.gmra.mrb[0].mxu0 %v974
        %v1029 = vpop.f32.mrb[0].mxu0
        %v1030 = vadd.f32 0.0, %v1029
        %v1031 = vpop.f32.mrb[0].mxu0
        %v1032 = vpop.f32.mrb[0].mxu0
        %v1033 = vadd.f32 0.0, %v1032
        %v1034 = vpop.f32.mrb[0].mxu0
        %1035 = vmatprep.mubr.bf16.mxu0 0
        %1036 = vmatmul.mubr.bf16.gmra.mrb[0].mxu0 %v977
        %v1037 = vpop.f32.mrb[0].mxu0
        %v1038 = vadd.f32 0.0, %v1037
        %v1039 = vpop.f32.mrb[0].mxu0
        %v1040 = vpop.f32.mrb[0].mxu0
        %v1041 = vadd.f32 0.0, %v1040
        %v1042 = vpop.f32.mrb[0].mxu0
        %1043 = vdwg.mxu0
        %v1044 = vpack.c.bf16 %v1017, %v1014
        %v1045 = vpack.c.bf16 %v1025, %v1022
        %v1046 = vpack.c.bf16 %v1033, %v1030
        %v1047 = vpack.c.bf16 %v1041, %v1038
        %1048 = vmatprep.subr.bf16.mxu0 0
        %1049 = vmatpush1.bf16.msra.mxu0 %v1044
        %1050 = vmatprep.subr.bf16.mxu0 0
        %1051 = vmatpush1.bf16.msra.mxu0 0
        %1052 = vmatprep.subr.bf16.mxu0 0
        %1053 = vmatpush1.bf16.msra.mxu0 0
        %1054 = vmatprep.subr.bf16.mxu0 0
        %1055 = vmatpush1.bf16.msra.mxu0 0
        %1056 = vmatprep.subr.bf16.mxu0 0
        %1057 = vmatpush1.bf16.msra.mxu0 0
        %1058 = vmatprep.subr.bf16.mxu0 0
        %1059 = vmatpush1.bf16.msra.mxu0 0
        %1060 = vmatprep.subr.bf16.mxu0 0
        %1061 = vmatpush1.bf16.msra.mxu0 0
        %1062 = vmatprep.subr.bf16.mxu0 0
        %1063 = vmatpush1.bf16.msra.mxu0 0
        %1064 = vmatprep.subr.bf16.mxu0 0
        %1065 = vmatpush1.bf16.msra.mxu0 0
        %1066 = vmatprep.subr.bf16.mxu0 0
        %1067 = vmatpush1.bf16.msra.mxu0 0
        %1068 = vmatprep.subr.bf16.mxu0 0
        %1069 = vmatpush1.bf16.msra.mxu0 0
        %1070 = vmatprep.subr.bf16.mxu0 0
        %1071 = vmatpush1.bf16.msra.mxu0 0
        %1072 = vmatprep.subr.bf16.mxu0 0
        %1073 = vmatpush1.bf16.msra.mxu0 0
        %1074 = vmatprep.subr.bf16.mxu0 0
        %1075 = vmatpush1.bf16.msra.mxu0 0
        %1076 = vmatprep.subr.bf16.mxu0 0
        %1077 = vmatpush1.bf16.msra.mxu0 0
        %1078 = vmatprep.subr.bf16.mxu0 0
        %1079 = vmatpush1.bf16.msra.mxu0 0
        %1080 = vmatprep.mubr.bf16.mxu0 0
        %1081 = vmatmul.mubr.bf16.gmra.mrb[0].mxu0 %v462
        %v1082 = vpop.f32.mrb[0].mxu0
        %v1083 = vadd.f32 0.0, %v1082
        %v1084 = vpop.f32.mrb[0].mxu0
        %v1085 = vpop.f32.mrb[0].mxu0
        %v1086 = vadd.f32 0.0, %v1085
        %v1087 = vpop.f32.mrb[0].mxu0
        %1088 = vdwg.mxu0
        %1089 = vmatprep.subr.bf16.mxu0 0
        %1090 = vmatpush1.bf16.msra.mxu0 %v1045
        %1091 = vmatprep.subr.bf16.mxu0 0
        %1092 = vmatpush1.bf16.msra.mxu0 0
        %1093 = vmatprep.subr.bf16.mxu0 0
        %1094 = vmatpush1.bf16.msra.mxu0 0
        %1095 = vmatprep.subr.bf16.mxu0 0
        %1096 = vmatpush1.bf16.msra.mxu0 0
        %1097 = vmatprep.subr.bf16.mxu0 0
        %1098 = vmatpush1.bf16.msra.mxu0 0
        %1099 = vmatprep.subr.bf16.mxu0 0
        %1100 = vmatpush1.bf16.msra.mxu0 0
        %1101 = vmatprep.subr.bf16.mxu0 0
        %1102 = vmatpush1.bf16.msra.mxu0 0
        %1103 = vmatprep.subr.bf16.mxu0 0
        %1104 = vmatpush1.bf16.msra.mxu0 0
        %1105 = vmatprep.subr.bf16.mxu0 0
        %1106 = vmatpush1.bf16.msra.mxu0 0
        %1107 = vmatprep.subr.bf16.mxu0 0
        %1108 = vmatpush1.bf16.msra.mxu0 0
        %1109 = vmatprep.subr.bf16.mxu0 0
        %1110 = vmatpush1.bf16.msra.mxu0 0
        %1111 = vmatprep.subr.bf16.mxu0 0
        %1112 = vmatpush1.bf16.msra.mxu0 0
        %1113 = vmatprep.subr.bf16.mxu0 0
        %1114 = vmatpush1.bf16.msra.mxu0 0
        %1115 = vmatprep.subr.bf16.mxu0 0
        %1116 = vmatpush1.bf16.msra.mxu0 0
        %1117 = vmatprep.subr.bf16.mxu0 0
        %1118 = vmatpush1.bf16.msra.mxu0 0
        %1119 = vmatprep.subr.bf16.mxu0 0
        %1120 = vmatpush1.bf16.msra.mxu0 0
        %1121 = vmatprep.mubr.bf16.mxu0 0
        %1122 = vmatmul.mubr.bf16.gmra.mrb[0].mxu0 %v462
        %v1123 = vpop.f32.mrb[0].mxu0
        %v1124 = vadd.f32 0.0, %v1123
        %v1125 = vpop.f32.mrb[0].mxu0
        %v1126 = vpop.f32.mrb[0].mxu0
        %v1127 = vadd.f32 0.0, %v1126
        %v1128 = vpop.f32.mrb[0].mxu0
        %1129 = vdwg.mxu0
        %1130 = vmatprep.subr.bf16.mxu0 0
        %1131 = vmatpush1.bf16.msra.mxu0 %v1046
        %1132 = vmatprep.subr.bf16.mxu0 0
        %1133 = vmatpush1.bf16.msra.mxu0 0
        %1134 = vmatprep.subr.bf16.mxu0 0
        %1135 = vmatpush1.bf16.msra.mxu0 0
        %1136 = vmatprep.subr.bf16.mxu0 0
        %1137 = vmatpush1.bf16.msra.mxu0 0
        %1138 = vmatprep.subr.bf16.mxu0 0
        %1139 = vmatpush1.bf16.msra.mxu0 0
        %1140 = vmatprep.subr.bf16.mxu0 0
        %1141 = vmatpush1.bf16.msra.mxu0 0
        %1142 = vmatprep.subr.bf16.mxu0 0
        %1143 = vmatpush1.bf16.msra.mxu0 0
        %1144 = vmatprep.subr.bf16.mxu0 0
        %1145 = vmatpush1.bf16.msra.mxu0 0
        %1146 = vmatprep.subr.bf16.mxu0 0
        %1147 = vmatpush1.bf16.msra.mxu0 0
        %1148 = vmatprep.subr.bf16.mxu0 0
        %1149 = vmatpush1.bf16.msra.mxu0 0
        %1150 = vmatprep.subr.bf16.mxu0 0
        %1151 = vmatpush1.bf16.msra.mxu0 0
        %1152 = vmatprep.subr.bf16.mxu0 0
        %1153 = vmatpush1.bf16.msra.mxu0 0
        %1154 = vmatprep.subr.bf16.mxu0 0
        %1155 = vmatpush1.bf16.msra.mxu0 0
        %1156 = vmatprep.subr.bf16.mxu0 0
        %1157 = vmatpush1.bf16.msra.mxu0 0
        %1158 = vmatprep.subr.bf16.mxu0 0
        %1159 = vmatpush1.bf16.msra.mxu0 0
        %1160 = vmatprep.subr.bf16.mxu0 0
        %1161 = vmatpush1.bf16.msra.mxu0 0
        %1162 = vmatprep.mubr.bf16.mxu0 0
        %1163 = vmatmul.mubr.bf16.gmra.mrb[0].mxu0 %v462
        %v1164 = vpop.f32.mrb[0].mxu0
        %v1165 = vadd.f32 0.0, %v1164
        %v1166 = vpop.f32.mrb[0].mxu0
        %v1167 = vpop.f32.mrb[0].mxu0
        %v1168 = vadd.f32 0.0, %v1167
        %v1169 = vpop.f32.mrb[0].mxu0
        %1170 = vdwg.mxu0
        %1171 = vmatprep.subr.bf16.mxu0 0
        %1172 = vmatpush1.bf16.msra.mxu0 %v1047
        %1173 = vmatprep.subr.bf16.mxu0 0
        %1174 = vmatpush1.bf16.msra.mxu0 0
        %1175 = vmatprep.subr.bf16.mxu0 0
        %1176 = vmatpush1.bf16.msra.mxu0 0
        %1177 = vmatprep.subr.bf16.mxu0 0
        %1178 = vmatpush1.bf16.msra.mxu0 0
        %1179 = vmatprep.subr.bf16.mxu0 0
        %1180 = vmatpush1.bf16.msra.mxu0 0
        %1181 = vmatprep.subr.bf16.mxu0 0
        %1182 = vmatpush1.bf16.msra.mxu0 0
        %1183 = vmatprep.subr.bf16.mxu0 0
        %1184 = vmatpush1.bf16.msra.mxu0 0
        %1185 = vmatprep.subr.bf16.mxu0 0
        %1186 = vmatpush1.bf16.msra.mxu0 0
        %1187 = vmatprep.subr.bf16.mxu0 0
        %1188 = vmatpush1.bf16.msra.mxu0 0
        %1189 = vmatprep.subr.bf16.mxu0 0
        %1190 = vmatpush1.bf16.msra.mxu0 0
        %1191 = vmatprep.subr.bf16.mxu0 0
        %1192 = vmatpush1.bf16.msra.mxu0 0
        %1193 = vmatprep.subr.bf16.mxu0 0
        %1194 = vmatpush1.bf16.msra.mxu0 0
        %1195 = vmatprep.subr.bf16.mxu0 0
        %1196 = vmatpush1.bf16.msra.mxu0 0
        %1197 = vmatprep.subr.bf16.mxu0 0
        %1198 = vmatpush1.bf16.msra.mxu0 0
        %1199 = vmatprep.subr.bf16.mxu0 0
        %1200 = vmatpush1.bf16.msra.mxu0 0
        %1201 = vmatprep.subr.bf16.mxu0 0
        %1202 = vmatpush1.bf16.msra.mxu0 0
        %1203 = vmatprep.mubr.bf16.mxu0 0
        %1204 = vmatmul.mubr.bf16.gmra.mrb[0].mxu0 %v462
        %v1205 = vpop.f32.mrb[0].mxu0
        %v1206 = vadd.f32 0.0, %v1205
        %v1207 = vpop.f32.mrb[0].mxu0
        %v1208 = vpop.f32.mrb[0].mxu0
        %v1209 = vadd.f32 0.0, %v1208
        %v1210 = vpop.f32.mrb[0].mxu0
        %1211 = vdwg.mxu0
        %v1212 = vsub.f32 %v499, %v1083
        %v1213 = vsub.f32 %v502, %v1086
        %v1214 = vsub.f32 %v540, %v1124
        %v1215 = vsub.f32 %v543, %v1127
        %v1216 = vsub.f32 %v581, %v1165
        %v1217 = vsub.f32 %v584, %v1168
        %v1218 = vsub.f32 %v622, %v1206
        %v1219 = vsub.f32 %v625, %v1209
        %v1220 = vand.u32 2147483647, %v1212
        %v1221 = vand.u32 2147483647, %v1213
        %v1222 = vand.u32 2147483647, %v1214
        %v1223 = vand.u32 2147483647, %v1215
        %v1224 = vand.u32 2147483647, %v1216
        %v1225 = vand.u32 2147483647, %v1217
        %v1226 = vand.u32 2147483647, %v1218
        %v1227 = vand.u32 2147483647, %v1219
        %v1228 = vsel %vm374, %v1220, 0.0
        %v1229 = vsel %vm374, %v1222, 0.0
        %v1230 = vadd.f32 %v1228, %v1229
        %v1231 = vsel %vm374, %v1224, 0.0
        %v1232 = vadd.f32 %v1230, %v1231
        %v1233 = vsel %vm374, %v1226, 0.0
        %v1234 = vadd.f32 %v1232, %v1233
        %v1235 = vsel %vm374, %v1221, 0.0
        %v1236 = vsel %vm374, %v1223, 0.0
        %v1237 = vadd.f32 %v1235, %v1236
        %v1238 = vsel %vm374, %v1225, 0.0
        %v1239 = vadd.f32 %v1237, %v1238
        %v1240 = vsel %vm374, %v1227, 0.0
        %v1241 = vadd.f32 %v1239, %v1240
        %v1242 = vadd.f32 %v937, %v1234
        %v1243 = vadd.f32 %v938, %v1241
        %1244 = vst.msk [vmem:[#allocation3] sm:$0xff] %vm374, %v1242
        %1245 = vst.msk [vmem:[#allocation3 + $0x8] sm:$0xff] %vm374, %v1243
        %v1246 = vld [vmem:[#allocation4] sm:$0xff]
        %v1247 = vld [vmem:[#allocation4 + $0x8] sm:$0xff]
        %v1248 = vld [vmem:[%s311] sm:$0xf]
        %v1249 = vld [vmem:[%s311 + $0x4] sm:$0xf]
        %v1250 = vld [vmem:[%s311 + $0x8] sm:$0xf]
        %v1251 = vld [vmem:[%s311 + $0xc] sm:$0xf]
        %v1252 = vld [vmem:[%s311 + $0x10] sm:$0xf]
        %v1253 = vld [vmem:[%s311 + $0x14] sm:$0xf]
        %v1254 = vld [vmem:[%s311 + $0x18] sm:$0xf]
        %v1255 = vld [vmem:[%s311 + $0x1c] sm:$0xf]
        %v1264 = vunpack.c.l.b16 %v1248
        %v1265 = vunpack.c.l.b16 %v1249
        %v1266 = vunpack.c.l.b16 %v1250
        %v1267 = vunpack.c.l.b16 %v1251
        %v1268 = vunpack.c.l.b16 %v1252
        %v1269 = vunpack.c.l.b16 %v1253
        %v1270 = vunpack.c.l.b16 %v1254
        %v1271 = vunpack.c.l.b16 %v1255
        %v1272 = vpack.c.b16 %v1265, %v1264
        %v1273 = vpack.c.b16 %v1267, %v1266
        %v1274 = vpack.c.b16 %v1269, %v1268
        %v1275 = vpack.c.b16 %v1271, %v1270
        %v1278 = vunpack.c.l.b16 %v334
        %v1279 = vunpack.c.l.b16 %v335
        %v1280 = vpack.c.b16 %v1279, %v1278
        %v1283 = vsel %vm374, %v1272, 0
        %v1286 = vsel %vm374, %v1273, 0
        %v1289 = vsel %vm374, %v1274, 0
        %v1292 = vsel %vm374, %v1275, 0
        %1294 = vmatprep.subr.bf16.mxu0 0
        %1295 = vmatpush1.bf16.msra.mxu0 %v1280
        %1296 = vmatprep.subr.bf16.mxu0 0
        %1297 = vmatpush1.bf16.msra.mxu0 0
        %1298 = vmatprep.subr.bf16.mxu0 0
        %1299 = vmatpush1.bf16.msra.mxu0 0
        %1300 = vmatprep.subr.bf16.mxu0 0
        %1301 = vmatpush1.bf16.msra.mxu0 0
        %1302 = vmatprep.subr.bf16.mxu0 0
        %1303 = vmatpush1.bf16.msra.mxu0 0
        %1304 = vmatprep.subr.bf16.mxu0 0
        %1305 = vmatpush1.bf16.msra.mxu0 0
        %1306 = vmatprep.subr.bf16.mxu0 0
        %1307 = vmatpush1.bf16.msra.mxu0 0
        %1308 = vmatprep.subr.bf16.mxu0 0
        %1309 = vmatpush1.bf16.msra.mxu0 0
        %1310 = vmatprep.subr.bf16.mxu0 0
        %1311 = vmatpush1.bf16.msra.mxu0 0
        %1312 = vmatprep.subr.bf16.mxu0 0
        %1313 = vmatpush1.bf16.msra.mxu0 0
        %1314 = vmatprep.subr.bf16.mxu0 0
        %1315 = vmatpush1.bf16.msra.mxu0 0
        %1316 = vmatprep.subr.bf16.mxu0 0
        %1317 = vmatpush1.bf16.msra.mxu0 0
        %1318 = vmatprep.subr.bf16.mxu0 0
        %1319 = vmatpush1.bf16.msra.mxu0 0
        %1320 = vmatprep.subr.bf16.mxu0 0
        %1321 = vmatpush1.bf16.msra.mxu0 0
        %1322 = vmatprep.subr.bf16.mxu0 0
        %1323 = vmatpush1.bf16.msra.mxu0 0
        %1324 = vmatprep.subr.bf16.mxu0 0
        %1325 = vmatpush1.bf16.msra.mxu0 0
        %1326 = vmatprep.mubr.bf16.mxu0 0
        %1327 = vmatmul.mubr.bf16.gmra.mrb[0].mxu0 %v1283
        %v1328 = vpop.f32.mrb[0].mxu0
        %v1329 = vadd.f32 0.0, %v1328
        %v1330 = vpop.f32.mrb[0].mxu0
        %v1331 = vpop.f32.mrb[0].mxu0
        %v1332 = vadd.f32 0.0, %v1331
        %v1333 = vpop.f32.mrb[0].mxu0
        %1334 = vmatprep.mubr.bf16.mxu0 0
        %1335 = vmatmul.mubr.bf16.gmra.mrb[0].mxu0 %v1286
        %v1336 = vpop.f32.mrb[0].mxu0
        %v1337 = vadd.f32 0.0, %v1336
        %v1338 = vpop.f32.mrb[0].mxu0
        %v1339 = vpop.f32.mrb[0].mxu0
        %v1340 = vadd.f32 0.0, %v1339
        %v1341 = vpop.f32.mrb[0].mxu0
        %1342 = vmatprep.mubr.bf16.mxu0 0
        %1343 = vmatmul.mubr.bf16.gmra.mrb[0].mxu0 %v1289
        %v1344 = vpop.f32.mrb[0].mxu0
        %v1345 = vadd.f32 0.0, %v1344
        %v1346 = vpop.f32.mrb[0].mxu0
        %v1347 = vpop.f32.mrb[0].mxu0
        %v1348 = vadd.f32 0.0, %v1347
        %v1349 = vpop.f32.mrb[0].mxu0
        %1350 = vmatprep.mubr.bf16.mxu0 0
        %1351 = vmatmul.mubr.bf16.gmra.mrb[0].mxu0 %v1292
        %v1352 = vpop.f32.mrb[0].mxu0
        %v1353 = vadd.f32 0.0, %v1352
        %v1354 = vpop.f32.mrb[0].mxu0
        %v1355 = vpop.f32.mrb[0].mxu0
        %v1356 = vadd.f32 0.0, %v1355
        %v1357 = vpop.f32.mrb[0].mxu0
        %1358 = vdwg.mxu0
        %v1359 = vpack.c.bf16 %v1332, %v1329
        %v1360 = vpack.c.bf16 %v1340, %v1337
        %v1361 = vpack.c.bf16 %v1348, %v1345
        %v1362 = vpack.c.bf16 %v1356, %v1353
        %v1365 = vunpack.c.l.b16 %v338
        %v1366 = vunpack.c.l.b16 %v339
        %v1367 = vpack.c.b16 %v1366, %v1365
        %v1369 = vsel %vm374, %v1367, 0
        %1371 = vmatprep.subr.bf16.mxu0 0
        %1372 = vmatpush1.bf16.msra.mxu0 %v1359
        %1373 = vmatprep.subr.bf16.mxu0 0
        %1374 = vmatpush1.bf16.msra.mxu0 0
        %1375 = vmatprep.subr.bf16.mxu0 0
        %1376 = vmatpush1.bf16.msra.mxu0 0
        %1377 = vmatprep.subr.bf16.mxu0 0
        %1378 = vmatpush1.bf16.msra.mxu0 0
        %1379 = vmatprep.subr.bf16.mxu0 0
        %1380 = vmatpush1.bf16.msra.mxu0 0
        %1381 = vmatprep.subr.bf16.mxu0 0
        %1382 = vmatpush1.bf16.msra.mxu0 0
        %1383 = vmatprep.subr.bf16.mxu0 0
        %1384 = vmatpush1.bf16.msra.mxu0 0
        %1385 = vmatprep.subr.bf16.mxu0 0
        %1386 = vmatpush1.bf16.msra.mxu0 0
        %1387 = vmatprep.subr.bf16.mxu0 0
        %1388 = vmatpush1.bf16.msra.mxu0 0
        %1389 = vmatprep.subr.bf16.mxu0 0
        %1390 = vmatpush1.bf16.msra.mxu0 0
        %1391 = vmatprep.subr.bf16.mxu0 0
        %1392 = vmatpush1.bf16.msra.mxu0 0
        %1393 = vmatprep.subr.bf16.mxu0 0
        %1394 = vmatpush1.bf16.msra.mxu0 0
        %1395 = vmatprep.subr.bf16.mxu0 0
        %1396 = vmatpush1.bf16.msra.mxu0 0
        %1397 = vmatprep.subr.bf16.mxu0 0
        %1398 = vmatpush1.bf16.msra.mxu0 0
        %1399 = vmatprep.subr.bf16.mxu0 0
        %1400 = vmatpush1.bf16.msra.mxu0 0
        %1401 = vmatprep.subr.bf16.mxu0 0
        %1402 = vmatpush1.bf16.msra.mxu0 0
        %1403 = vmatprep.mubr.bf16.mxu0 0
        %1404 = vmatmul.mubr.bf16.gmra.mrb[0].mxu0 %v1369
        %v1405 = vpop.f32.mrb[0].mxu0
        %v1406 = vadd.f32 0.0, %v1405
        %v1407 = vpop.f32.mrb[0].mxu0
        %v1408 = vpop.f32.mrb[0].mxu0
        %v1409 = vadd.f32 0.0, %v1408
        %v1410 = vpop.f32.mrb[0].mxu0
        %1411 = vdwg.mxu0
        %1412 = vmatprep.subr.bf16.mxu0 0
        %1413 = vmatpush1.bf16.msra.mxu0 %v1360
        %1414 = vmatprep.subr.bf16.mxu0 0
        %1415 = vmatpush1.bf16.msra.mxu0 0
        %1416 = vmatprep.subr.bf16.mxu0 0
        %1417 = vmatpush1.bf16.msra.mxu0 0
        %1418 = vmatprep.subr.bf16.mxu0 0
        %1419 = vmatpush1.bf16.msra.mxu0 0
        %1420 = vmatprep.subr.bf16.mxu0 0
        %1421 = vmatpush1.bf16.msra.mxu0 0
        %1422 = vmatprep.subr.bf16.mxu0 0
        %1423 = vmatpush1.bf16.msra.mxu0 0
        %1424 = vmatprep.subr.bf16.mxu0 0
        %1425 = vmatpush1.bf16.msra.mxu0 0
        %1426 = vmatprep.subr.bf16.mxu0 0
        %1427 = vmatpush1.bf16.msra.mxu0 0
        %1428 = vmatprep.subr.bf16.mxu0 0
        %1429 = vmatpush1.bf16.msra.mxu0 0
        %1430 = vmatprep.subr.bf16.mxu0 0
        %1431 = vmatpush1.bf16.msra.mxu0 0
        %1432 = vmatprep.subr.bf16.mxu0 0
        %1433 = vmatpush1.bf16.msra.mxu0 0
        %1434 = vmatprep.subr.bf16.mxu0 0
        %1435 = vmatpush1.bf16.msra.mxu0 0
        %1436 = vmatprep.subr.bf16.mxu0 0
        %1437 = vmatpush1.bf16.msra.mxu0 0
        %1438 = vmatprep.subr.bf16.mxu0 0
        %1439 = vmatpush1.bf16.msra.mxu0 0
        %1440 = vmatprep.subr.bf16.mxu0 0
        %1441 = vmatpush1.bf16.msra.mxu0 0
        %1442 = vmatprep.subr.bf16.mxu0 0
        %1443 = vmatpush1.bf16.msra.mxu0 0
        %1444 = vmatprep.mubr.bf16.mxu0 0
        %1445 = vmatmul.mubr.bf16.gmra.mrb[0].mxu0 %v1369
        %v1446 = vpop.f32.mrb[0].mxu0
        %v1447 = vadd.f32 0.0, %v1446
        %v1448 = vpop.f32.mrb[0].mxu0
        %v1449 = vpop.f32.mrb[0].mxu0
        %v1450 = vadd.f32 0.0, %v1449
        %v1451 = vpop.f32.mrb[0].mxu0
        %1452 = vdwg.mxu0
        %1453 = vmatprep.subr.bf16.mxu0 0
        %1454 = vmatpush1.bf16.msra.mxu0 %v1361
        %1455 = vmatprep.subr.bf16.mxu0 0
        %1456 = vmatpush1.bf16.msra.mxu0 0
        %1457 = vmatprep.subr.bf16.mxu0 0
        %1458 = vmatpush1.bf16.msra.mxu0 0
        %1459 = vmatprep.subr.bf16.mxu0 0
        %1460 = vmatpush1.bf16.msra.mxu0 0
        %1461 = vmatprep.subr.bf16.mxu0 0
        %1462 = vmatpush1.bf16.msra.mxu0 0
        %1463 = vmatprep.subr.bf16.mxu0 0
        %1464 = vmatpush1.bf16.msra.mxu0 0
        %1465 = vmatprep.subr.bf16.mxu0 0
        %1466 = vmatpush1.bf16.msra.mxu0 0
        %1467 = vmatprep.subr.bf16.mxu0 0
        %1468 = vmatpush1.bf16.msra.mxu0 0
        %1469 = vmatprep.subr.bf16.mxu0 0
        %1470 = vmatpush1.bf16.msra.mxu0 0
        %1471 = vmatprep.subr.bf16.mxu0 0
        %1472 = vmatpush1.bf16.msra.mxu0 0
        %1473 = vmatprep.subr.bf16.mxu0 0
        %1474 = vmatpush1.bf16.msra.mxu0 0
        %1475 = vmatprep.subr.bf16.mxu0 0
        %1476 = vmatpush1.bf16.msra.mxu0 0
        %1477 = vmatprep.subr.bf16.mxu0 0
        %1478 = vmatpush1.bf16.msra.mxu0 0
        %1479 = vmatprep.subr.bf16.mxu0 0
        %1480 = vmatpush1.bf16.msra.mxu0 0
        %1481 = vmatprep.subr.bf16.mxu0 0
        %1482 = vmatpush1.bf16.msra.mxu0 0
        %1483 = vmatprep.subr.bf16.mxu0 0
        %1484 = vmatpush1.bf16.msra.mxu0 0
        %1485 = vmatprep.mubr.bf16.mxu0 0
        %1486 = vmatmul.mubr.bf16.gmra.mrb[0].mxu0 %v1369
        %v1487 = vpop.f32.mrb[0].mxu0
        %v1488 = vadd.f32 0.0, %v1487
        %v1489 = vpop.f32.mrb[0].mxu0
        %v1490 = vpop.f32.mrb[0].mxu0
        %v1491 = vadd.f32 0.0, %v1490
        %v1492 = vpop.f32.mrb[0].mxu0
        %1493 = vdwg.mxu0
        %1494 = vmatprep.subr.bf16.mxu0 0
        %1495 = vmatpush1.bf16.msra.mxu0 %v1362
        %1496 = vmatprep.subr.bf16.mxu0 0
        %1497 = vmatpush1.bf16.msra.mxu0 0
        %1498 = vmatprep.subr.bf16.mxu0 0
        %1499 = vmatpush1.bf16.msra.mxu0 0
        %1500 = vmatprep.subr.bf16.mxu0 0
        %1501 = vmatpush1.bf16.msra.mxu0 0
        %1502 = vmatprep.subr.bf16.mxu0 0
        %1503 = vmatpush1.bf16.msra.mxu0 0
        %1504 = vmatprep.subr.bf16.mxu0 0
        %1505 = vmatpush1.bf16.msra.mxu0 0
        %1506 = vmatprep.subr.bf16.mxu0 0
        %1507 = vmatpush1.bf16.msra.mxu0 0
        %1508 = vmatprep.subr.bf16.mxu0 0
        %1509 = vmatpush1.bf16.msra.mxu0 0
        %1510 = vmatprep.subr.bf16.mxu0 0
        %1511 = vmatpush1.bf16.msra.mxu0 0
        %1512 = vmatprep.subr.bf16.mxu0 0
        %1513 = vmatpush1.bf16.msra.mxu0 0
        %1514 = vmatprep.subr.bf16.mxu0 0
        %1515 = vmatpush1.bf16.msra.mxu0 0
        %1516 = vmatprep.subr.bf16.mxu0 0
        %1517 = vmatpush1.bf16.msra.mxu0 0
        %1518 = vmatprep.subr.bf16.mxu0 0
        %1519 = vmatpush1.bf16.msra.mxu0 0
        %1520 = vmatprep.subr.bf16.mxu0 0
        %1521 = vmatpush1.bf16.msra.mxu0 0
        %1522 = vmatprep.subr.bf16.mxu0 0
        %1523 = vmatpush1.bf16.msra.mxu0 0
        %1524 = vmatprep.subr.bf16.mxu0 0
        %1525 = vmatpush1.bf16.msra.mxu0 0
        %1526 = vmatprep.mubr.bf16.mxu0 0
        %1527 = vmatmul.mubr.bf16.gmra.mrb[0].mxu0 %v1369
        %v1528 = vpop.f32.mrb[0].mxu0
        %v1529 = vadd.f32 0.0, %v1528
        %v1530 = vpop.f32.mrb[0].mxu0
        %v1531 = vpop.f32.mrb[0].mxu0
        %v1532 = vadd.f32 0.0, %v1531
        %v1533 = vpop.f32.mrb[0].mxu0
        %1534 = vdwg.mxu0
        %v1535 = vsub.f32 %v499, %v1406
        %v1536 = vsub.f32 %v502, %v1409
        %v1537 = vsub.f32 %v540, %v1447
        %v1538 = vsub.f32 %v543, %v1450
        %v1539 = vsub.f32 %v581, %v1488
        %v1540 = vsub.f32 %v584, %v1491
        %v1541 = vsub.f32 %v622, %v1529
        %v1542 = vsub.f32 %v625, %v1532
        %v1543 = vand.u32 2147483647, %v1535
        %v1544 = vand.u32 2147483647, %v1536
        %v1545 = vand.u32 2147483647, %v1537
        %v1546 = vand.u32 2147483647, %v1538
        %v1547 = vand.u32 2147483647, %v1539
        %v1548 = vand.u32 2147483647, %v1540
        %v1549 = vand.u32 2147483647, %v1541
        %v1550 = vand.u32 2147483647, %v1542
        %v1551 = vsel %vm374, %v1543, 0.0
        %v1552 = vsel %vm374, %v1545, 0.0
        %v1553 = vadd.f32 %v1551, %v1552
        %v1554 = vsel %vm374, %v1547, 0.0
        %v1555 = vadd.f32 %v1553, %v1554
        %v1556 = vsel %vm374, %v1549, 0.0
        %v1557 = vadd.f32 %v1555, %v1556
        %v1558 = vsel %vm374, %v1544, 0.0
        %v1559 = vsel %vm374, %v1546, 0.0
        %v1560 = vadd.f32 %v1558, %v1559
        %v1561 = vsel %vm374, %v1548, 0.0
        %v1562 = vadd.f32 %v1560, %v1561
        %v1563 = vsel %vm374, %v1550, 0.0
        %v1564 = vadd.f32 %v1562, %v1563
        %v1565 = vadd.f32 %v1246, %v1557
        %v1566 = vadd.f32 %v1247, %v1564
        %1567 = vst.msk [vmem:[#allocation4] sm:$0xff] %vm374, %v1565
        %1568 = vst.msk [vmem:[#allocation4 + $0x8] sm:$0xff] %vm374, %v1566
        %p1569 = scmp.eq.s32.totalorder %s19, 1
        // Predicated region
        $region53: #{frcl_forward.1} parent=47 // pred_check
          %p1570 = pneg %p1569
        $region54: #{frcl_forward.1} parent=47 // pred_check_branch
          %1572 = sbr.rel (%p1570) target = $region56
        $region55: #{frcl_forward.1} parent=47 // pred_region
          %v1573 = vld [vmem:[#allocation2] sm:$0xff]
          %v1574 = vld [vmem:[#allocation2 + $0x8] sm:$0xff]
          %v1575 = vld [vmem:[#allocation3] sm:$0xff]
          %v1576 = vld [vmem:[#allocation3 + $0x8] sm:$0xff]
          %v1577 = vld [vmem:[#allocation4] sm:$0xff]
          %v1578 = vld [vmem:[#allocation4 + $0x8] sm:$0xff]
          %v1579 = vsel %vm374, %v1573, 0.0
          %v1580 = vsel %vm374, %v1574, 0.0
          %v1581 = vadd.f32 %v1579, %v1580
          %1582 = vadd.xlane.f32.xlu0 %v1581
          %v1583 = vpop.xlane.xlu0 %1582
          %v1584 = vrot.slane %v1583, 4
          %v1585 = vadd.f32 %v1583, %v1584
          %v1586 = vrot.slane %v1585, 2
          %v1587 = vadd.f32 %v1585, %v1586
          %v1588 = vrot.slane %v1587, 1
          %v1589 = vadd.f32 %v1587, %v1588
          %s1590 = vtos %v1589
          %s1591 = scalar_lea.smem [#allocation5], 0
          %1592 = sst [smem:[%s1591]] %s1590
          %vm1593 = vcmask 64512
          %v1594 = vsel %vm1593, %v1573, 0.0
          %1595 = vadd.xlane.f32.xlu0 %v1594
          %v1596 = vpop.xlane.xlu0 %1595
          %v1597 = vrot.slane %v1596, 4
          %v1598 = vadd.f32 %v1596, %v1597
          %v1599 = vrot.slane %v1598, 2
          %v1600 = vadd.f32 %v1598, %v1599
          %v1601 = vrot.slane %v1600, 1
          %v1602 = vadd.f32 %v1600, %v1601
          %s1603 = vtos %v1602
          %s1604 = scalar_lea.smem [#allocation5], 1
          %1605 = sst [smem:[%s1604]] %s1603
          %v1606 = vsel %vm374, %v1575, 0.0
          %v1607 = vsel %vm374, %v1576, 0.0
          %v1608 = vadd.f32 %v1606, %v1607
          %1609 = vadd.xlane.f32.xlu0 %v1608
          %v1610 = vpop.xlane.xlu0 %1609
          %v1611 = vrot.slane %v1610, 4
          %v1612 = vadd.f32 %v1610, %v1611
          %v1613 = vrot.slane %v1612, 2
          %v1614 = vadd.f32 %v1612, %v1613
          %v1615 = vrot.slane %v1614, 1
          %v1616 = vadd.f32 %v1614, %v1615
          %s1617 = vtos %v1616
          %s1618 = scalar_lea.smem [#allocation5], 2
          %1619 = sst [smem:[%s1618]] %s1617
          %v1620 = vsel %vm1593, %v1575, 0.0
          %1621 = vadd.xlane.f32.xlu0 %v1620
          %v1622 = vpop.xlane.xlu0 %1621
          %v1623 = vrot.slane %v1622, 4
          %v1624 = vadd.f32 %v1622, %v1623
          %v1625 = vrot.slane %v1624, 2
          %v1626 = vadd.f32 %v1624, %v1625
          %v1627 = vrot.slane %v1626, 1
          %v1628 = vadd.f32 %v1626, %v1627
          %s1629 = vtos %v1628
          %s1630 = scalar_lea.smem [#allocation5], 3
          %1631 = sst [smem:[%s1630]] %s1629
          %v1632 = vsel %vm374, %v1577, 0.0
          %v1633 = vsel %vm374, %v1578, 0.0
          %v1634 = vadd.f32 %v1632, %v1633
          %1635 = vadd.xlane.f32.xlu0 %v1634
          %v1636 = vpop.xlane.xlu0 %1635
          %v1637 = vrot.slane %v1636, 4
          %v1638 = vadd.f32 %v1636, %v1637
          %v1639 = vrot.slane %v1638, 2
          %v1640 = vadd.f32 %v1638, %v1639
          %v1641 = vrot.slane %v1640, 1
          %v1642 = vadd.f32 %v1640, %v1641
          %s1643 = vtos %v1642
          %s1644 = scalar_lea.smem [#allocation5], 4
          %1645 = sst [smem:[%s1644]] %s1643
          %v1646 = vsel %vm1593, %v1577, 0.0
          %1647 = vadd.xlane.f32.xlu0 %v1646
          %v1648 = vpop.xlane.xlu0 %1647
          %v1649 = vrot.slane %v1648, 4
          %v1650 = vadd.f32 %v1648, %v1649
          %v1651 = vrot.slane %v1650, 2
          %v1652 = vadd.f32 %v1650, %v1651
          %v1653 = vrot.slane %v1652, 1
          %v1654 = vadd.f32 %v1652, %v1653
          %s1655 = vtos %v1654
          %s1656 = scalar_lea.smem [#allocation5], 5
          %1657 = sst [smem:[%s1656]] %s1655
        $region56: #{frcl_forward.1} parent=47 // pred_fallthru
          _
        // Predicated region
        $region57: #{frcl_forward.1} parent=47 // pred_check
          %p1658 = pneg %p194
        $region58: #{frcl_forward.1} parent=47 // pred_check_branch
          %1660 = sbr.rel (%p1658) target = $region60
        $region59: #{frcl_forward.1} parent=47 // pred_region
          %s1662 = ssub.s32 16, 16
          %1663 = vsyncadd [#allocation6], %s1662
          %s1665 = sshll.u32 %s7, 4
          %s1666 = int_to_ptr.vmem [resolvable:$true] %s1665
          %1668 = dma.smem_to_vmem [#allocation5], 16, %s1666, [#allocation6]
        $region60: #{frcl_forward.1} parent=47 // pred_fallthru
          _
        // Predicated region
        $region61: #{frcl_forward.1} parent=47 // pred_check
          %p1669 = pneg %p194
        $region62: #{frcl_forward.1} parent=47 // pred_check_branch
          %1671 = sbr.rel (%p1669) target = $region64
        $region63: #{frcl_forward.1} parent=47 // pred_region
          %1672 = dma.done [#allocation6], 16
        $region64: #{frcl_forward.1} parent=47 // pred_fallthru
          _
        %1673 = sfence
      $region48: #{frcl_forward.1} parent=5 // pred_fallthru
        _
      %p1674 = scmp.le.s32.totalorder 2, %s14
      // Predicated region
      $region65: #{frcl_forward.1} parent=5 // pred_check
        %p1675 = pneg %p1674
      $region66: #{frcl_forward.1} parent=5 // pred_check_branch
        %1677 = sbr.rel (%p1675) target = $region68
      $region67: #{frcl_forward.1} parent=5 // pred_region
        %s1678 = ssub.s32 %s14, 2
      $region68: #{frcl_forward.1} parent=5 // pred_fallthru
        _
    $region6: #{frcl_forward.1} parent=1 // loop_footer
      %s18 = sadd.s32 1, %s14
    $region7: #{frcl_forward.1} parent=1 // loop_footer_branch
      %13 = sbr.rel target = $region3
    $region8: #{frcl_forward.1} parent=1 // loop_exit
      _
    %1679 = vsyncpa [#allocation6], 1
    %s1680 = scalar_lea.sflag [#allocation6], 1
    %1681 = vsyncpa %s1680, 1

</llo_original>
